<compile_context>
chip_gen: v5e
topology: v5e:2x2
jax: 0.10.0
libtpu: 0.0.40
codegen_flags: <defaults>
</compile_context>

<pallas_src>
import functools

import numpy as np
import jax
import jax.numpy as jnp
from jax.experimental import pallas as pl
from jax.experimental.pallas import tpu as pltpu

_BN_EPS = 1e-5
_ACC_BYTES = 1 << 20           # f32 accumulator budget per output tile
_LHS_BYTES = 2 << 20           # bf16 im2col scratch budget per output tile
_MAX_CHUNK_K = 512             # max contraction depth per MXU pass (taps merged into K)


def _round_up(v, m):
    return (v + m - 1) // m * m


# --------------------------------------------------------------------------
# Pallas kernel: direct conv (taps merged into K) + BN-bias (+ residual) (+ ReLU)
# --------------------------------------------------------------------------
def _conv_tap_kernel(*refs, chunks, th, wo, wpad, ext, cin, act, has_residual):
    if has_residual:
        x_ref, w_ref, b_ref, sc_ref, o_ref, lhs_ref = refs
    else:
        x_ref, w_ref, b_ref, o_ref, lhs_ref = refs
        sc_ref = None

    cout = o_ref.shape[-1]
    a = th * wpad                       # flat (row-major, width-padded) output extent

    acc = None
    loads = {}                          # cache one load per distinct (phase, row-offset)
    for row0, taps in chunks:           # static python loop
        ktot = len(taps) * cin
        if len(taps) == 1:
            p, oi, oj = taps[0]
            src = x_ref[0, p, pl.ds(oi * wpad, a + ext), :]          # (a+ext, cin) bf16
            lhs = src[oj:oj + a, :] if (oj > 0 or ext > 0) else src
        else:
            # assemble an im2col chunk (a, ktot) in VMEM scratch; the MXU sums the taps
            for idx, (p, oi, oj) in enumerate(taps):
                key = (p, oi)
                if key not in loads:
                    loads[key] = x_ref[0, p, pl.ds(oi * wpad, a + ext), :]
                lhs_ref[:, idx * cin:(idx + 1) * cin] = loads[key][oj:oj + a, :]
            lhs = lhs_ref[:, 0:ktot]
        w = w_ref[row0:row0 + ktot, :]                               # (ktot, cout) bf16
        d = jnp.dot(lhs, w, preferred_element_type=jnp.float32)     # direct MXU accumulate
        acc = d if acc is None else acc + d

    y = acc.reshape(th, wpad, cout)[:, :wo, :] + b_ref[0]           # BN folded -> bias only
    if has_residual:
        y = y + sc_ref[0].astype(jnp.float32)                       # fused residual add
    if act == "relu":
        y = jnp.maximum(y, 0.0)
    o_ref[0] = y.astype(o_ref.dtype)


@functools.partial(jax.jit, static_argnames=("tap_offsets", "stride", "padding", "act"))
def _tap_conv(x, wstack, bias, residual, *, tap_offsets, stride, padding, act):
    """General conv: x (N,H,W,Cin) NHWC; wstack (T,Cin,Cout) with T == len(tap_offsets);
    tap offsets are in zero-padded input coordinates relative to output*stride."""
    n, h, w_in, cin = x.shape
    n_taps, cin2, cout = wstack.shape
    assert cin2 == cin and n_taps == len(tap_offsets)
    s = stride
    hp, wp = h + 2 * padding, w_in + 2 * padding
    max_ro = max(o[0] for o in tap_offsets)
    max_co = max(o[1] for o in tap_offsets)
    ho = (hp - max_ro - 1) // s + 1
    wo = (wp - max_co - 1) // s + 1

    x = x.astype(jnp.bfloat16)
    if padding > 0:
        x = jnp.pad(x, ((0, 0), (padding, padding), (padding, padding), (0, 0)))

    # stride -> polyphase decomposition so all in-kernel loads are contiguous & aligned
    needed = sorted({(ro % s, co % s) for (ro, co) in tap_offsets})
    pidx = {pc: i for i, pc in enumerate(needed)}
    ktaps = [(pidx[(ro % s, co % s)], ro // s, co // s) for (ro, co) in tap_offsets]
    max_oi = max(t[1] for t in ktaps)
    max_oj = max(t[2] for t in ktaps)
    wpad = _round_up(wo + max_oj, 16)                    # bf16 sublane-tile aligned width
    ext = _round_up(max_oj, 16) if max_oj > 0 else 0     # aligned flat over-read (<= wpad)
    req_r = ho + max_oi + 1                              # +1 zero row covers the over-read

    # --- static tap ordering + chunking (taps merged into the MXU contraction dim) ---
    order = sorted(range(n_taps), key=lambda i: ktaps[i])
    staps = [ktaps[i] for i in order]
    gmax = max(1, _MAX_CHUNK_K // cin)
    nchunk = -(-n_taps // gmax)
    base_sz, rem = divmod(n_taps, nchunk)
    chunks, pos = [], 0
    for c in range(nchunk):
        sz = base_sz + (1 if c < rem else 0)
        chunks.append((pos * cin, tuple(staps[pos:pos + sz])))
        pos += sz
    chunks = tuple(chunks)
    kmax = max(len(t) for _, t in chunks) * cin

    # weights reordered + flattened to (T*cin, cout) so each chunk is one row block
    wstack = wstack.astype(jnp.bfloat16)
    if order != list(range(n_taps)):
        wstack = jnp.take(wstack, jnp.asarray(order, jnp.int32), axis=0)
    w_flat = wstack.reshape(n_taps * cin, cout)
    bias2 = bias.reshape(1, cout).astype(jnp.float32)

    # --- output-row tile chosen from a byte budget (accumulator + im2col scratch) ---
    row_budget = min(_ACC_BYTES // (cout * 4), _LHS_BYTES // (kmax * 2))
    th_limit = max(1, row_budget // wpad)
    if n == 1:                                           # give v7x's 2nd core some tiles
        th_limit = min(th_limit, max(1, ho // 2))
    th = 1
    for cand in range(1, ho + 1):
        if ho % cand == 0 and cand <= th_limit:
            th = cand
    ntile = ho // th
    rows_blk = th + max_oi + 1                           # th rows + row halo + over-read

    # --- phase images, row-tiled (with halo) so each grid step DMAs only its rows ---
    phases = []
    for (pr, pc) in needed:
        ph = x[:, pr::s, pc::s, :][:, :req_r, :wpad, :]
        dr, dc = req_r - ph.shape[1], wpad - ph.shape[2]
        if dr > 0 or dc > 0:
            ph = jnp.pad(ph, ((0, 0), (0, max(dr, 0)), (0, max(dc, 0)), (0, 0)))
        phases.append(ph)
    nph = len(phases)
    xs = jnp.stack(phases, axis=1)                       # (n, nph, req_r, wpad, cin)
    if ntile == 1:
        xt = xs
    else:
        ridx = np.arange(ntile)[:, None] * th + np.arange(rows_blk)[None, :]
        xt = jnp.moveaxis(xs[:, :, ridx], 2, 1)          # (n, ntile, nph, rows_blk, wpad, cin)
    xt = xt.reshape(n * ntile, nph, rows_blk * wpad, cin)

    has_res = residual is not None
    kern = functools.partial(_conv_tap_kernel, chunks=chunks, th=th, wo=wo, wpad=wpad,
                             ext=ext, cin=cin, act=act, has_residual=has_res)

    def x_index(b, t):
        return (b * ntile + t, 0, 0, 0)

    in_specs = [
        pl.BlockSpec((1, nph, rows_blk * wpad, cin), x_index),
        pl.BlockSpec((n_taps * cin, cout), lambda b, t: (0, 0)),
        pl.BlockSpec((1, cout), lambda b, t: (0, 0)),
    ]
    operands = [xt, w_flat, bias2]
    if has_res:
        in_specs.append(pl.BlockSpec((1, th, wo, cout), lambda b, t: (b, t, 0, 0)))
        operands.append(residual.astype(jnp.bfloat16))

    a = th * wpad
    vmem_est = (2 * nph * rows_blk * wpad * cin * 2           # double-buffered input tiles
                + (4 if has_res else 2) * th * wo * cout * 2  # output (+ residual) tiles
                + 2 * n_taps * cin * cout * 2 + 2 * cout * 4  # weights + bias
                + a * kmax * 2                                # im2col scratch
                + 2 * a * cout * 4                            # accumulator + product temp
                + (2 << 20))
    vmem_limit = int(min(max(vmem_est, 24 << 20), 60 << 20))

    out = pl.pallas_call(
        kern,
        out_shape=jax.ShapeDtypeStruct((n, ho, wo, cout), jnp.bfloat16),
        grid=(n, ntile),
        in_specs=in_specs,
        out_specs=pl.BlockSpec((1, th, wo, cout), lambda b, t: (b, t, 0, 0)),
        scratch_shapes=[pltpu.VMEM((a, kmax), jnp.bfloat16)],
        compiler_params=pltpu.CompilerParams(
            dimension_semantics=("parallel", "parallel"),
            vmem_limit_bytes=vmem_limit),
    )(*operands)
    return out


def conv(x, p, *, stride=1, padding=1, dilation=1, act="relu", residual=None):
    """convbn(+ReLU)(+fused residual) with BN folded into p['w'] / p['b']."""
    k = p["k"]
    offs = tuple((i * dilation, j * dilation) for i in range(k) for j in range(k))
    return _tap_conv(x, p["w"], p["b"], residual,
                     tap_offsets=offs, stride=stride, padding=padding, act=act)


def _merge_dilated_branches(branch_ws, branch_cfgs, p0):
    """Merge several same-input convs (k, dilation, pad) into one tap list with a
    shared padding p0 and block-column weights (one Pallas call, one input read)."""
    cin = branch_ws[0].shape[2]
    ctot = sum(w.shape[3] for w in branch_ws)
    taps, wlist = [], []
    col = 0
    for w, (k, d, pd) in zip(branch_ws, branch_cfgs):
        co = w.shape[3]
        for i in range(k):
            for j in range(k):
                wt = jnp.zeros((cin, ctot), jnp.float32).at[:, col:col + co].set(
                    w[i, j].astype(jnp.float32))
                wlist.append(wt)
                taps.append((i * d + p0 - pd, j * d + p0 - pd))
        col += co
    return jnp.stack(wlist, 0).astype(jnp.bfloat16), tuple(taps)


# --------------------------------------------------------------------------
# parameter init (deterministic, BN folded in eval mode)
# --------------------------------------------------------------------------
class _Keys:
    def __init__(self, key):
        self._key = key

    def __call__(self):
        self._key, sub = jax.random.split(self._key)
        return sub


def _convbn_params(key, cin, cout, k):
    std = (2.0 / (k * k * cin)) ** 0.5
    w = jax.random.normal(key, (k, k, cin, cout), jnp.float32) * std
    scale = 1.0 / np.sqrt(1.0 + _BN_EPS)        # eval-mode BN folded into weights
    return {"w": (w * scale).reshape(k * k, cin, cout).astype(jnp.bfloat16),
            "b": jnp.zeros((cout,), jnp.float32), "k": k}


def _conv_params(key, cin, cout, k):
    std = (2.0 / (k * k * cin)) ** 0.5
    w = jax.random.normal(key, (k, k, cin, cout), jnp.float32) * std
    return {"w": w.reshape(k * k, cin, cout).astype(jnp.bfloat16),
            "b": jnp.zeros((cout,), jnp.float32), "k": k}


def _linear_w(key, cin, cout):
    return jax.random.normal(key, (cin, cout), jnp.float32) * (1.0 / cin) ** 0.5


def _aspp_params(kg):
    # five ASPP branches (1x1 d1, 3x3 d6/d12/d18/d24, 16ch each) fused into one conv
    cfgs = [(1, 1, 0), (3, 6, 6), (3, 12, 12), (3, 18, 18), (3, 24, 24)]
    cin, p0, co = 160, 24, 16
    scale = 1.0 / np.sqrt(1.0 + _BN_EPS)
    ws = []
    for (k, d, pd) in cfgs:
        std = (2.0 / (k * k * cin)) ** 0.5
        ws.append(jax.random.normal(kg(), (k, k, cin, co), jnp.float32) * std * scale)
    wstack, taps = _merge_dilated_branches(ws, cfgs, p0)
    return {"w": wstack, "b": jnp.zeros((co * len(cfgs),), jnp.float32),
            "taps": taps, "pad": p0}


def init_feature_extraction(key):
    kg = _Keys(key)

    def make_layer(inplanes, planes, blocks, stride):
        layer = []
        for b in range(blocks):
            inp = inplanes if b == 0 else planes
            blk = {"conv1": _convbn_params(kg(), inp, planes, 3),
                   "conv2": _convbn_params(kg(), planes, planes, 3),
                   "down": None}
            if b == 0 and (stride != 1 or inplanes != planes):
                blk["down"] = _convbn_params(kg(), inplanes, planes, 1)
            layer.append(blk)
        return layer

    def make_cee(channels, reduction=16):
        return {"res": _convbn_params(kg(), channels * 2, channels, 3),
                "fc1": _linear_w(kg(), channels, channels // reduction),
                "fc2": _linear_w(kg(), channels // reduction, channels)}

    return {
        "firstconv": [_convbn_params(kg(), 3, 32, 3),
                      _convbn_params(kg(), 32, 32, 3),
                      _convbn_params(kg(), 32, 32, 3)],
        "layer1": make_layer(32, 32, 3, 1),
        "layer2": make_layer(32, 64, 16, 2),
        "layer3": make_layer(64, 128, 3, 1),
        "layer4": make_layer(128, 128, 3, 1),
        "inline32": _convbn_params(kg(), 3, 32, 3),    # convbn(3,32,3,2,1,1) built inside forward
        "inline64": _convbn_params(kg(), 32, 64, 3),   # convbn(32,64,3,2,1,1) built inside forward
        "cee32": make_cee(32),
        "cee64": make_cee(64),
        "firstcoord": [_convbn_params(kg(), 1, 32, 3),
                       _convbn_params(kg(), 32, 32, 3),
                       _convbn_params(kg(), 32, 32, 3)],
        "aspp": _aspp_params(kg),
        "newlast1": _convbn_params(kg(), 144, 64, 3),
        "newlast2": _conv_params(kg(), 64, 32, 1),     # plain conv, no BN / ReLU
    }


# --------------------------------------------------------------------------
# network forward
# --------------------------------------------------------------------------
@jax.jit
def se_forward(x, fc1, fc2):
    # SE layer: tiny FCs + sigmoid kept in plain jnp/XLA (per performance review)
    y = jnp.mean(x.astype(jnp.float32), axis=(1, 2))          # (N, C) global avg-pool
    y = jax.nn.relu(y @ fc1)
    y = jax.nn.sigmoid(y @ fc2)
    return x * y[:, None, None, :].astype(x.dtype)


def cee_forward(main, feat, p):
    x = jnp.concatenate([main, feat], axis=-1)
    x = conv(x, p["res"])
    x = jnp.concatenate([x, main], axis=-1)
    x = conv(x, p["res"])          # shared conv/BN weights, as in the reference CEELayer
    return se_forward(x, p["fc1"], p["fc2"])


def basic_block_forward(x, blk, stride, dilation):
    pad = dilation if dilation > 1 else 1
    out = conv(x, blk["conv1"], stride=stride, padding=pad, dilation=dilation, act="relu")
    sc = x
    if blk["down"] is not None:
        sc = conv(x, blk["down"], stride=stride, padding=0, act="none")
    # conv2 + BN with the residual add fused into the epilogue (no ReLU after the add)
    return conv(out, blk["conv2"], stride=1, padding=pad, dilation=dilation,
                act="none", residual=sc)


def layer_forward(x, layer, stride, dilation):
    for i, blk in enumerate(layer):
        x = basic_block_forward(x, blk, stride if i == 0 else 1, dilation)
    return x


def feature_extraction_forward(params, input_img_4_nchw):
    x = jnp.transpose(input_img_4_nchw.astype(jnp.float32), (0, 2, 3, 1))   # NCHW -> NHWC
    img = x[..., :3]
    coord = x[..., 3:4]

    out = conv(img, params["firstconv"][0], stride=2)
    out = conv(out, params["firstconv"][1])
    out = conv(out, params["firstconv"][2])

    out = layer_forward(out, params["layer1"], 1, 1)                         # (N, H/2, W/2, 32)

    feat32 = conv(img, params["inline32"], stride=2)
    fused1 = cee_forward(out, feat32, params["cee32"])

    output_raw = layer_forward(fused1, params["layer2"], 2, 1)               # (N, H/4, W/4, 64)

    feat64 = conv(out, params["inline64"], stride=2)
    fused2 = cee_forward(output_raw, feat64, params["cee64"])

    o3 = layer_forward(fused2, params["layer3"], 1, 1)                       # 128 ch
    output_skip = layer_forward(o3, params["layer4"], 1, 2)                  # 128 ch, dilation 2

    oc = conv(coord, params["firstcoord"][0], stride=2)
    oc = conv(oc, params["firstcoord"][1], stride=2)
    oc = conv(oc, params["firstcoord"][2])

    skip_c = jnp.concatenate([output_skip, oc], axis=-1)                     # 160 ch

    aspp = _tap_conv(skip_c, params["aspp"]["w"], params["aspp"]["b"], None,
                     tap_offsets=params["aspp"]["taps"], stride=1,
                     padding=params["aspp"]["pad"], act="relu")              # 5x16 = 80 ch

    feat = jnp.concatenate([output_raw, aspp], axis=-1)                      # 144 ch
    feat = conv(feat, params["newlast1"])
    feat = conv(feat, params["newlast2"], padding=0, act="none")

    return jnp.transpose(feat, (0, 3, 1, 2)).astype(jnp.float32)             # NHWC -> NCHW


# --------------------------------------------------------------------------
# self-check of the Pallas conv against XLA's reference conv, then demo
# --------------------------------------------------------------------------
def _verify_conv_against_xla(key):
    cfgs = [
        # (h, w, cin, cout, k, stride, padding, dilation)
        (16, 16, 8, 32, 3, 1, 1, 1),
        (16, 16, 8, 32, 3, 2, 1, 1),
        (8, 8, 16, 32, 3, 1, 2, 2),
        (16, 16, 8, 32, 1, 2, 0, 1),
    ]
    for (h, w, cin, cout, k, s, p, d) in cfgs:
        key, k1, k2, k3 = jax.random.split(key, 4)
        xin = jax.random.normal(k1, (2, h, w, cin), jnp.float32)
        wgt = jax.random.normal(k2, (k, k, cin, cout), jnp.float32) * (2.0 / (k * k * cin)) ** 0.5
        b = jax.random.normal(k3, (cout,), jnp.float32) * 0.1
        pdict = {"w": wgt.reshape(k * k, cin, cout).astype(jnp.bfloat16), "b": b, "k": k}
        got = conv(xin, pdict, stride=s, padding=p, dilation=d, act="none").astype(jnp.float32)
        ref = jax.lax.conv_general_dilated(
            xin, wgt, window_strides=(s, s), padding=[(p, p), (p, p)],
            rhs_dilation=(d, d), dimension_numbers=("NHWC", "HWIO", "NHWC")) + b
        assert float(jnp.max(jnp.abs(got - ref))) < 0.15

    # merged multi-dilation (ASPP-style) conv
    key, k1, k2, k3 = jax.random.split(key, 4)
    xa = jax.random.normal(k1, (2, 8, 8, 8), jnp.float32)
    cfgs2 = [(1, 1, 0), (3, 3, 3)]
    ws = [jax.random.normal(k2, (1, 1, 8, 8), jnp.float32) * 0.3,
          jax.random.normal(k3, (3, 3, 8, 8), jnp.float32) * 0.1]
    wst, taps = _merge_dilated_branches(ws, cfgs2, p0=3)
    got = _tap_conv(xa, wst, jnp.zeros((16,), jnp.float32), None,
                    tap_offsets=taps, stride=1, padding=3, act="none").astype(jnp.float32)
    refs = []
    for w, (k, d, pd) in zip(ws, cfgs2):
        refs.append(jax.lax.conv_general_dilated(
            xa, w, window_strides=(1, 1), padding=[(pd, pd), (pd, pd)],
            rhs_dilation=(d, d), dimension_numbers=("NHWC", "HWIO", "NHWC")))
    ref = jnp.concatenate(refs, axis=-1)
    assert float(jnp.max(jnp.abs(got - ref))) < 0.15


if __name__ == "__main__":
    key = jax.random.PRNGKey(0)
    pkey, xkey, ckey = jax.random.split(key, 3)

    _verify_conv_against_xla(ckey)

    params = init_feature_extraction(pkey)

    # input_img_4: (N, 4, H, W) -- 3 RGB channels + 1 coord channel
    x = jax.random.normal(xkey, (2, 4, 32, 32), jnp.float32)

    out = feature_extraction_forward(params, x)
    out = jax.block_until_ready(out)

    assert out.shape == (2, 32, 8, 8), out.shape
    assert bool(jnp.all(jnp.isfinite(out)))
    print("KERNEL_OK")
</pallas_src>

<mosaic_0001>
module attributes {stable_mosaic.version = 11 : i64} {
  func.func @_conv_tap_kernel(%arg0: i32, %arg1: i32, %arg2: memref<1x1x608x8xbf16, #tpu.memory_space<vmem>>, %arg3: memref<72x32xbf16, #tpu.memory_space<vmem>>, %arg4: memref<1x32xf32, #tpu.memory_space<vmem>>, %arg5: memref<1x16x16x32xbf16, #tpu.memory_space<vmem>>, %arg6: memref<512x72xbf16, #tpu.memory_space<vmem>>) attributes {dimension_semantics = [#tpu.dimension_semantics<parallel>, #tpu.dimension_semantics<parallel>], iteration_bounds = array<i64: 2, 1>, scalar_prefetch = 0 : i64, scratch_operands = 1 : i64, tpu.core_type = #tpu.core_type<tc>, window_params = [{transform_indices = @transform_0, window_bounds = array<i64: 1, 1, 608, 8>}, {pipeline_mode = #tpu.pipeline_mode<synchronous>, transform_indices = @transform_1, window_bounds = array<i64: 72, 32>}, {pipeline_mode = #tpu.pipeline_mode<synchronous>, transform_indices = @transform_2, window_bounds = array<i64: 1, 32>}, {transform_indices = @transform_3, window_bounds = array<i64: 1, 16, 16, 32>}]} {
    %c0 = arith.constant 0 : index
    %c0_0 = arith.constant 0 : index
    %c0_1 = arith.constant 0 : index
    %c0_2 = arith.constant 0 : index
    %0 = vector.load %arg2[%c0, %c0_0, %c0_1, %c0_2] : memref<1x1x608x8xbf16, #tpu.memory_space<vmem>>, vector<1x1x528x8xbf16>
    %1 = vector.shape_cast %0 : vector<1x1x528x8xbf16> to vector<528x8xbf16>
    %2 = vector.extract_strided_slice %1 {offsets = [0, 0], sizes = [512, 8], strides = [1, 1]} : vector<528x8xbf16> to vector<512x8xbf16>
    %c0_3 = arith.constant 0 : index
    %c0_4 = arith.constant 0 : index
    %3 = vector.load %arg6[%c0_3, %c0_4] : memref<512x72xbf16, #tpu.memory_space<vmem>>, vector<512x8xbf16>
    tpu.vector_store %arg6[%c0_3, %c0_4], %2 {strides = array<i32>} : memref<512x72xbf16, #tpu.memory_space<vmem>>, vector<512x8xbf16>,
    %4 = vector.extract_strided_slice %1 {offsets = [1, 0], sizes = [512, 8], strides = [1, 1]} : vector<528x8xbf16> to vector<512x8xbf16>
    %c0_5 = arith.constant 0 : index
    %c8 = arith.constant 8 : index
    %5 = vector.load %arg6[%c0_5, %c8] : memref<512x72xbf16, #tpu.memory_space<vmem>>, vector<512x8xbf16>
    tpu.vector_store %arg6[%c0_5, %c8], %4 {strides = array<i32>} : memref<512x72xbf16, #tpu.memory_space<vmem>>, vector<512x8xbf16>,
    %6 = vector.extract_strided_slice %1 {offsets = [2, 0], sizes = [512, 8], strides = [1, 1]} : vector<528x8xbf16> to vector<512x8xbf16>
    %c0_6 = arith.constant 0 : index
    %c16 = arith.constant 16 : index
    %7 = vector.load %arg6[%c0_6, %c16] : memref<512x72xbf16, #tpu.memory_space<vmem>>, vector<512x8xbf16>
    tpu.vector_store %arg6[%c0_6, %c16], %6 {strides = array<i32>} : memref<512x72xbf16, #tpu.memory_space<vmem>>, vector<512x8xbf16>,
    %c0_7 = arith.constant 0 : index
    %c0_8 = arith.constant 0 : index
    %c32 = arith.constant 32 : index
    %c0_9 = arith.constant 0 : index
    %8 = vector.load %arg2[%c0_7, %c0_8, %c32, %c0_9] : memref<1x1x608x8xbf16, #tpu.memory_space<vmem>>, vector<1x1x528x8xbf16>
    %9 = vector.shape_cast %8 : vector<1x1x528x8xbf16> to vector<528x8xbf16>
    %10 = vector.extract_strided_slice %9 {offsets = [0, 0], sizes = [512, 8], strides = [1, 1]} : vector<528x8xbf16> to vector<512x8xbf16>
    %c0_10 = arith.constant 0 : index
    %c24 = arith.constant 24 : index
    %11 = vector.load %arg6[%c0_10, %c24] : memref<512x72xbf16, #tpu.memory_space<vmem>>, vector<512x8xbf16>
    tpu.vector_store %arg6[%c0_10, %c24], %10 {strides = array<i32>} : memref<512x72xbf16, #tpu.memory_space<vmem>>, vector<512x8xbf16>,
    %12 = vector.extract_strided_slice %9 {offsets = [1, 0], sizes = [512, 8], strides = [1, 1]} : vector<528x8xbf16> to vector<512x8xbf16>
    %c0_11 = arith.constant 0 : index
    %c32_12 = arith.constant 32 : index
    %13 = vector.load %arg6[%c0_11, %c32_12] : memref<512x72xbf16, #tpu.memory_space<vmem>>, vector<512x8xbf16>
    tpu.vector_store %arg6[%c0_11, %c32_12], %12 {strides = array<i32>} : memref<512x72xbf16, #tpu.memory_space<vmem>>, vector<512x8xbf16>,
    %14 = vector.extract_strided_slice %9 {offsets = [2, 0], sizes = [512, 8], strides = [1, 1]} : vector<528x8xbf16> to vector<512x8xbf16>
    %c0_13 = arith.constant 0 : index
    %c40 = arith.constant 40 : index
    %15 = vector.load %arg6[%c0_13, %c40] : memref<512x72xbf16, #tpu.memory_space<vmem>>, vector<512x8xbf16>
    tpu.vector_store %arg6[%c0_13, %c40], %14 {strides = array<i32>} : memref<512x72xbf16, #tpu.memory_space<vmem>>, vector<512x8xbf16>,
    %c0_14 = arith.constant 0 : index
    %c0_15 = arith.constant 0 : index
    %c64 = arith.constant 64 : index
    %c0_16 = arith.constant 0 : index
    %16 = vector.load %arg2[%c0_14, %c0_15, %c64, %c0_16] : memref<1x1x608x8xbf16, #tpu.memory_space<vmem>>, vector<1x1x528x8xbf16>
    %17 = vector.shape_cast %16 : vector<1x1x528x8xbf16> to vector<528x8xbf16>
    %18 = vector.extract_strided_slice %17 {offsets = [0, 0], sizes = [512, 8], strides = [1, 1]} : vector<528x8xbf16> to vector<512x8xbf16>
    %c0_17 = arith.constant 0 : index
    %c48 = arith.constant 48 : index
    %19 = vector.load %arg6[%c0_17, %c48] : memref<512x72xbf16, #tpu.memory_space<vmem>>, vector<512x8xbf16>
    tpu.vector_store %arg6[%c0_17, %c48], %18 {strides = array<i32>} : memref<512x72xbf16, #tpu.memory_space<vmem>>, vector<512x8xbf16>,
    %20 = vector.extract_strided_slice %17 {offsets = [1, 0], sizes = [512, 8], strides = [1, 1]} : vector<528x8xbf16> to vector<512x8xbf16>
    %c0_18 = arith.constant 0 : index
    %c56 = arith.constant 56 : index
    %21 = vector.load %arg6[%c0_18, %c56] : memref<512x72xbf16, #tpu.memory_space<vmem>>, vector<512x8xbf16>
    tpu.vector_store %arg6[%c0_18, %c56], %20 {strides = array<i32>} : memref<512x72xbf16, #tpu.memory_space<vmem>>, vector<512x8xbf16>,
    %22 = vector.extract_strided_slice %17 {offsets = [2, 0], sizes = [512, 8], strides = [1, 1]} : vector<528x8xbf16> to vector<512x8xbf16>
    %c0_19 = arith.constant 0 : index
    %c64_20 = arith.constant 64 : index
    %23 = vector.load %arg6[%c0_19, %c64_20] : memref<512x72xbf16, #tpu.memory_space<vmem>>, vector<512x8xbf16>
    tpu.vector_store %arg6[%c0_19, %c64_20], %22 {strides = array<i32>} : memref<512x72xbf16, #tpu.memory_space<vmem>>, vector<512x8xbf16>,
    %c0_21 = arith.constant 0 : index
    %c0_22 = arith.constant 0 : index
    %24 = vector.load %arg6[%c0_21, %c0_22] : memref<512x72xbf16, #tpu.memory_space<vmem>>, vector<512x72xbf16>
    %c0_23 = arith.constant 0 : index
    %c0_24 = arith.constant 0 : index
    %25 = vector.load %arg3[%c0_23, %c0_24] : memref<72x32xbf16, #tpu.memory_space<vmem>>, vector<72x32xbf16>
    %cst = arith.constant dense<0.000000e+00> : vector<512x32xf32>
    %26 = tpu.matmul %24, %25, %cst {dimension_numbers = #tpu.dot_dimension_numbers<[1], [0], [0], [1], [0, 0, 1, 1], [], []>} : vector<512x72xbf16>, vector<72x32xbf16>, vector<512x32xf32> -> vector<512x32xf32>
    %27 = vector.shape_cast %26 : vector<512x32xf32> to vector<16x32x32xf32>
    %28 = vector.extract_strided_slice %27 {offsets = [0, 0, 0], sizes = [16, 16, 32], strides = [1, 1, 1]} : vector<16x32x32xf32> to vector<16x16x32xf32>
    %c0_25 = arith.constant 0 : index
    %c0_26 = arith.constant 0 : index
    %29 = vector.load %arg4[%c0_25, %c0_26] : memref<1x32xf32, #tpu.memory_space<vmem>>, vector<1x32xf32>
    %30 = vector.shape_cast %29 : vector<1x32xf32> to vector<32xf32>
    %31 = vector.shape_cast %30 : vector<32xf32> to vector<1x1x32xf32>
    %32 = vector.broadcast %31 : vector<1x1x32xf32> to vector<16x16x32xf32>
    %33 = arith.addf %28, %32 : vector<16x16x32xf32>
    %34 = arith.truncf %33 : vector<16x16x32xf32> to vector<16x16x32xbf16>
    %c0_27 = arith.constant 0 : index
    %c0_28 = arith.constant 0 : index
    %c0_29 = arith.constant 0 : index
    %c0_30 = arith.constant 0 : index
    %35 = vector.load %arg5[%c0_27, %c0_28, %c0_29, %c0_30] : memref<1x16x16x32xbf16, #tpu.memory_space<vmem>>, vector<1x16x16x32xbf16>
    %36 = vector.shape_cast %35 : vector<1x16x16x32xbf16> to vector<16x16x32xbf16>
    %37 = vector.shape_cast %34 : vector<16x16x32xbf16> to vector<1x16x16x32xbf16>
    tpu.vector_store %arg5[%c0_27, %c0_28, %c0_29, %c0_30], %37 {strides = array<i32>} : memref<1x16x16x32xbf16, #tpu.memory_space<vmem>>, vector<1x16x16x32xbf16>,
    return
  }
  func.func @transform_0(%arg0: i32, %arg1: i32) -> (i32, i32, i32, i32) {
    %c1_i32 = arith.constant 1 : i32
    %0 = arith.muli %arg0, %c1_i32 : i32
    %1 = arith.addi %0, %arg1 : i32
    %c0_i32 = arith.constant 0 : i32
    %c0_i32_0 = arith.constant 0 : i32
    %c0_i32_1 = arith.constant 0 : i32
    %c0_i32_2 = arith.constant 0 : i32
    return %1, %c0_i32, %c0_i32_0, %c0_i32_1 : i32, i32, i32, i32
  }
  func.func @transform_1(%arg0: i32, %arg1: i32) -> (i32, i32) {
    %c0_i32 = arith.constant 0 : i32
    %c0_i32_0 = arith.constant 0 : i32
    %c0_i32_1 = arith.constant 0 : i32
    return %c0_i32, %c0_i32_0 : i32, i32
  }
  func.func @transform_2(%arg0: i32, %arg1: i32) -> (i32, i32) {
    %c0_i32 = arith.constant 0 : i32
    %c0_i32_0 = arith.constant 0 : i32
    %c0_i32_1 = arith.constant 0 : i32
    return %c0_i32, %c0_i32_0 : i32, i32
  }
  func.func @transform_3(%arg0: i32, %arg1: i32) -> (i32, i32, i32, i32) {
    %c0_i32 = arith.constant 0 : i32
    %c0_i32_0 = arith.constant 0 : i32
    %c0_i32_1 = arith.constant 0 : i32
    return %arg0, %arg1, %c0_i32, %c0_i32_0 : i32, i32, i32, i32
  }
}

</mosaic_0001>

<llo_original>
// kernel: _tap_conv.1
$region0: #{_tap_conv.1}
  #allocation0 [shape = 'u32[]', space=smem, size = 0x4, offset = 0x4, fixed_abs, tag = 'smem constant byte address 0x4 - core index']
  #allocation1 [shape = 'u32[72,128]{1,0:T(1,128)}', space=vmem, size = 0x9000, scoped, tag = 'internal scratch']
  #allocation2 [shape = 'bf16[512,72]{1,0:T(8,128)(2,1)}', space=vmem, size = 0x20000, scoped, tag = 'scratch operand']
  %s0 = inlined_call_operand.vmem [shape: bf16[2,1,608,8], index: 0, kind: input, shape index: {}]
  %s1 = inlined_call_operand.vmem [shape: bf16[72,32], index: 1, kind: input, shape index: {}]
  %s2 = inlined_call_operand.vmem [shape: f32[1,32], index: 2, kind: input, shape index: {}]
  %s3 = inlined_call_operand.hbm [shape: bf16[2,16,16,32], index: 3, kind: output, shape index: {}]
  %s4 = sld [smem:[#allocation0]]
  $region45: #{_tap_conv.1} parent=0
    _
  %s6 = ssub.s32 1, %s4
  %s7 = scalar_select 0, %s6, %s4
  $region1: #{_tap_conv.1} parent=0
    #allocation3 [shape = 'u8[131072]{0}', space=vmem, size = 0x20000, scoped, tag = 'output window, operand 0']
    #allocation4 [shape = 's32[2]{0}', space=sflag, size = 0x8, scoped, tag = 'scoped memory for _tap_conv.1']
    %8 = vsyncpa [#allocation4], 0
    %s9 = scalar_lea.sflag [#allocation4], 1
    %10 = vsyncpa %s9, 0
    loop: start=0, step=1, limit=4
    $region2: #{_tap_conv.1} parent=1 // loop_pre_header
      _
    $region3: #{_tap_conv.1} parent=1 // loop_header
      %s12 = sphi 0, %s16
      %p13 = scmp.ge.s32.totalorder %s12, 4
      %s19 = sphi 0, %s31
      %s20 = sphi 0, %s27
      %s21 = sphi 0, %s19
      %s22 = sphi 0, %s20
      %s23 = sphi 0, %s21
      %s24 = sphi 0, %s22
      %s36 = sphi 0, %s38
      %s39 = sphi 0, %s36
      %s40 = sphi 0, %s39
      %s56 = sphi 0, %s40
      %s60 = sphi 0, %s60
      %s62 = sphi 0, %s60
      %s63 = sphi 0, %s62
      %s77 = sphi 0, %s63
      %s81 = sphi 0, %s81
      %s83 = sphi 0, %s81
      %s84 = sphi 0, %s83
      %s98 = sphi 0, %s84
      %s106 = sphi 0, %s108
      %s109 = sphi 0, %s106
      %s110 = sphi 0, %s109
      %s126 = sphi 0, %s110
    $region4: #{_tap_conv.1} parent=1 // loop_header_branch
      %15 = sbr.rel (%p13) target = $region8
    $region5: #{_tap_conv.1} parent=1 // loop_body
      %s17 = ssub.s32 %s12, 1
      %s18 = ssub.s32 %s12, 2
      %s25 = sadd.s32 1, %s20
      %p26 = scmp.ge.s32.totalorder %s25, 1
      %s27 = scalar_select %p26, 0, %s25
      %s28 = sadd.s32 1, %s19
      %s29 = scalar_select %p26, %s28, %s19
      %p30 = scmp.ge.s32.totalorder %s29, 2
      %s31 = scalar_select %p30, 0, %s29
      %s32 = sadd.s32 %s19, %s20
      %s33 = sadd.s32 %s31, %s27
      %s34 = ssub.s32 %s32, %s33
      %p35 = scmp.eq.s32.totalorder %s34, 0
      %s37 = sadd.s32 %s36, 1
      %s38 = scalar_select %p35, %s36, %s37
      %p41 = pneg %p35
      %p42 = scmp.eq.s32.totalorder %s12, 1
      %p43 = por %p41, %p42
      %p44 = scmp.ne.s32.totalorder %s36, %s39
      %p45 = scmp.eq.s32.totalorder %s12, 0
      %p46 = por %p44, %p45
      %p47 = scmp.ne.s32.totalorder %s36, %s39
      %p48 = scmp.eq.s32.totalorder %s17, 1
      %p49 = por %p47, %p48
      %p50 = scmp.ne.s32.totalorder %s39, %s40
      %p51 = scmp.eq.s32.totalorder %s17, 0
      %p52 = por %p50, %p51
      %p53 = scmp.ne.s32.totalorder %s39, %s40
      %p54 = scmp.eq.s32.totalorder %s18, 1
      %p55 = por %p53, %p54
      %p57 = scmp.ne.s32.totalorder %s40, %s56
      %p58 = scmp.eq.s32.totalorder %s18, 0
      %p59 = por %p57, %p58
      %s61 = sadd.s32 %s60, 1
      %p64 = scmp.eq.s32.totalorder %s12, 1
      %p65 = scmp.ne.s32.totalorder %s60, %s62
      %p66 = scmp.eq.s32.totalorder %s12, 0
      %p67 = por %p65, %p66
      %p68 = scmp.ne.s32.totalorder %s60, %s62
      %p69 = scmp.eq.s32.totalorder %s17, 1
      %p70 = por %p68, %p69
      %p71 = scmp.ne.s32.totalorder %s62, %s63
      %p72 = scmp.eq.s32.totalorder %s17, 0
      %p73 = por %p71, %p72
      %p74 = scmp.ne.s32.totalorder %s62, %s63
      %p75 = scmp.eq.s32.totalorder %s18, 1
      %p76 = por %p74, %p75
      %p78 = scmp.ne.s32.totalorder %s63, %s77
      %p79 = scmp.eq.s32.totalorder %s18, 0
      %p80 = por %p78, %p79
      %s82 = sadd.s32 %s81, 1
      %p85 = scmp.eq.s32.totalorder %s12, 1
      %p86 = scmp.ne.s32.totalorder %s81, %s83
      %p87 = scmp.eq.s32.totalorder %s12, 0
      %p88 = por %p86, %p87
      %p89 = scmp.ne.s32.totalorder %s81, %s83
      %p90 = scmp.eq.s32.totalorder %s17, 1
      %p91 = por %p89, %p90
      %p92 = scmp.ne.s32.totalorder %s83, %s84
      %p93 = scmp.eq.s32.totalorder %s17, 0
      %p94 = por %p92, %p93
      %p95 = scmp.ne.s32.totalorder %s83, %s84
      %p96 = scmp.eq.s32.totalorder %s18, 1
      %p97 = por %p95, %p96
      %p99 = scmp.ne.s32.totalorder %s84, %s98
      %p100 = scmp.eq.s32.totalorder %s18, 0
      %p101 = por %p99, %p100
      %s102 = ssub.s32 %s19, %s31
      %s103 = ssub.s32 %s20, %s27
      %s104 = sor.u32 %s102, %s103
      %p105 = scmp.eq.s32.totalorder %s104, 0
      %s107 = sadd.s32 %s106, 1
      %s108 = scalar_select %p105, %s106, %s107
      %p111 = pneg %p105
      %p112 = scmp.eq.s32.totalorder %s12, 1
      %p113 = por %p111, %p112
      %p114 = scmp.ne.s32.totalorder %s106, %s109
      %p115 = scmp.eq.s32.totalorder %s12, 0
      %p116 = por %p114, %p115
      %p117 = scmp.ne.s32.totalorder %s106, %s109
      %p118 = scmp.eq.s32.totalorder %s17, 1
      %p119 = por %p117, %p118
      %p120 = scmp.ne.s32.totalorder %s109, %s110
      %p121 = scmp.eq.s32.totalorder %s17, 0
      %p122 = por %p120, %p121
      %p123 = scmp.ne.s32.totalorder %s109, %s110
      %p124 = scmp.eq.s32.totalorder %s18, 1
      %p125 = por %p123, %p124
      %p127 = scmp.ne.s32.totalorder %s110, %s126
      %p128 = scmp.eq.s32.totalorder %s18, 0
      %p129 = por %p127, %p128
      %p130 = scmp.le.s32.totalorder 1, %s12
      %p131 = scmp.lt.s32.totalorder %s12, 3
      %p132 = pnand %p130, %p131
      %p133 = pneg %p132
      // Predicated region
      $region9: #{_tap_conv.1} parent=5 // pred_check
        _
      $region10: #{_tap_conv.1} parent=5 // pred_check_branch
        %135 = sbr.rel (%p132) target = $region12
      $region11: #{_tap_conv.1} parent=5 // pred_region
        %s136 = ssub.s32 %s12, 1
        // Predicated region
        $region13: #{_tap_conv.1} parent=11 // pred_check
          %p137 = pneg %p73
        $region14: #{_tap_conv.1} parent=11 // pred_check_branch
          %139 = sbr.rel (%p137) target = $region16
        $region15: #{_tap_conv.1} parent=11 // pred_region
          _
        $region16: #{_tap_conv.1} parent=11 // pred_fallthru
          _
        // Predicated region
        $region17: #{_tap_conv.1} parent=11 // pred_check
          %p140 = pneg %p94
        $region18: #{_tap_conv.1} parent=11 // pred_check_branch
          %142 = sbr.rel (%p140) target = $region20
        $region19: #{_tap_conv.1} parent=11 // pred_region
          _
        $region20: #{_tap_conv.1} parent=11 // pred_fallthru
          _
      $region12: #{_tap_conv.1} parent=5 // pred_fallthru
        _
      %p143 = scmp.lt.s32.totalorder %s12, 2
      // Predicated region
      $region21: #{_tap_conv.1} parent=5 // pred_check
        %p144 = pneg %p143
      $region22: #{_tap_conv.1} parent=5 // pred_check_branch
        %146 = sbr.rel (%p144) target = $region24
      $region23: #{_tap_conv.1} parent=5 // pred_region
        // Predicated region
        $region25: #{_tap_conv.1} parent=23 // pred_check
          %p147 = pneg %p46
        $region26: #{_tap_conv.1} parent=23 // pred_check_branch
          %149 = sbr.rel (%p147) target = $region28
        $region27: #{_tap_conv.1} parent=23 // pred_region
          %s150 = sadd.s32 %s19, %s20
          %p151 = scmp.lt.s32.totalorder %s150, 1
          %s152 = scalar_select %p151, %s150, 1
          %s153 = smul.addr %s152, 76
          %s154 = smul.addr %s153, 4
          %s155 = scalar_lea.vmem %s0, %s154
          %s156 = sadd.s32 %s19, %s20
        $region28: #{_tap_conv.1} parent=23 // pred_fallthru
          _
      $region24: #{_tap_conv.1} parent=5 // pred_fallthru
        _
      %p157 = scmp.le.s32.totalorder 1, %s12
      %p158 = scmp.lt.s32.totalorder %s12, 3
      %p159 = pnand %p157, %p158
      %p160 = pneg %p159
      // Predicated region
      $region29: #{_tap_conv.1} parent=5 // pred_check
        _
      $region30: #{_tap_conv.1} parent=5 // pred_check_branch
        %162 = sbr.rel (%p159) target = $region32
      $region31: #{_tap_conv.1} parent=5 // pred_region
        %s163 = ssub.s32 %s12, 1
        %s164 = sadd.s32 %s21, %s22
        %p165 = scmp.lt.s32.totalorder %s164, 1
        %s166 = scalar_select %p165, %s164, 1
        %s167 = smul.addr %s166, 76
        %s168 = smul.addr %s167, 4
        %s169 = scalar_lea.vmem %s0, %s168
        %p170 = pneg %p52
        %p171 = pneg %p49
        %p172 = pneg %p73
        %p173 = pneg %p70
        %p174 = pneg %p94
        %p175 = pneg %p91
        %p176 = pneg %p122
        %p177 = pneg %p119
        %s178 = sand.u32 %s109, 1
        %s179 = scalar_lea.sflag [#allocation4], %s178
        %s180 = sand.u32 %s109, 1
        %s181 = smul.addr %s180, 128
        %s182 = scalar_lea.vmem [#allocation3], %s181
        %s183 = sadd.s32 %s21, %s22
        %p184 = scmp.lt.s32.totalorder %s183, 1
        %s185 = scalar_select %p184, %s183, 1
        %s186 = smul.addr %s185, 76
        %s187 = smul.addr %s186, 4
        %s188 = scalar_lea.vmem %s0, %s187
        %s189 = sadd.s32 %s21, %s22
        %s190 = smul.u32 16, %s22
        %v192 = vld [vmem:[%s188] sm:$0xf]
        %v193 = vld [vmem:[%s188 + $0x4] sm:$0xf]
        %v194 = vld [vmem:[%s188 + $0x8] sm:$0xf]
        %v195 = vld [vmem:[%s188 + $0xc] sm:$0xf]
        %v196 = vld [vmem:[%s188 + $0x10] sm:$0xf]
        %v197 = vld [vmem:[%s188 + $0x14] sm:$0xf]
        %v198 = vld [vmem:[%s188 + $0x18] sm:$0xf]
        %v199 = vld [vmem:[%s188 + $0x1c] sm:$0xf]
        %v200 = vld [vmem:[%s188 + $0x20] sm:$0xf]
        %v201 = vld [vmem:[%s188 + $0x24] sm:$0xf]
        %v202 = vld [vmem:[%s188 + $0x28] sm:$0xf]
        %v203 = vld [vmem:[%s188 + $0x2c] sm:$0xf]
        %v204 = vld [vmem:[%s188 + $0x30] sm:$0xf]
        %v205 = vld [vmem:[%s188 + $0x34] sm:$0xf]
        %v206 = vld [vmem:[%s188 + $0x38] sm:$0xf]
        %v207 = vld [vmem:[%s188 + $0x3c] sm:$0xf]
        %v208 = vld [vmem:[%s188 + $0x40] sm:$0xf]
        %v209 = vld [vmem:[%s188 + $0x44] sm:$0xf]
        %v210 = vld [vmem:[%s188 + $0x48] sm:$0xf]
        %v211 = vld [vmem:[%s188 + $0x4c] sm:$0xf]
        %v212 = vld [vmem:[%s188 + $0x50] sm:$0xf]
        %v213 = vld [vmem:[%s188 + $0x54] sm:$0xf]
        %v214 = vld [vmem:[%s188 + $0x58] sm:$0xf]
        %v215 = vld [vmem:[%s188 + $0x5c] sm:$0xf]
        %v216 = vld [vmem:[%s188 + $0x60] sm:$0xf]
        %v217 = vld [vmem:[%s188 + $0x64] sm:$0xf]
        %v218 = vld [vmem:[%s188 + $0x68] sm:$0xf]
        %v219 = vld [vmem:[%s188 + $0x6c] sm:$0xf]
        %v220 = vld [vmem:[%s188 + $0x70] sm:$0xf]
        %v221 = vld [vmem:[%s188 + $0x74] sm:$0xf]
        %v222 = vld [vmem:[%s188 + $0x78] sm:$0xf]
        %v223 = vld [vmem:[%s188 + $0x7c] sm:$0xf]
        %v224 = vld [vmem:[%s188 + $0x80] sm:$0xf]
        %v225 = vld [vmem:[%s188 + $0x84] sm:$0xf]
        %v226 = vld [vmem:[%s188 + $0x88] sm:$0xf]
        %v227 = vld [vmem:[%s188 + $0x8c] sm:$0xf]
        %v228 = vld [vmem:[%s188 + $0x90] sm:$0xf]
        %v229 = vld [vmem:[%s188 + $0x94] sm:$0xf]
        %v230 = vld [vmem:[%s188 + $0x98] sm:$0xf]
        %v231 = vld [vmem:[%s188 + $0x9c] sm:$0xf]
        %v232 = vld [vmem:[%s188 + $0xa0] sm:$0xf]
        %v233 = vld [vmem:[%s188 + $0xa4] sm:$0xf]
        %v234 = vld [vmem:[%s188 + $0xa8] sm:$0xf]
        %v235 = vld [vmem:[%s188 + $0xac] sm:$0xf]
        %v236 = vld [vmem:[%s188 + $0xb0] sm:$0xf]
        %v237 = vld [vmem:[%s188 + $0xb4] sm:$0xf]
        %v238 = vld [vmem:[%s188 + $0xb8] sm:$0xf]
        %v239 = vld [vmem:[%s188 + $0xbc] sm:$0xf]
        %v240 = vld [vmem:[%s188 + $0xc0] sm:$0xf]
        %v241 = vld [vmem:[%s188 + $0xc4] sm:$0xf]
        %v242 = vld [vmem:[%s188 + $0xc8] sm:$0xf]
        %v243 = vld [vmem:[%s188 + $0xcc] sm:$0xf]
        %v244 = vld [vmem:[%s188 + $0xd0] sm:$0xf]
        %v245 = vld [vmem:[%s188 + $0xd4] sm:$0xf]
        %v246 = vld [vmem:[%s188 + $0xd8] sm:$0xf]
        %v247 = vld [vmem:[%s188 + $0xdc] sm:$0xf]
        %v248 = vld [vmem:[%s188 + $0xe0] sm:$0xf]
        %v249 = vld [vmem:[%s188 + $0xe4] sm:$0xf]
        %v250 = vld [vmem:[%s188 + $0xe8] sm:$0xf]
        %v251 = vld [vmem:[%s188 + $0xec] sm:$0xf]
        %v252 = vld [vmem:[%s188 + $0xf0] sm:$0xf]
        %v253 = vld [vmem:[%s188 + $0xf4] sm:$0xf]
        %v254 = vld [vmem:[%s188 + $0xf8] sm:$0xf]
        %v255 = vld [vmem:[%s188 + $0xfc] sm:$0xf]
        %v256 = vld [vmem:[%s188 + $0x100] sm:$0xf]
        %vm257 = vcmask 60416
        %258 = vst.msk [vmem:[#allocation2] sm:$0xf] %vm257, %v192
        %259 = vst.msk [vmem:[#allocation2 + $0x4] sm:$0xf] %vm257, %v193
        %260 = vst.msk [vmem:[#allocation2 + $0x8] sm:$0xf] %vm257, %v194
        %261 = vst.msk [vmem:[#allocation2 + $0xc] sm:$0xf] %vm257, %v195
        %262 = vst.msk [vmem:[#allocation2 + $0x10] sm:$0xf] %vm257, %v196
        %263 = vst.msk [vmem:[#allocation2 + $0x14] sm:$0xf] %vm257, %v197
        %264 = vst.msk [vmem:[#allocation2 + $0x18] sm:$0xf] %vm257, %v198
        %265 = vst.msk [vmem:[#allocation2 + $0x1c] sm:$0xf] %vm257, %v199
        %266 = vst.msk [vmem:[#allocation2 + $0x20] sm:$0xf] %vm257, %v200
        %267 = vst.msk [vmem:[#allocation2 + $0x24] sm:$0xf] %vm257, %v201
        %268 = vst.msk [vmem:[#allocation2 + $0x28] sm:$0xf] %vm257, %v202
        %269 = vst.msk [vmem:[#allocation2 + $0x2c] sm:$0xf] %vm257, %v203
        %270 = vst.msk [vmem:[#allocation2 + $0x30] sm:$0xf] %vm257, %v204
        %271 = vst.msk [vmem:[#allocation2 + $0x34] sm:$0xf] %vm257, %v205
        %272 = vst.msk [vmem:[#allocation2 + $0x38] sm:$0xf] %vm257, %v206
        %273 = vst.msk [vmem:[#allocation2 + $0x3c] sm:$0xf] %vm257, %v207
        %274 = vst.msk [vmem:[#allocation2 + $0x40] sm:$0xf] %vm257, %v208
        %275 = vst.msk [vmem:[#allocation2 + $0x44] sm:$0xf] %vm257, %v209
        %276 = vst.msk [vmem:[#allocation2 + $0x48] sm:$0xf] %vm257, %v210
        %277 = vst.msk [vmem:[#allocation2 + $0x4c] sm:$0xf] %vm257, %v211
        %278 = vst.msk [vmem:[#allocation2 + $0x50] sm:$0xf] %vm257, %v212
        %279 = vst.msk [vmem:[#allocation2 + $0x54] sm:$0xf] %vm257, %v213
        %280 = vst.msk [vmem:[#allocation2 + $0x58] sm:$0xf] %vm257, %v214
        %281 = vst.msk [vmem:[#allocation2 + $0x5c] sm:$0xf] %vm257, %v215
        %282 = vst.msk [vmem:[#allocation2 + $0x60] sm:$0xf] %vm257, %v216
        %283 = vst.msk [vmem:[#allocation2 + $0x64] sm:$0xf] %vm257, %v217
        %284 = vst.msk [vmem:[#allocation2 + $0x68] sm:$0xf] %vm257, %v218
        %285 = vst.msk [vmem:[#allocation2 + $0x6c] sm:$0xf] %vm257, %v219
        %286 = vst.msk [vmem:[#allocation2 + $0x70] sm:$0xf] %vm257, %v220
        %287 = vst.msk [vmem:[#allocation2 + $0x74] sm:$0xf] %vm257, %v221
        %288 = vst.msk [vmem:[#allocation2 + $0x78] sm:$0xf] %vm257, %v222
        %289 = vst.msk [vmem:[#allocation2 + $0x7c] sm:$0xf] %vm257, %v223
        %290 = vst.msk [vmem:[#allocation2 + $0x80] sm:$0xf] %vm257, %v224
        %291 = vst.msk [vmem:[#allocation2 + $0x84] sm:$0xf] %vm257, %v225
        %292 = vst.msk [vmem:[#allocation2 + $0x88] sm:$0xf] %vm257, %v226
        %293 = vst.msk [vmem:[#allocation2 + $0x8c] sm:$0xf] %vm257, %v227
        %294 = vst.msk [vmem:[#allocation2 + $0x90] sm:$0xf] %vm257, %v228
        %295 = vst.msk [vmem:[#allocation2 + $0x94] sm:$0xf] %vm257, %v229
        %296 = vst.msk [vmem:[#allocation2 + $0x98] sm:$0xf] %vm257, %v230
        %297 = vst.msk [vmem:[#allocation2 + $0x9c] sm:$0xf] %vm257, %v231
        %298 = vst.msk [vmem:[#allocation2 + $0xa0] sm:$0xf] %vm257, %v232
        %299 = vst.msk [vmem:[#allocation2 + $0xa4] sm:$0xf] %vm257, %v233
        %300 = vst.msk [vmem:[#allocation2 + $0xa8] sm:$0xf] %vm257, %v234
        %301 = vst.msk [vmem:[#allocation2 + $0xac] sm:$0xf] %vm257, %v235
        %302 = vst.msk [vmem:[#allocation2 + $0xb0] sm:$0xf] %vm257, %v236
        %303 = vst.msk [vmem:[#allocation2 + $0xb4] sm:$0xf] %vm257, %v237
        %304 = vst.msk [vmem:[#allocation2 + $0xb8] sm:$0xf] %vm257, %v238
        %305 = vst.msk [vmem:[#allocation2 + $0xbc] sm:$0xf] %vm257, %v239
        %306 = vst.msk [vmem:[#allocation2 + $0xc0] sm:$0xf] %vm257, %v240
        %307 = vst.msk [vmem:[#allocation2 + $0xc4] sm:$0xf] %vm257, %v241
        %308 = vst.msk [vmem:[#allocation2 + $0xc8] sm:$0xf] %vm257, %v242
        %309 = vst.msk [vmem:[#allocation2 + $0xcc] sm:$0xf] %vm257, %v243
        %310 = vst.msk [vmem:[#allocation2 + $0xd0] sm:$0xf] %vm257, %v244
        %311 = vst.msk [vmem:[#allocation2 + $0xd4] sm:$0xf] %vm257, %v245
        %312 = vst.msk [vmem:[#allocation2 + $0xd8] sm:$0xf] %vm257, %v246
        %313 = vst.msk [vmem:[#allocation2 + $0xdc] sm:$0xf] %vm257, %v247
        %314 = vst.msk [vmem:[#allocation2 + $0xe0] sm:$0xf] %vm257, %v248
        %315 = vst.msk [vmem:[#allocation2 + $0xe4] sm:$0xf] %vm257, %v249
        %316 = vst.msk [vmem:[#allocation2 + $0xe8] sm:$0xf] %vm257, %v250
        %317 = vst.msk [vmem:[#allocation2 + $0xec] sm:$0xf] %vm257, %v251
        %318 = vst.msk [vmem:[#allocation2 + $0xf0] sm:$0xf] %vm257, %v252
        %319 = vst.msk [vmem:[#allocation2 + $0xf4] sm:$0xf] %vm257, %v253
        %320 = vst.msk [vmem:[#allocation2 + $0xf8] sm:$0xf] %vm257, %v254
        %321 = vst.msk [vmem:[#allocation2 + $0xfc] sm:$0xf] %vm257, %v255
        %vm322 = vsmask.f32 3328
        %vm323 = vsmask.f32 7440
        %vm324 = vmor %vm322, %vm323
        %v326 = vshrl.u32 %v192, 16
        %v328 = vrot.slane %v326, 4
        %v329 = vshll.u32 %v192, 16
        %v331 = vrot.slane %v329, 5
        %v332 = vor.u32 %v328, %v331
        %v333 = vrot.slane %v332, 4
        %v335 = vshll.u32 %v193, 16
        %v337 = vrot.slane %v335, 5
        %v338 = vsel %vm324, %v333, %v337
        %v339 = vshrl.u32 %v193, 16
        %v341 = vrot.slane %v339, 4
        %v342 = vor.u32 %v341, %v337
        %v343 = vrot.slane %v342, 4
        %v345 = vshll.u32 %v194, 16
        %v347 = vrot.slane %v345, 5
        %v348 = vsel %vm324, %v343, %v347
        %v349 = vshrl.u32 %v194, 16
        %v351 = vrot.slane %v349, 4
        %v352 = vor.u32 %v351, %v347
        %v353 = vrot.slane %v352, 4
        %v355 = vshll.u32 %v195, 16
        %v357 = vrot.slane %v355, 5
        %v358 = vsel %vm324, %v353, %v357
        %v359 = vshrl.u32 %v195, 16
        %v361 = vrot.slane %v359, 4
        %v362 = vor.u32 %v361, %v357
        %v363 = vrot.slane %v362, 4
        %v365 = vshll.u32 %v196, 16
        %v367 = vrot.slane %v365, 5
        %v368 = vsel %vm324, %v363, %v367
        %v369 = vshrl.u32 %v196, 16
        %v371 = vrot.slane %v369, 4
        %v372 = vor.u32 %v371, %v367
        %v373 = vrot.slane %v372, 4
        %v375 = vshll.u32 %v197, 16
        %v377 = vrot.slane %v375, 5
        %v378 = vsel %vm324, %v373, %v377
        %v379 = vshrl.u32 %v197, 16
        %v381 = vrot.slane %v379, 4
        %v382 = vor.u32 %v381, %v377
        %v383 = vrot.slane %v382, 4
        %v385 = vshll.u32 %v198, 16
        %v387 = vrot.slane %v385, 5
        %v388 = vsel %vm324, %v383, %v387
        %v389 = vshrl.u32 %v198, 16
        %v391 = vrot.slane %v389, 4
        %v392 = vor.u32 %v391, %v387
        %v393 = vrot.slane %v392, 4
        %v395 = vshll.u32 %v199, 16
        %v397 = vrot.slane %v395, 5
        %v398 = vsel %vm324, %v393, %v397
        %v399 = vshrl.u32 %v199, 16
        %v401 = vrot.slane %v399, 4
        %v402 = vor.u32 %v401, %v397
        %v403 = vrot.slane %v402, 4
        %v405 = vshll.u32 %v200, 16
        %v407 = vrot.slane %v405, 5
        %v408 = vsel %vm324, %v403, %v407
        %v409 = vshrl.u32 %v200, 16
        %v411 = vrot.slane %v409, 4
        %v412 = vor.u32 %v411, %v407
        %v413 = vrot.slane %v412, 4
        %v415 = vshll.u32 %v201, 16
        %v417 = vrot.slane %v415, 5
        %v418 = vsel %vm324, %v413, %v417
        %v419 = vshrl.u32 %v201, 16
        %v421 = vrot.slane %v419, 4
        %v422 = vor.u32 %v421, %v417
        %v423 = vrot.slane %v422, 4
        %v425 = vshll.u32 %v202, 16
        %v427 = vrot.slane %v425, 5
        %v428 = vsel %vm324, %v423, %v427
        %v429 = vshrl.u32 %v202, 16
        %v431 = vrot.slane %v429, 4
        %v432 = vor.u32 %v431, %v427
        %v433 = vrot.slane %v432, 4
        %v435 = vshll.u32 %v203, 16
        %v437 = vrot.slane %v435, 5
        %v438 = vsel %vm324, %v433, %v437
        %v439 = vshrl.u32 %v203, 16
        %v441 = vrot.slane %v439, 4
        %v442 = vor.u32 %v441, %v437
        %v443 = vrot.slane %v442, 4
        %v445 = vshll.u32 %v204, 16
        %v447 = vrot.slane %v445, 5
        %v448 = vsel %vm324, %v443, %v447
        %v449 = vshrl.u32 %v204, 16
        %v451 = vrot.slane %v449, 4
        %v452 = vor.u32 %v451, %v447
        %v453 = vrot.slane %v452, 4
        %v455 = vshll.u32 %v205, 16
        %v457 = vrot.slane %v455, 5
        %v458 = vsel %vm324, %v453, %v457
        %v459 = vshrl.u32 %v205, 16
        %v461 = vrot.slane %v459, 4
        %v462 = vor.u32 %v461, %v457
        %v463 = vrot.slane %v462, 4
        %v465 = vshll.u32 %v206, 16
        %v467 = vrot.slane %v465, 5
        %v468 = vsel %vm324, %v463, %v467
        %v469 = vshrl.u32 %v206, 16
        %v471 = vrot.slane %v469, 4
        %v472 = vor.u32 %v471, %v467
        %v473 = vrot.slane %v472, 4
        %v475 = vshll.u32 %v207, 16
        %v477 = vrot.slane %v475, 5
        %v478 = vsel %vm324, %v473, %v477
        %v479 = vshrl.u32 %v207, 16
        %v481 = vrot.slane %v479, 4
        %v482 = vor.u32 %v481, %v477
        %v483 = vrot.slane %v482, 4
        %v485 = vshll.u32 %v208, 16
        %v487 = vrot.slane %v485, 5
        %v488 = vsel %vm324, %v483, %v487
        %v489 = vshrl.u32 %v208, 16
        %v491 = vrot.slane %v489, 4
        %v492 = vor.u32 %v491, %v487
        %v493 = vrot.slane %v492, 4
        %v495 = vshll.u32 %v209, 16
        %v497 = vrot.slane %v495, 5
        %v498 = vsel %vm324, %v493, %v497
        %v499 = vshrl.u32 %v209, 16
        %v501 = vrot.slane %v499, 4
        %v502 = vor.u32 %v501, %v497
        %v503 = vrot.slane %v502, 4
        %v505 = vshll.u32 %v210, 16
        %v507 = vrot.slane %v505, 5
        %v508 = vsel %vm324, %v503, %v507
        %v509 = vshrl.u32 %v210, 16
        %v511 = vrot.slane %v509, 4
        %v512 = vor.u32 %v511, %v507
        %v513 = vrot.slane %v512, 4
        %v515 = vshll.u32 %v211, 16
        %v517 = vrot.slane %v515, 5
        %v518 = vsel %vm324, %v513, %v517
        %v519 = vshrl.u32 %v211, 16
        %v521 = vrot.slane %v519, 4
        %v522 = vor.u32 %v521, %v517
        %v523 = vrot.slane %v522, 4
        %v525 = vshll.u32 %v212, 16
        %v527 = vrot.slane %v525, 5
        %v528 = vsel %vm324, %v523, %v527
        %v529 = vshrl.u32 %v212, 16
        %v531 = vrot.slane %v529, 4
        %v532 = vor.u32 %v531, %v527
        %v533 = vrot.slane %v532, 4
        %v535 = vshll.u32 %v213, 16
        %v537 = vrot.slane %v535, 5
        %v538 = vsel %vm324, %v533, %v537
        %v539 = vshrl.u32 %v213, 16
        %v541 = vrot.slane %v539, 4
        %v542 = vor.u32 %v541, %v537
        %v543 = vrot.slane %v542, 4
        %v545 = vshll.u32 %v214, 16
        %v547 = vrot.slane %v545, 5
        %v548 = vsel %vm324, %v543, %v547
        %v549 = vshrl.u32 %v214, 16
        %v551 = vrot.slane %v549, 4
        %v552 = vor.u32 %v551, %v547
        %v553 = vrot.slane %v552, 4
        %v555 = vshll.u32 %v215, 16
        %v557 = vrot.slane %v555, 5
        %v558 = vsel %vm324, %v553, %v557
        %v559 = vshrl.u32 %v215, 16
        %v561 = vrot.slane %v559, 4
        %v562 = vor.u32 %v561, %v557
        %v563 = vrot.slane %v562, 4
        %v565 = vshll.u32 %v216, 16
        %v567 = vrot.slane %v565, 5
        %v568 = vsel %vm324, %v563, %v567
        %v569 = vshrl.u32 %v216, 16
        %v571 = vrot.slane %v569, 4
        %v572 = vor.u32 %v571, %v567
        %v573 = vrot.slane %v572, 4
        %v575 = vshll.u32 %v217, 16
        %v577 = vrot.slane %v575, 5
        %v578 = vsel %vm324, %v573, %v577
        %v579 = vshrl.u32 %v217, 16
        %v581 = vrot.slane %v579, 4
        %v582 = vor.u32 %v581, %v577
        %v583 = vrot.slane %v582, 4
        %v585 = vshll.u32 %v218, 16
        %v587 = vrot.slane %v585, 5
        %v588 = vsel %vm324, %v583, %v587
        %v589 = vshrl.u32 %v218, 16
        %v591 = vrot.slane %v589, 4
        %v592 = vor.u32 %v591, %v587
        %v593 = vrot.slane %v592, 4
        %v595 = vshll.u32 %v219, 16
        %v597 = vrot.slane %v595, 5
        %v598 = vsel %vm324, %v593, %v597
        %v599 = vshrl.u32 %v219, 16
        %v601 = vrot.slane %v599, 4
        %v602 = vor.u32 %v601, %v597
        %v603 = vrot.slane %v602, 4
        %v605 = vshll.u32 %v220, 16
        %v607 = vrot.slane %v605, 5
        %v608 = vsel %vm324, %v603, %v607
        %v609 = vshrl.u32 %v220, 16
        %v611 = vrot.slane %v609, 4
        %v612 = vor.u32 %v611, %v607
        %v613 = vrot.slane %v612, 4
        %v615 = vshll.u32 %v221, 16
        %v617 = vrot.slane %v615, 5
        %v618 = vsel %vm324, %v613, %v617
        %v619 = vshrl.u32 %v221, 16
        %v621 = vrot.slane %v619, 4
        %v622 = vor.u32 %v621, %v617
        %v623 = vrot.slane %v622, 4
        %v625 = vshll.u32 %v222, 16
        %v627 = vrot.slane %v625, 5
        %v628 = vsel %vm324, %v623, %v627
        %v629 = vshrl.u32 %v222, 16
        %v631 = vrot.slane %v629, 4
        %v632 = vor.u32 %v631, %v627
        %v633 = vrot.slane %v632, 4
        %v635 = vshll.u32 %v223, 16
        %v637 = vrot.slane %v635, 5
        %v638 = vsel %vm324, %v633, %v637
        %v639 = vshrl.u32 %v223, 16
        %v641 = vrot.slane %v639, 4
        %v642 = vor.u32 %v641, %v637
        %v643 = vrot.slane %v642, 4
        %v645 = vshll.u32 %v224, 16
        %v647 = vrot.slane %v645, 5
        %v648 = vsel %vm324, %v643, %v647
        %v649 = vshrl.u32 %v224, 16
        %v651 = vrot.slane %v649, 4
        %v652 = vor.u32 %v651, %v647
        %v653 = vrot.slane %v652, 4
        %v655 = vshll.u32 %v225, 16
        %v657 = vrot.slane %v655, 5
        %v658 = vsel %vm324, %v653, %v657
        %v659 = vshrl.u32 %v225, 16
        %v661 = vrot.slane %v659, 4
        %v662 = vor.u32 %v661, %v657
        %v663 = vrot.slane %v662, 4
        %v665 = vshll.u32 %v226, 16
        %v667 = vrot.slane %v665, 5
        %v668 = vsel %vm324, %v663, %v667
        %v669 = vshrl.u32 %v226, 16
        %v671 = vrot.slane %v669, 4
        %v672 = vor.u32 %v671, %v667
        %v673 = vrot.slane %v672, 4
        %v675 = vshll.u32 %v227, 16
        %v677 = vrot.slane %v675, 5
        %v678 = vsel %vm324, %v673, %v677
        %v679 = vshrl.u32 %v227, 16
        %v681 = vrot.slane %v679, 4
        %v682 = vor.u32 %v681, %v677
        %v683 = vrot.slane %v682, 4
        %v685 = vshll.u32 %v228, 16
        %v687 = vrot.slane %v685, 5
        %v688 = vsel %vm324, %v683, %v687
        %v689 = vshrl.u32 %v228, 16
        %v691 = vrot.slane %v689, 4
        %v692 = vor.u32 %v691, %v687
        %v693 = vrot.slane %v692, 4
        %v695 = vshll.u32 %v229, 16
        %v697 = vrot.slane %v695, 5
        %v698 = vsel %vm324, %v693, %v697
        %v699 = vshrl.u32 %v229, 16
        %v701 = vrot.slane %v699, 4
        %v702 = vor.u32 %v701, %v697
        %v703 = vrot.slane %v702, 4
        %v705 = vshll.u32 %v230, 16
        %v707 = vrot.slane %v705, 5
        %v708 = vsel %vm324, %v703, %v707
        %v709 = vshrl.u32 %v230, 16
        %v711 = vrot.slane %v709, 4
        %v712 = vor.u32 %v711, %v707
        %v713 = vrot.slane %v712, 4
        %v715 = vshll.u32 %v231, 16
        %v717 = vrot.slane %v715, 5
        %v718 = vsel %vm324, %v713, %v717
        %v719 = vshrl.u32 %v231, 16
        %v721 = vrot.slane %v719, 4
        %v722 = vor.u32 %v721, %v717
        %v723 = vrot.slane %v722, 4
        %v725 = vshll.u32 %v232, 16
        %v727 = vrot.slane %v725, 5
        %v728 = vsel %vm324, %v723, %v727
        %v729 = vshrl.u32 %v232, 16
        %v731 = vrot.slane %v729, 4
        %v732 = vor.u32 %v731, %v727
        %v733 = vrot.slane %v732, 4
        %v735 = vshll.u32 %v233, 16
        %v737 = vrot.slane %v735, 5
        %v738 = vsel %vm324, %v733, %v737
        %v739 = vshrl.u32 %v233, 16
        %v741 = vrot.slane %v739, 4
        %v742 = vor.u32 %v741, %v737
        %v743 = vrot.slane %v742, 4
        %v745 = vshll.u32 %v234, 16
        %v747 = vrot.slane %v745, 5
        %v748 = vsel %vm324, %v743, %v747
        %v749 = vshrl.u32 %v234, 16
        %v751 = vrot.slane %v749, 4
        %v752 = vor.u32 %v751, %v747
        %v753 = vrot.slane %v752, 4
        %v755 = vshll.u32 %v235, 16
        %v757 = vrot.slane %v755, 5
        %v758 = vsel %vm324, %v753, %v757
        %v759 = vshrl.u32 %v235, 16
        %v761 = vrot.slane %v759, 4
        %v762 = vor.u32 %v761, %v757
        %v763 = vrot.slane %v762, 4
        %v765 = vshll.u32 %v236, 16
        %v767 = vrot.slane %v765, 5
        %v768 = vsel %vm324, %v763, %v767
        %v769 = vshrl.u32 %v236, 16
        %v771 = vrot.slane %v769, 4
        %v772 = vor.u32 %v771, %v767
        %v773 = vrot.slane %v772, 4
        %v775 = vshll.u32 %v237, 16
        %v777 = vrot.slane %v775, 5
        %v778 = vsel %vm324, %v773, %v777
        %v779 = vshrl.u32 %v237, 16
        %v781 = vrot.slane %v779, 4
        %v782 = vor.u32 %v781, %v777
        %v783 = vrot.slane %v782, 4
        %v785 = vshll.u32 %v238, 16
        %v787 = vrot.slane %v785, 5
        %v788 = vsel %vm324, %v783, %v787
        %v789 = vshrl.u32 %v238, 16
        %v791 = vrot.slane %v789, 4
        %v792 = vor.u32 %v791, %v787
        %v793 = vrot.slane %v792, 4
        %v795 = vshll.u32 %v239, 16
        %v797 = vrot.slane %v795, 5
        %v798 = vsel %vm324, %v793, %v797
        %v799 = vshrl.u32 %v239, 16
        %v801 = vrot.slane %v799, 4
        %v802 = vor.u32 %v801, %v797
        %v803 = vrot.slane %v802, 4
        %v805 = vshll.u32 %v240, 16
        %v807 = vrot.slane %v805, 5
        %v808 = vsel %vm324, %v803, %v807
        %v809 = vshrl.u32 %v240, 16
        %v811 = vrot.slane %v809, 4
        %v812 = vor.u32 %v811, %v807
        %v813 = vrot.slane %v812, 4
        %v815 = vshll.u32 %v241, 16
        %v817 = vrot.slane %v815, 5
        %v818 = vsel %vm324, %v813, %v817
        %v819 = vshrl.u32 %v241, 16
        %v821 = vrot.slane %v819, 4
        %v822 = vor.u32 %v821, %v817
        %v823 = vrot.slane %v822, 4
        %v825 = vshll.u32 %v242, 16
        %v827 = vrot.slane %v825, 5
        %v828 = vsel %vm324, %v823, %v827
        %v829 = vshrl.u32 %v242, 16
        %v831 = vrot.slane %v829, 4
        %v832 = vor.u32 %v831, %v827
        %v833 = vrot.slane %v832, 4
        %v835 = vshll.u32 %v243, 16
        %v837 = vrot.slane %v835, 5
        %v838 = vsel %vm324, %v833, %v837
        %v839 = vshrl.u32 %v243, 16
        %v841 = vrot.slane %v839, 4
        %v842 = vor.u32 %v841, %v837
        %v843 = vrot.slane %v842, 4
        %v845 = vshll.u32 %v244, 16
        %v847 = vrot.slane %v845, 5
        %v848 = vsel %vm324, %v843, %v847
        %v849 = vshrl.u32 %v244, 16
        %v851 = vrot.slane %v849, 4
        %v852 = vor.u32 %v851, %v847
        %v853 = vrot.slane %v852, 4
        %v855 = vshll.u32 %v245, 16
        %v857 = vrot.slane %v855, 5
        %v858 = vsel %vm324, %v853, %v857
        %v859 = vshrl.u32 %v245, 16
        %v861 = vrot.slane %v859, 4
        %v862 = vor.u32 %v861, %v857
        %v863 = vrot.slane %v862, 4
        %v865 = vshll.u32 %v246, 16
        %v867 = vrot.slane %v865, 5
        %v868 = vsel %vm324, %v863, %v867
        %v869 = vshrl.u32 %v246, 16
        %v871 = vrot.slane %v869, 4
        %v872 = vor.u32 %v871, %v867
        %v873 = vrot.slane %v872, 4
        %v875 = vshll.u32 %v247, 16
        %v877 = vrot.slane %v875, 5
        %v878 = vsel %vm324, %v873, %v877
        %v879 = vshrl.u32 %v247, 16
        %v881 = vrot.slane %v879, 4
        %v882 = vor.u32 %v881, %v877
        %v883 = vrot.slane %v882, 4
        %v885 = vshll.u32 %v248, 16
        %v887 = vrot.slane %v885, 5
        %v888 = vsel %vm324, %v883, %v887
        %v889 = vshrl.u32 %v248, 16
        %v891 = vrot.slane %v889, 4
        %v892 = vor.u32 %v891, %v887
        %v893 = vrot.slane %v892, 4
        %v895 = vshll.u32 %v249, 16
        %v897 = vrot.slane %v895, 5
        %v898 = vsel %vm324, %v893, %v897
        %v899 = vshrl.u32 %v249, 16
        %v901 = vrot.slane %v899, 4
        %v902 = vor.u32 %v901, %v897
        %v903 = vrot.slane %v902, 4
        %v905 = vshll.u32 %v250, 16
        %v907 = vrot.slane %v905, 5
        %v908 = vsel %vm324, %v903, %v907
        %v909 = vshrl.u32 %v250, 16
        %v911 = vrot.slane %v909, 4
        %v912 = vor.u32 %v911, %v907
        %v913 = vrot.slane %v912, 4
        %v915 = vshll.u32 %v251, 16
        %v917 = vrot.slane %v915, 5
        %v918 = vsel %vm324, %v913, %v917
        %v919 = vshrl.u32 %v251, 16
        %v921 = vrot.slane %v919, 4
        %v922 = vor.u32 %v921, %v917
        %v923 = vrot.slane %v922, 4
        %v925 = vshll.u32 %v252, 16
        %v927 = vrot.slane %v925, 5
        %v928 = vsel %vm324, %v923, %v927
        %v929 = vshrl.u32 %v252, 16
        %v931 = vrot.slane %v929, 4
        %v932 = vor.u32 %v931, %v927
        %v933 = vrot.slane %v932, 4
        %v935 = vshll.u32 %v253, 16
        %v937 = vrot.slane %v935, 5
        %v938 = vsel %vm324, %v933, %v937
        %v939 = vshrl.u32 %v253, 16
        %v941 = vrot.slane %v939, 4
        %v942 = vor.u32 %v941, %v937
        %v943 = vrot.slane %v942, 4
        %v945 = vshll.u32 %v254, 16
        %v947 = vrot.slane %v945, 5
        %v948 = vsel %vm324, %v943, %v947
        %v949 = vshrl.u32 %v254, 16
        %v951 = vrot.slane %v949, 4
        %v952 = vor.u32 %v951, %v947
        %v953 = vrot.slane %v952, 4
        %v955 = vshll.u32 %v255, 16
        %v957 = vrot.slane %v955, 5
        %v958 = vsel %vm324, %v953, %v957
        %v959 = vshrl.u32 %v255, 16
        %v961 = vrot.slane %v959, 4
        %v962 = vor.u32 %v961, %v957
        %v963 = vrot.slane %v962, 4
        %v965 = vshll.u32 %v256, 16
        %v967 = vrot.slane %v965, 5
        %v968 = vsel %vm324, %v963, %v967
        %969 = vrot.lane.b32.xlu0 %v338, 8
        %v970 = vpop.permute.xlu0 %969
        %971 = vrot.lane.b32.xlu0 %v348, 8
        %v972 = vpop.permute.xlu0 %971
        %973 = vrot.lane.b32.xlu0 %v358, 8
        %v974 = vpop.permute.xlu0 %973
        %975 = vrot.lane.b32.xlu0 %v368, 8
        %v976 = vpop.permute.xlu0 %975
        %977 = vrot.lane.b32.xlu0 %v378, 8
        %v978 = vpop.permute.xlu0 %977
        %979 = vrot.lane.b32.xlu0 %v388, 8
        %v980 = vpop.permute.xlu0 %979
        %981 = vrot.lane.b32.xlu0 %v398, 8
        %v982 = vpop.permute.xlu0 %981
        %983 = vrot.lane.b32.xlu0 %v408, 8
        %v984 = vpop.permute.xlu0 %983
        %985 = vrot.lane.b32.xlu0 %v418, 8
        %v986 = vpop.permute.xlu0 %985
        %987 = vrot.lane.b32.xlu0 %v428, 8
        %v988 = vpop.permute.xlu0 %987
        %989 = vrot.lane.b32.xlu0 %v438, 8
        %v990 = vpop.permute.xlu0 %989
        %991 = vrot.lane.b32.xlu0 %v448, 8
        %v992 = vpop.permute.xlu0 %991
        %993 = vrot.lane.b32.xlu0 %v458, 8
        %v994 = vpop.permute.xlu0 %993
        %995 = vrot.lane.b32.xlu0 %v468, 8
        %v996 = vpop.permute.xlu0 %995
        %997 = vrot.lane.b32.xlu0 %v478, 8
        %v998 = vpop.permute.xlu0 %997
        %999 = vrot.lane.b32.xlu0 %v488, 8
        %v1000 = vpop.permute.xlu0 %999
        %1001 = vrot.lane.b32.xlu0 %v498, 8
        %v1002 = vpop.permute.xlu0 %1001
        %1003 = vrot.lane.b32.xlu0 %v508, 8
        %v1004 = vpop.permute.xlu0 %1003
        %1005 = vrot.lane.b32.xlu0 %v518, 8
        %v1006 = vpop.permute.xlu0 %1005
        %1007 = vrot.lane.b32.xlu0 %v528, 8
        %v1008 = vpop.permute.xlu0 %1007
        %1009 = vrot.lane.b32.xlu0 %v538, 8
        %v1010 = vpop.permute.xlu0 %1009
        %1011 = vrot.lane.b32.xlu0 %v548, 8
        %v1012 = vpop.permute.xlu0 %1011
        %1013 = vrot.lane.b32.xlu0 %v558, 8
        %v1014 = vpop.permute.xlu0 %1013
        %1015 = vrot.lane.b32.xlu0 %v568, 8
        %v1016 = vpop.permute.xlu0 %1015
        %1017 = vrot.lane.b32.xlu0 %v578, 8
        %v1018 = vpop.permute.xlu0 %1017
        %1019 = vrot.lane.b32.xlu0 %v588, 8
        %v1020 = vpop.permute.xlu0 %1019
        %1021 = vrot.lane.b32.xlu0 %v598, 8
        %v1022 = vpop.permute.xlu0 %1021
        %1023 = vrot.lane.b32.xlu0 %v608, 8
        %v1024 = vpop.permute.xlu0 %1023
        %1025 = vrot.lane.b32.xlu0 %v618, 8
        %v1026 = vpop.permute.xlu0 %1025
        %1027 = vrot.lane.b32.xlu0 %v628, 8
        %v1028 = vpop.permute.xlu0 %1027
        %1029 = vrot.lane.b32.xlu0 %v638, 8
        %v1030 = vpop.permute.xlu0 %1029
        %1031 = vrot.lane.b32.xlu0 %v648, 8
        %v1032 = vpop.permute.xlu0 %1031
        %1033 = vrot.lane.b32.xlu0 %v658, 8
        %v1034 = vpop.permute.xlu0 %1033
        %1035 = vrot.lane.b32.xlu0 %v668, 8
        %v1036 = vpop.permute.xlu0 %1035
        %1037 = vrot.lane.b32.xlu0 %v678, 8
        %v1038 = vpop.permute.xlu0 %1037
        %1039 = vrot.lane.b32.xlu0 %v688, 8
        %v1040 = vpop.permute.xlu0 %1039
        %1041 = vrot.lane.b32.xlu0 %v698, 8
        %v1042 = vpop.permute.xlu0 %1041
        %1043 = vrot.lane.b32.xlu0 %v708, 8
        %v1044 = vpop.permute.xlu0 %1043
        %1045 = vrot.lane.b32.xlu0 %v718, 8
        %v1046 = vpop.permute.xlu0 %1045
        %1047 = vrot.lane.b32.xlu0 %v728, 8
        %v1048 = vpop.permute.xlu0 %1047
        %1049 = vrot.lane.b32.xlu0 %v738, 8
        %v1050 = vpop.permute.xlu0 %1049
        %1051 = vrot.lane.b32.xlu0 %v748, 8
        %v1052 = vpop.permute.xlu0 %1051
        %1053 = vrot.lane.b32.xlu0 %v758, 8
        %v1054 = vpop.permute.xlu0 %1053
        %1055 = vrot.lane.b32.xlu0 %v768, 8
        %v1056 = vpop.permute.xlu0 %1055
        %1057 = vrot.lane.b32.xlu0 %v778, 8
        %v1058 = vpop.permute.xlu0 %1057
        %1059 = vrot.lane.b32.xlu0 %v788, 8
        %v1060 = vpop.permute.xlu0 %1059
        %1061 = vrot.lane.b32.xlu0 %v798, 8
        %v1062 = vpop.permute.xlu0 %1061
        %1063 = vrot.lane.b32.xlu0 %v808, 8
        %v1064 = vpop.permute.xlu0 %1063
        %1065 = vrot.lane.b32.xlu0 %v818, 8
        %v1066 = vpop.permute.xlu0 %1065
        %1067 = vrot.lane.b32.xlu0 %v828, 8
        %v1068 = vpop.permute.xlu0 %1067
        %1069 = vrot.lane.b32.xlu0 %v838, 8
        %v1070 = vpop.permute.xlu0 %1069
        %1071 = vrot.lane.b32.xlu0 %v848, 8
        %v1072 = vpop.permute.xlu0 %1071
        %1073 = vrot.lane.b32.xlu0 %v858, 8
        %v1074 = vpop.permute.xlu0 %1073
        %1075 = vrot.lane.b32.xlu0 %v868, 8
        %v1076 = vpop.permute.xlu0 %1075
        %1077 = vrot.lane.b32.xlu0 %v878, 8
        %v1078 = vpop.permute.xlu0 %1077
        %1079 = vrot.lane.b32.xlu0 %v888, 8
        %v1080 = vpop.permute.xlu0 %1079
        %1081 = vrot.lane.b32.xlu0 %v898, 8
        %v1082 = vpop.permute.xlu0 %1081
        %1083 = vrot.lane.b32.xlu0 %v908, 8
        %v1084 = vpop.permute.xlu0 %1083
        %1085 = vrot.lane.b32.xlu0 %v918, 8
        %v1086 = vpop.permute.xlu0 %1085
        %1087 = vrot.lane.b32.xlu0 %v928, 8
        %v1088 = vpop.permute.xlu0 %1087
        %1089 = vrot.lane.b32.xlu0 %v938, 8
        %v1090 = vpop.permute.xlu0 %1089
        %1091 = vrot.lane.b32.xlu0 %v948, 8
        %v1092 = vpop.permute.xlu0 %1091
        %1093 = vrot.lane.b32.xlu0 %v958, 8
        %v1094 = vpop.permute.xlu0 %1093
        %1095 = vrot.lane.b32.xlu0 %v968, 8
        %v1096 = vpop.permute.xlu0 %1095
        %vm1161 = vcmask 126016
        %1162 = vst.msk [vmem:[#allocation2] sm:$0xf] %vm1161, %v970
        %1163 = vst.msk [vmem:[#allocation2 + $0x4] sm:$0xf] %vm1161, %v972
        %1164 = vst.msk [vmem:[#allocation2 + $0x8] sm:$0xf] %vm1161, %v974
        %1165 = vst.msk [vmem:[#allocation2 + $0xc] sm:$0xf] %vm1161, %v976
        %1166 = vst.msk [vmem:[#allocation2 + $0x10] sm:$0xf] %vm1161, %v978
        %1167 = vst.msk [vmem:[#allocation2 + $0x14] sm:$0xf] %vm1161, %v980
        %1168 = vst.msk [vmem:[#allocation2 + $0x18] sm:$0xf] %vm1161, %v982
        %1169 = vst.msk [vmem:[#allocation2 + $0x1c] sm:$0xf] %vm1161, %v984
        %1170 = vst.msk [vmem:[#allocation2 + $0x20] sm:$0xf] %vm1161, %v986
        %1171 = vst.msk [vmem:[#allocation2 + $0x24] sm:$0xf] %vm1161, %v988
        %1172 = vst.msk [vmem:[#allocation2 + $0x28] sm:$0xf] %vm1161, %v990
        %1173 = vst.msk [vmem:[#allocation2 + $0x2c] sm:$0xf] %vm1161, %v992
        %1174 = vst.msk [vmem:[#allocation2 + $0x30] sm:$0xf] %vm1161, %v994
        %1175 = vst.msk [vmem:[#allocation2 + $0x34] sm:$0xf] %vm1161, %v996
        %1176 = vst.msk [vmem:[#allocation2 + $0x38] sm:$0xf] %vm1161, %v998
        %1177 = vst.msk [vmem:[#allocation2 + $0x3c] sm:$0xf] %vm1161, %v1000
        %1178 = vst.msk [vmem:[#allocation2 + $0x40] sm:$0xf] %vm1161, %v1002
        %1179 = vst.msk [vmem:[#allocation2 + $0x44] sm:$0xf] %vm1161, %v1004
        %1180 = vst.msk [vmem:[#allocation2 + $0x48] sm:$0xf] %vm1161, %v1006
        %1181 = vst.msk [vmem:[#allocation2 + $0x4c] sm:$0xf] %vm1161, %v1008
        %1182 = vst.msk [vmem:[#allocation2 + $0x50] sm:$0xf] %vm1161, %v1010
        %1183 = vst.msk [vmem:[#allocation2 + $0x54] sm:$0xf] %vm1161, %v1012
        %1184 = vst.msk [vmem:[#allocation2 + $0x58] sm:$0xf] %vm1161, %v1014
        %1185 = vst.msk [vmem:[#allocation2 + $0x5c] sm:$0xf] %vm1161, %v1016
        %1186 = vst.msk [vmem:[#allocation2 + $0x60] sm:$0xf] %vm1161, %v1018
        %1187 = vst.msk [vmem:[#allocation2 + $0x64] sm:$0xf] %vm1161, %v1020
        %1188 = vst.msk [vmem:[#allocation2 + $0x68] sm:$0xf] %vm1161, %v1022
        %1189 = vst.msk [vmem:[#allocation2 + $0x6c] sm:$0xf] %vm1161, %v1024
        %1190 = vst.msk [vmem:[#allocation2 + $0x70] sm:$0xf] %vm1161, %v1026
        %1191 = vst.msk [vmem:[#allocation2 + $0x74] sm:$0xf] %vm1161, %v1028
        %1192 = vst.msk [vmem:[#allocation2 + $0x78] sm:$0xf] %vm1161, %v1030
        %1193 = vst.msk [vmem:[#allocation2 + $0x7c] sm:$0xf] %vm1161, %v1032
        %1194 = vst.msk [vmem:[#allocation2 + $0x80] sm:$0xf] %vm1161, %v1034
        %1195 = vst.msk [vmem:[#allocation2 + $0x84] sm:$0xf] %vm1161, %v1036
        %1196 = vst.msk [vmem:[#allocation2 + $0x88] sm:$0xf] %vm1161, %v1038
        %1197 = vst.msk [vmem:[#allocation2 + $0x8c] sm:$0xf] %vm1161, %v1040
        %1198 = vst.msk [vmem:[#allocation2 + $0x90] sm:$0xf] %vm1161, %v1042
        %1199 = vst.msk [vmem:[#allocation2 + $0x94] sm:$0xf] %vm1161, %v1044
        %1200 = vst.msk [vmem:[#allocation2 + $0x98] sm:$0xf] %vm1161, %v1046
        %1201 = vst.msk [vmem:[#allocation2 + $0x9c] sm:$0xf] %vm1161, %v1048
        %1202 = vst.msk [vmem:[#allocation2 + $0xa0] sm:$0xf] %vm1161, %v1050
        %1203 = vst.msk [vmem:[#allocation2 + $0xa4] sm:$0xf] %vm1161, %v1052
        %1204 = vst.msk [vmem:[#allocation2 + $0xa8] sm:$0xf] %vm1161, %v1054
        %1205 = vst.msk [vmem:[#allocation2 + $0xac] sm:$0xf] %vm1161, %v1056
        %1206 = vst.msk [vmem:[#allocation2 + $0xb0] sm:$0xf] %vm1161, %v1058
        %1207 = vst.msk [vmem:[#allocation2 + $0xb4] sm:$0xf] %vm1161, %v1060
        %1208 = vst.msk [vmem:[#allocation2 + $0xb8] sm:$0xf] %vm1161, %v1062
        %1209 = vst.msk [vmem:[#allocation2 + $0xbc] sm:$0xf] %vm1161, %v1064
        %1210 = vst.msk [vmem:[#allocation2 + $0xc0] sm:$0xf] %vm1161, %v1066
        %1211 = vst.msk [vmem:[#allocation2 + $0xc4] sm:$0xf] %vm1161, %v1068
        %1212 = vst.msk [vmem:[#allocation2 + $0xc8] sm:$0xf] %vm1161, %v1070
        %1213 = vst.msk [vmem:[#allocation2 + $0xcc] sm:$0xf] %vm1161, %v1072
        %1214 = vst.msk [vmem:[#allocation2 + $0xd0] sm:$0xf] %vm1161, %v1074
        %1215 = vst.msk [vmem:[#allocation2 + $0xd4] sm:$0xf] %vm1161, %v1076
        %1216 = vst.msk [vmem:[#allocation2 + $0xd8] sm:$0xf] %vm1161, %v1078
        %1217 = vst.msk [vmem:[#allocation2 + $0xdc] sm:$0xf] %vm1161, %v1080
        %1218 = vst.msk [vmem:[#allocation2 + $0xe0] sm:$0xf] %vm1161, %v1082
        %1219 = vst.msk [vmem:[#allocation2 + $0xe4] sm:$0xf] %vm1161, %v1084
        %1220 = vst.msk [vmem:[#allocation2 + $0xe8] sm:$0xf] %vm1161, %v1086
        %1221 = vst.msk [vmem:[#allocation2 + $0xec] sm:$0xf] %vm1161, %v1088
        %1222 = vst.msk [vmem:[#allocation2 + $0xf0] sm:$0xf] %vm1161, %v1090
        %1223 = vst.msk [vmem:[#allocation2 + $0xf4] sm:$0xf] %vm1161, %v1092
        %1224 = vst.msk [vmem:[#allocation2 + $0xf8] sm:$0xf] %vm1161, %v1094
        %1225 = vst.msk [vmem:[#allocation2 + $0xfc] sm:$0xf] %vm1161, %v1096
        %vm1291 = vcmask 1042432
        %vm1292 = vcmask 1046532
        %vm1293 = vmor %vm1291, %vm1292
        %v1294 = vrot.slane %v192, 5
        %v1295 = vrot.slane %v1294, 4
        %v1296 = vrot.slane %v193, 5
        %v1297 = vsel %vm1293, %v1295, %v1296
        %v1298 = vrot.slane %v1296, 4
        %v1299 = vrot.slane %v194, 5
        %v1300 = vsel %vm1293, %v1298, %v1299
        %v1301 = vrot.slane %v1299, 4
        %v1302 = vrot.slane %v195, 5
        %v1303 = vsel %vm1293, %v1301, %v1302
        %v1304 = vrot.slane %v1302, 4
        %v1305 = vrot.slane %v196, 5
        %v1306 = vsel %vm1293, %v1304, %v1305
        %v1307 = vrot.slane %v1305, 4
        %v1308 = vrot.slane %v197, 5
        %v1309 = vsel %vm1293, %v1307, %v1308
        %v1310 = vrot.slane %v1308, 4
        %v1311 = vrot.slane %v198, 5
        %v1312 = vsel %vm1293, %v1310, %v1311
        %v1313 = vrot.slane %v1311, 4
        %v1314 = vrot.slane %v199, 5
        %v1315 = vsel %vm1293, %v1313, %v1314
        %v1316 = vrot.slane %v1314, 4
        %v1317 = vrot.slane %v200, 5
        %v1318 = vsel %vm1293, %v1316, %v1317
        %v1319 = vrot.slane %v1317, 4
        %v1320 = vrot.slane %v201, 5
        %v1321 = vsel %vm1293, %v1319, %v1320
        %v1322 = vrot.slane %v1320, 4
        %v1323 = vrot.slane %v202, 5
        %v1324 = vsel %vm1293, %v1322, %v1323
        %v1325 = vrot.slane %v1323, 4
        %v1326 = vrot.slane %v203, 5
        %v1327 = vsel %vm1293, %v1325, %v1326
        %v1328 = vrot.slane %v1326, 4
        %v1329 = vrot.slane %v204, 5
        %v1330 = vsel %vm1293, %v1328, %v1329
        %v1331 = vrot.slane %v1329, 4
        %v1332 = vrot.slane %v205, 5
        %v1333 = vsel %vm1293, %v1331, %v1332
        %v1334 = vrot.slane %v1332, 4
        %v1335 = vrot.slane %v206, 5
        %v1336 = vsel %vm1293, %v1334, %v1335
        %v1337 = vrot.slane %v1335, 4
        %v1338 = vrot.slane %v207, 5
        %v1339 = vsel %vm1293, %v1337, %v1338
        %v1340 = vrot.slane %v1338, 4
        %v1341 = vrot.slane %v208, 5
        %v1342 = vsel %vm1293, %v1340, %v1341
        %v1343 = vrot.slane %v1341, 4
        %v1344 = vrot.slane %v209, 5
        %v1345 = vsel %vm1293, %v1343, %v1344
        %v1346 = vrot.slane %v1344, 4
        %v1347 = vrot.slane %v210, 5
        %v1348 = vsel %vm1293, %v1346, %v1347
        %v1349 = vrot.slane %v1347, 4
        %v1350 = vrot.slane %v211, 5
        %v1351 = vsel %vm1293, %v1349, %v1350
        %v1352 = vrot.slane %v1350, 4
        %v1353 = vrot.slane %v212, 5
        %v1354 = vsel %vm1293, %v1352, %v1353
        %v1355 = vrot.slane %v1353, 4
        %v1356 = vrot.slane %v213, 5
        %v1357 = vsel %vm1293, %v1355, %v1356
        %v1358 = vrot.slane %v1356, 4
        %v1359 = vrot.slane %v214, 5
        %v1360 = vsel %vm1293, %v1358, %v1359
        %v1361 = vrot.slane %v1359, 4
        %v1362 = vrot.slane %v215, 5
        %v1363 = vsel %vm1293, %v1361, %v1362
        %v1364 = vrot.slane %v1362, 4
        %v1365 = vrot.slane %v216, 5
        %v1366 = vsel %vm1293, %v1364, %v1365
        %v1367 = vrot.slane %v1365, 4
        %v1368 = vrot.slane %v217, 5
        %v1369 = vsel %vm1293, %v1367, %v1368
        %v1370 = vrot.slane %v1368, 4
        %v1371 = vrot.slane %v218, 5
        %v1372 = vsel %vm1293, %v1370, %v1371
        %v1373 = vrot.slane %v1371, 4
        %v1374 = vrot.slane %v219, 5
        %v1375 = vsel %vm1293, %v1373, %v1374
        %v1376 = vrot.slane %v1374, 4
        %v1377 = vrot.slane %v220, 5
        %v1378 = vsel %vm1293, %v1376, %v1377
        %v1379 = vrot.slane %v1377, 4
        %v1380 = vrot.slane %v221, 5
        %v1381 = vsel %vm1293, %v1379, %v1380
        %v1382 = vrot.slane %v1380, 4
        %v1383 = vrot.slane %v222, 5
        %v1384 = vsel %vm1293, %v1382, %v1383
        %v1385 = vrot.slane %v1383, 4
        %v1386 = vrot.slane %v223, 5
        %v1387 = vsel %vm1293, %v1385, %v1386
        %v1388 = vrot.slane %v1386, 4
        %v1389 = vrot.slane %v224, 5
        %v1390 = vsel %vm1293, %v1388, %v1389
        %v1391 = vrot.slane %v1389, 4
        %v1392 = vrot.slane %v225, 5
        %v1393 = vsel %vm1293, %v1391, %v1392
        %v1394 = vrot.slane %v1392, 4
        %v1395 = vrot.slane %v226, 5
        %v1396 = vsel %vm1293, %v1394, %v1395
        %v1397 = vrot.slane %v1395, 4
        %v1398 = vrot.slane %v227, 5
        %v1399 = vsel %vm1293, %v1397, %v1398
        %v1400 = vrot.slane %v1398, 4
        %v1401 = vrot.slane %v228, 5
        %v1402 = vsel %vm1293, %v1400, %v1401
        %v1403 = vrot.slane %v1401, 4
        %v1404 = vrot.slane %v229, 5
        %v1405 = vsel %vm1293, %v1403, %v1404
        %v1406 = vrot.slane %v1404, 4
        %v1407 = vrot.slane %v230, 5
        %v1408 = vsel %vm1293, %v1406, %v1407
        %v1409 = vrot.slane %v1407, 4
        %v1410 = vrot.slane %v231, 5
        %v1411 = vsel %vm1293, %v1409, %v1410
        %v1412 = vrot.slane %v1410, 4
        %v1413 = vrot.slane %v232, 5
        %v1414 = vsel %vm1293, %v1412, %v1413
        %v1415 = vrot.slane %v1413, 4
        %v1416 = vrot.slane %v233, 5
        %v1417 = vsel %vm1293, %v1415, %v1416
        %v1418 = vrot.slane %v1416, 4
        %v1419 = vrot.slane %v234, 5
        %v1420 = vsel %vm1293, %v1418, %v1419
        %v1421 = vrot.slane %v1419, 4
        %v1422 = vrot.slane %v235, 5
        %v1423 = vsel %vm1293, %v1421, %v1422
        %v1424 = vrot.slane %v1422, 4
        %v1425 = vrot.slane %v236, 5
        %v1426 = vsel %vm1293, %v1424, %v1425
        %v1427 = vrot.slane %v1425, 4
        %v1428 = vrot.slane %v237, 5
        %v1429 = vsel %vm1293, %v1427, %v1428
        %v1430 = vrot.slane %v1428, 4
        %v1431 = vrot.slane %v238, 5
        %v1432 = vsel %vm1293, %v1430, %v1431
        %v1433 = vrot.slane %v1431, 4
        %v1434 = vrot.slane %v239, 5
        %v1435 = vsel %vm1293, %v1433, %v1434
        %v1436 = vrot.slane %v1434, 4
        %v1437 = vrot.slane %v240, 5
        %v1438 = vsel %vm1293, %v1436, %v1437
        %v1439 = vrot.slane %v1437, 4
        %v1440 = vrot.slane %v241, 5
        %v1441 = vsel %vm1293, %v1439, %v1440
        %v1442 = vrot.slane %v1440, 4
        %v1443 = vrot.slane %v242, 5
        %v1444 = vsel %vm1293, %v1442, %v1443
        %v1445 = vrot.slane %v1443, 4
        %v1446 = vrot.slane %v243, 5
        %v1447 = vsel %vm1293, %v1445, %v1446
        %v1448 = vrot.slane %v1446, 4
        %v1449 = vrot.slane %v244, 5
        %v1450 = vsel %vm1293, %v1448, %v1449
        %v1451 = vrot.slane %v1449, 4
        %v1452 = vrot.slane %v245, 5
        %v1453 = vsel %vm1293, %v1451, %v1452
        %v1454 = vrot.slane %v1452, 4
        %v1455 = vrot.slane %v246, 5
        %v1456 = vsel %vm1293, %v1454, %v1455
        %v1457 = vrot.slane %v1455, 4
        %v1458 = vrot.slane %v247, 5
        %v1459 = vsel %vm1293, %v1457, %v1458
        %v1460 = vrot.slane %v1458, 4
        %v1461 = vrot.slane %v248, 5
        %v1462 = vsel %vm1293, %v1460, %v1461
        %v1463 = vrot.slane %v1461, 4
        %v1464 = vrot.slane %v249, 5
        %v1465 = vsel %vm1293, %v1463, %v1464
        %v1466 = vrot.slane %v1464, 4
        %v1467 = vrot.slane %v250, 5
        %v1468 = vsel %vm1293, %v1466, %v1467
        %v1469 = vrot.slane %v1467, 4
        %v1470 = vrot.slane %v251, 5
        %v1471 = vsel %vm1293, %v1469, %v1470
        %v1472 = vrot.slane %v1470, 4
        %v1473 = vrot.slane %v252, 5
        %v1474 = vsel %vm1293, %v1472, %v1473
        %v1475 = vrot.slane %v1473, 4
        %v1476 = vrot.slane %v253, 5
        %v1477 = vsel %vm1293, %v1475, %v1476
        %v1478 = vrot.slane %v1476, 4
        %v1479 = vrot.slane %v254, 5
        %v1480 = vsel %vm1293, %v1478, %v1479
        %v1481 = vrot.slane %v1479, 4
        %v1482 = vrot.slane %v255, 5
        %v1483 = vsel %vm1293, %v1481, %v1482
        %v1484 = vrot.slane %v1482, 4
        %v1485 = vrot.slane %v256, 5
        %v1486 = vsel %vm1293, %v1484, %v1485
        %1487 = vrot.lane.b32.xlu0 %v1297, 16
        %v1488 = vpop.permute.xlu0 %1487
        %1489 = vrot.lane.b32.xlu0 %v1300, 16
        %v1490 = vpop.permute.xlu0 %1489
        %1491 = vrot.lane.b32.xlu0 %v1303, 16
        %v1492 = vpop.permute.xlu0 %1491
        %1493 = vrot.lane.b32.xlu0 %v1306, 16
        %v1494 = vpop.permute.xlu0 %1493
        %1495 = vrot.lane.b32.xlu0 %v1309, 16
        %v1496 = vpop.permute.xlu0 %1495
        %1497 = vrot.lane.b32.xlu0 %v1312, 16
        %v1498 = vpop.permute.xlu0 %1497
        %1499 = vrot.lane.b32.xlu0 %v1315, 16
        %v1500 = vpop.permute.xlu0 %1499
        %1501 = vrot.lane.b32.xlu0 %v1318, 16
        %v1502 = vpop.permute.xlu0 %1501
        %1503 = vrot.lane.b32.xlu0 %v1321, 16
        %v1504 = vpop.permute.xlu0 %1503
        %1505 = vrot.lane.b32.xlu0 %v1324, 16
        %v1506 = vpop.permute.xlu0 %1505
        %1507 = vrot.lane.b32.xlu0 %v1327, 16
        %v1508 = vpop.permute.xlu0 %1507
        %1509 = vrot.lane.b32.xlu0 %v1330, 16
        %v1510 = vpop.permute.xlu0 %1509
        %1511 = vrot.lane.b32.xlu0 %v1333, 16
        %v1512 = vpop.permute.xlu0 %1511
        %1513 = vrot.lane.b32.xlu0 %v1336, 16
        %v1514 = vpop.permute.xlu0 %1513
        %1515 = vrot.lane.b32.xlu0 %v1339, 16
        %v1516 = vpop.permute.xlu0 %1515
        %1517 = vrot.lane.b32.xlu0 %v1342, 16
        %v1518 = vpop.permute.xlu0 %1517
        %1519 = vrot.lane.b32.xlu0 %v1345, 16
        %v1520 = vpop.permute.xlu0 %1519
        %1521 = vrot.lane.b32.xlu0 %v1348, 16
        %v1522 = vpop.permute.xlu0 %1521
        %1523 = vrot.lane.b32.xlu0 %v1351, 16
        %v1524 = vpop.permute.xlu0 %1523
        %1525 = vrot.lane.b32.xlu0 %v1354, 16
        %v1526 = vpop.permute.xlu0 %1525
        %1527 = vrot.lane.b32.xlu0 %v1357, 16
        %v1528 = vpop.permute.xlu0 %1527
        %1529 = vrot.lane.b32.xlu0 %v1360, 16
        %v1530 = vpop.permute.xlu0 %1529
        %1531 = vrot.lane.b32.xlu0 %v1363, 16
        %v1532 = vpop.permute.xlu0 %1531
        %1533 = vrot.lane.b32.xlu0 %v1366, 16
        %v1534 = vpop.permute.xlu0 %1533
        %1535 = vrot.lane.b32.xlu0 %v1369, 16
        %v1536 = vpop.permute.xlu0 %1535
        %1537 = vrot.lane.b32.xlu0 %v1372, 16
        %v1538 = vpop.permute.xlu0 %1537
        %1539 = vrot.lane.b32.xlu0 %v1375, 16
        %v1540 = vpop.permute.xlu0 %1539
        %1541 = vrot.lane.b32.xlu0 %v1378, 16
        %v1542 = vpop.permute.xlu0 %1541
        %1543 = vrot.lane.b32.xlu0 %v1381, 16
        %v1544 = vpop.permute.xlu0 %1543
        %1545 = vrot.lane.b32.xlu0 %v1384, 16
        %v1546 = vpop.permute.xlu0 %1545
        %1547 = vrot.lane.b32.xlu0 %v1387, 16
        %v1548 = vpop.permute.xlu0 %1547
        %1549 = vrot.lane.b32.xlu0 %v1390, 16
        %v1550 = vpop.permute.xlu0 %1549
        %1551 = vrot.lane.b32.xlu0 %v1393, 16
        %v1552 = vpop.permute.xlu0 %1551
        %1553 = vrot.lane.b32.xlu0 %v1396, 16
        %v1554 = vpop.permute.xlu0 %1553
        %1555 = vrot.lane.b32.xlu0 %v1399, 16
        %v1556 = vpop.permute.xlu0 %1555
        %1557 = vrot.lane.b32.xlu0 %v1402, 16
        %v1558 = vpop.permute.xlu0 %1557
        %1559 = vrot.lane.b32.xlu0 %v1405, 16
        %v1560 = vpop.permute.xlu0 %1559
        %1561 = vrot.lane.b32.xlu0 %v1408, 16
        %v1562 = vpop.permute.xlu0 %1561
        %1563 = vrot.lane.b32.xlu0 %v1411, 16
        %v1564 = vpop.permute.xlu0 %1563
        %1565 = vrot.lane.b32.xlu0 %v1414, 16
        %v1566 = vpop.permute.xlu0 %1565
        %1567 = vrot.lane.b32.xlu0 %v1417, 16
        %v1568 = vpop.permute.xlu0 %1567
        %1569 = vrot.lane.b32.xlu0 %v1420, 16
        %v1570 = vpop.permute.xlu0 %1569
        %1571 = vrot.lane.b32.xlu0 %v1423, 16
        %v1572 = vpop.permute.xlu0 %1571
        %1573 = vrot.lane.b32.xlu0 %v1426, 16
        %v1574 = vpop.permute.xlu0 %1573
        %1575 = vrot.lane.b32.xlu0 %v1429, 16
        %v1576 = vpop.permute.xlu0 %1575
        %1577 = vrot.lane.b32.xlu0 %v1432, 16
        %v1578 = vpop.permute.xlu0 %1577
        %1579 = vrot.lane.b32.xlu0 %v1435, 16
        %v1580 = vpop.permute.xlu0 %1579
        %1581 = vrot.lane.b32.xlu0 %v1438, 16
        %v1582 = vpop.permute.xlu0 %1581
        %1583 = vrot.lane.b32.xlu0 %v1441, 16
        %v1584 = vpop.permute.xlu0 %1583
        %1585 = vrot.lane.b32.xlu0 %v1444, 16
        %v1586 = vpop.permute.xlu0 %1585
        %1587 = vrot.lane.b32.xlu0 %v1447, 16
        %v1588 = vpop.permute.xlu0 %1587
        %1589 = vrot.lane.b32.xlu0 %v1450, 16
        %v1590 = vpop.permute.xlu0 %1589
        %1591 = vrot.lane.b32.xlu0 %v1453, 16
        %v1592 = vpop.permute.xlu0 %1591
        %1593 = vrot.lane.b32.xlu0 %v1456, 16
        %v1594 = vpop.permute.xlu0 %1593
        %1595 = vrot.lane.b32.xlu0 %v1459, 16
        %v1596 = vpop.permute.xlu0 %1595
        %1597 = vrot.lane.b32.xlu0 %v1462, 16
        %v1598 = vpop.permute.xlu0 %1597
        %1599 = vrot.lane.b32.xlu0 %v1465, 16
        %v1600 = vpop.permute.xlu0 %1599
        %1601 = vrot.lane.b32.xlu0 %v1468, 16
        %v1602 = vpop.permute.xlu0 %1601
        %1603 = vrot.lane.b32.xlu0 %v1471, 16
        %v1604 = vpop.permute.xlu0 %1603
        %1605 = vrot.lane.b32.xlu0 %v1474, 16
        %v1606 = vpop.permute.xlu0 %1605
        %1607 = vrot.lane.b32.xlu0 %v1477, 16
        %v1608 = vpop.permute.xlu0 %1607
        %1609 = vrot.lane.b32.xlu0 %v1480, 16
        %v1610 = vpop.permute.xlu0 %1609
        %1611 = vrot.lane.b32.xlu0 %v1483, 16
        %v1612 = vpop.permute.xlu0 %1611
        %1613 = vrot.lane.b32.xlu0 %v1486, 16
        %v1614 = vpop.permute.xlu0 %1613
        %vm1679 = vcmask 191616
        %1680 = vst.msk [vmem:[#allocation2] sm:$0xf] %vm1679, %v1488
        %1681 = vst.msk [vmem:[#allocation2 + $0x4] sm:$0xf] %vm1679, %v1490
        %1682 = vst.msk [vmem:[#allocation2 + $0x8] sm:$0xf] %vm1679, %v1492
        %1683 = vst.msk [vmem:[#allocation2 + $0xc] sm:$0xf] %vm1679, %v1494
        %1684 = vst.msk [vmem:[#allocation2 + $0x10] sm:$0xf] %vm1679, %v1496
        %1685 = vst.msk [vmem:[#allocation2 + $0x14] sm:$0xf] %vm1679, %v1498
        %1686 = vst.msk [vmem:[#allocation2 + $0x18] sm:$0xf] %vm1679, %v1500
        %1687 = vst.msk [vmem:[#allocation2 + $0x1c] sm:$0xf] %vm1679, %v1502
        %1688 = vst.msk [vmem:[#allocation2 + $0x20] sm:$0xf] %vm1679, %v1504
        %1689 = vst.msk [vmem:[#allocation2 + $0x24] sm:$0xf] %vm1679, %v1506
        %1690 = vst.msk [vmem:[#allocation2 + $0x28] sm:$0xf] %vm1679, %v1508
        %1691 = vst.msk [vmem:[#allocation2 + $0x2c] sm:$0xf] %vm1679, %v1510
        %1692 = vst.msk [vmem:[#allocation2 + $0x30] sm:$0xf] %vm1679, %v1512
        %1693 = vst.msk [vmem:[#allocation2 + $0x34] sm:$0xf] %vm1679, %v1514
        %1694 = vst.msk [vmem:[#allocation2 + $0x38] sm:$0xf] %vm1679, %v1516
        %1695 = vst.msk [vmem:[#allocation2 + $0x3c] sm:$0xf] %vm1679, %v1518
        %1696 = vst.msk [vmem:[#allocation2 + $0x40] sm:$0xf] %vm1679, %v1520
        %1697 = vst.msk [vmem:[#allocation2 + $0x44] sm:$0xf] %vm1679, %v1522
        %1698 = vst.msk [vmem:[#allocation2 + $0x48] sm:$0xf] %vm1679, %v1524
        %1699 = vst.msk [vmem:[#allocation2 + $0x4c] sm:$0xf] %vm1679, %v1526
        %1700 = vst.msk [vmem:[#allocation2 + $0x50] sm:$0xf] %vm1679, %v1528
        %1701 = vst.msk [vmem:[#allocation2 + $0x54] sm:$0xf] %vm1679, %v1530
        %1702 = vst.msk [vmem:[#allocation2 + $0x58] sm:$0xf] %vm1679, %v1532
        %1703 = vst.msk [vmem:[#allocation2 + $0x5c] sm:$0xf] %vm1679, %v1534
        %1704 = vst.msk [vmem:[#allocation2 + $0x60] sm:$0xf] %vm1679, %v1536
        %1705 = vst.msk [vmem:[#allocation2 + $0x64] sm:$0xf] %vm1679, %v1538
        %1706 = vst.msk [vmem:[#allocation2 + $0x68] sm:$0xf] %vm1679, %v1540
        %1707 = vst.msk [vmem:[#allocation2 + $0x6c] sm:$0xf] %vm1679, %v1542
        %1708 = vst.msk [vmem:[#allocation2 + $0x70] sm:$0xf] %vm1679, %v1544
        %1709 = vst.msk [vmem:[#allocation2 + $0x74] sm:$0xf] %vm1679, %v1546
        %1710 = vst.msk [vmem:[#allocation2 + $0x78] sm:$0xf] %vm1679, %v1548
        %1711 = vst.msk [vmem:[#allocation2 + $0x7c] sm:$0xf] %vm1679, %v1550
        %1712 = vst.msk [vmem:[#allocation2 + $0x80] sm:$0xf] %vm1679, %v1552
        %1713 = vst.msk [vmem:[#allocation2 + $0x84] sm:$0xf] %vm1679, %v1554
        %1714 = vst.msk [vmem:[#allocation2 + $0x88] sm:$0xf] %vm1679, %v1556
        %1715 = vst.msk [vmem:[#allocation2 + $0x8c] sm:$0xf] %vm1679, %v1558
        %1716 = vst.msk [vmem:[#allocation2 + $0x90] sm:$0xf] %vm1679, %v1560
        %1717 = vst.msk [vmem:[#allocation2 + $0x94] sm:$0xf] %vm1679, %v1562
        %1718 = vst.msk [vmem:[#allocation2 + $0x98] sm:$0xf] %vm1679, %v1564
        %1719 = vst.msk [vmem:[#allocation2 + $0x9c] sm:$0xf] %vm1679, %v1566
        %1720 = vst.msk [vmem:[#allocation2 + $0xa0] sm:$0xf] %vm1679, %v1568
        %1721 = vst.msk [vmem:[#allocation2 + $0xa4] sm:$0xf] %vm1679, %v1570
        %1722 = vst.msk [vmem:[#allocation2 + $0xa8] sm:$0xf] %vm1679, %v1572
        %1723 = vst.msk [vmem:[#allocation2 + $0xac] sm:$0xf] %vm1679, %v1574
        %1724 = vst.msk [vmem:[#allocation2 + $0xb0] sm:$0xf] %vm1679, %v1576
        %1725 = vst.msk [vmem:[#allocation2 + $0xb4] sm:$0xf] %vm1679, %v1578
        %1726 = vst.msk [vmem:[#allocation2 + $0xb8] sm:$0xf] %vm1679, %v1580
        %1727 = vst.msk [vmem:[#allocation2 + $0xbc] sm:$0xf] %vm1679, %v1582
        %1728 = vst.msk [vmem:[#allocation2 + $0xc0] sm:$0xf] %vm1679, %v1584
        %1729 = vst.msk [vmem:[#allocation2 + $0xc4] sm:$0xf] %vm1679, %v1586
        %1730 = vst.msk [vmem:[#allocation2 + $0xc8] sm:$0xf] %vm1679, %v1588
        %1731 = vst.msk [vmem:[#allocation2 + $0xcc] sm:$0xf] %vm1679, %v1590
        %1732 = vst.msk [vmem:[#allocation2 + $0xd0] sm:$0xf] %vm1679, %v1592
        %1733 = vst.msk [vmem:[#allocation2 + $0xd4] sm:$0xf] %vm1679, %v1594
        %1734 = vst.msk [vmem:[#allocation2 + $0xd8] sm:$0xf] %vm1679, %v1596
        %1735 = vst.msk [vmem:[#allocation2 + $0xdc] sm:$0xf] %vm1679, %v1598
        %1736 = vst.msk [vmem:[#allocation2 + $0xe0] sm:$0xf] %vm1679, %v1600
        %1737 = vst.msk [vmem:[#allocation2 + $0xe4] sm:$0xf] %vm1679, %v1602
        %1738 = vst.msk [vmem:[#allocation2 + $0xe8] sm:$0xf] %vm1679, %v1604
        %1739 = vst.msk [vmem:[#allocation2 + $0xec] sm:$0xf] %vm1679, %v1606
        %1740 = vst.msk [vmem:[#allocation2 + $0xf0] sm:$0xf] %vm1679, %v1608
        %1741 = vst.msk [vmem:[#allocation2 + $0xf4] sm:$0xf] %vm1679, %v1610
        %1742 = vst.msk [vmem:[#allocation2 + $0xf8] sm:$0xf] %vm1679, %v1612
        %1743 = vst.msk [vmem:[#allocation2 + $0xfc] sm:$0xf] %vm1679, %v1614
        %v1744 = vld [vmem:[%s188 + $0x10] sm:$0xf]
        %v1745 = vld [vmem:[%s188 + $0x14] sm:$0xf]
        %v1746 = vld [vmem:[%s188 + $0x18] sm:$0xf]
        %v1747 = vld [vmem:[%s188 + $0x1c] sm:$0xf]
        %v1748 = vld [vmem:[%s188 + $0x20] sm:$0xf]
        %v1749 = vld [vmem:[%s188 + $0x24] sm:$0xf]
        %v1750 = vld [vmem:[%s188 + $0x28] sm:$0xf]
        %v1751 = vld [vmem:[%s188 + $0x2c] sm:$0xf]
        %v1752 = vld [vmem:[%s188 + $0x30] sm:$0xf]
        %v1753 = vld [vmem:[%s188 + $0x34] sm:$0xf]
        %v1754 = vld [vmem:[%s188 + $0x38] sm:$0xf]
        %v1755 = vld [vmem:[%s188 + $0x3c] sm:$0xf]
        %v1756 = vld [vmem:[%s188 + $0x40] sm:$0xf]
        %v1757 = vld [vmem:[%s188 + $0x44] sm:$0xf]
        %v1758 = vld [vmem:[%s188 + $0x48] sm:$0xf]
        %v1759 = vld [vmem:[%s188 + $0x4c] sm:$0xf]
        %v1760 = vld [vmem:[%s188 + $0x50] sm:$0xf]
        %v1761 = vld [vmem:[%s188 + $0x54] sm:$0xf]
        %v1762 = vld [vmem:[%s188 + $0x58] sm:$0xf]
        %v1763 = vld [vmem:[%s188 + $0x5c] sm:$0xf]
        %v1764 = vld [vmem:[%s188 + $0x60] sm:$0xf]
        %v1765 = vld [vmem:[%s188 + $0x64] sm:$0xf]
        %v1766 = vld [vmem:[%s188 + $0x68] sm:$0xf]
        %v1767 = vld [vmem:[%s188 + $0x6c] sm:$0xf]
        %v1768 = vld [vmem:[%s188 + $0x70] sm:$0xf]
        %v1769 = vld [vmem:[%s188 + $0x74] sm:$0xf]
        %v1770 = vld [vmem:[%s188 + $0x78] sm:$0xf]
        %v1771 = vld [vmem:[%s188 + $0x7c] sm:$0xf]
        %v1772 = vld [vmem:[%s188 + $0x80] sm:$0xf]
        %v1773 = vld [vmem:[%s188 + $0x84] sm:$0xf]
        %v1774 = vld [vmem:[%s188 + $0x88] sm:$0xf]
        %v1775 = vld [vmem:[%s188 + $0x8c] sm:$0xf]
        %v1776 = vld [vmem:[%s188 + $0x90] sm:$0xf]
        %v1777 = vld [vmem:[%s188 + $0x94] sm:$0xf]
        %v1778 = vld [vmem:[%s188 + $0x98] sm:$0xf]
        %v1779 = vld [vmem:[%s188 + $0x9c] sm:$0xf]
        %v1780 = vld [vmem:[%s188 + $0xa0] sm:$0xf]
        %v1781 = vld [vmem:[%s188 + $0xa4] sm:$0xf]
        %v1782 = vld [vmem:[%s188 + $0xa8] sm:$0xf]
        %v1783 = vld [vmem:[%s188 + $0xac] sm:$0xf]
        %v1784 = vld [vmem:[%s188 + $0xb0] sm:$0xf]
        %v1785 = vld [vmem:[%s188 + $0xb4] sm:$0xf]
        %v1786 = vld [vmem:[%s188 + $0xb8] sm:$0xf]
        %v1787 = vld [vmem:[%s188 + $0xbc] sm:$0xf]
        %v1788 = vld [vmem:[%s188 + $0xc0] sm:$0xf]
        %v1789 = vld [vmem:[%s188 + $0xc4] sm:$0xf]
        %v1790 = vld [vmem:[%s188 + $0xc8] sm:$0xf]
        %v1791 = vld [vmem:[%s188 + $0xcc] sm:$0xf]
        %v1792 = vld [vmem:[%s188 + $0xd0] sm:$0xf]
        %v1793 = vld [vmem:[%s188 + $0xd4] sm:$0xf]
        %v1794 = vld [vmem:[%s188 + $0xd8] sm:$0xf]
        %v1795 = vld [vmem:[%s188 + $0xdc] sm:$0xf]
        %v1796 = vld [vmem:[%s188 + $0xe0] sm:$0xf]
        %v1797 = vld [vmem:[%s188 + $0xe4] sm:$0xf]
        %v1798 = vld [vmem:[%s188 + $0xe8] sm:$0xf]
        %v1799 = vld [vmem:[%s188 + $0xec] sm:$0xf]
        %v1800 = vld [vmem:[%s188 + $0xf0] sm:$0xf]
        %v1801 = vld [vmem:[%s188 + $0xf4] sm:$0xf]
        %v1802 = vld [vmem:[%s188 + $0xf8] sm:$0xf]
        %v1803 = vld [vmem:[%s188 + $0xfc] sm:$0xf]
        %v1804 = vld [vmem:[%s188 + $0x100] sm:$0xf]
        %v1805 = vld [vmem:[%s188 + $0x104] sm:$0xf]
        %v1806 = vld [vmem:[%s188 + $0x108] sm:$0xf]
        %v1807 = vld [vmem:[%s188 + $0x10c] sm:$0xf]
        %v1808 = vld [vmem:[%s188 + $0x110] sm:$0xf]
        %1873 = vrot.lane.b32.xlu0 %v1744, 24
        %v1874 = vpop.permute.xlu0 %1873
        %1875 = vrot.lane.b32.xlu0 %v1745, 24
        %v1876 = vpop.permute.xlu0 %1875
        %1877 = vrot.lane.b32.xlu0 %v1746, 24
        %v1878 = vpop.permute.xlu0 %1877
        %1879 = vrot.lane.b32.xlu0 %v1747, 24
        %v1880 = vpop.permute.xlu0 %1879
        %1881 = vrot.lane.b32.xlu0 %v1748, 24
        %v1882 = vpop.permute.xlu0 %1881
        %1883 = vrot.lane.b32.xlu0 %v1749, 24
        %v1884 = vpop.permute.xlu0 %1883
        %1885 = vrot.lane.b32.xlu0 %v1750, 24
        %v1886 = vpop.permute.xlu0 %1885
        %1887 = vrot.lane.b32.xlu0 %v1751, 24
        %v1888 = vpop.permute.xlu0 %1887
        %1889 = vrot.lane.b32.xlu0 %v1752, 24
        %v1890 = vpop.permute.xlu0 %1889
        %1891 = vrot.lane.b32.xlu0 %v1753, 24
        %v1892 = vpop.permute.xlu0 %1891
        %1893 = vrot.lane.b32.xlu0 %v1754, 24
        %v1894 = vpop.permute.xlu0 %1893
        %1895 = vrot.lane.b32.xlu0 %v1755, 24
        %v1896 = vpop.permute.xlu0 %1895
        %1897 = vrot.lane.b32.xlu0 %v1756, 24
        %v1898 = vpop.permute.xlu0 %1897
        %1899 = vrot.lane.b32.xlu0 %v1757, 24
        %v1900 = vpop.permute.xlu0 %1899
        %1901 = vrot.lane.b32.xlu0 %v1758, 24
        %v1902 = vpop.permute.xlu0 %1901
        %1903 = vrot.lane.b32.xlu0 %v1759, 24
        %v1904 = vpop.permute.xlu0 %1903
        %1905 = vrot.lane.b32.xlu0 %v1760, 24
        %v1906 = vpop.permute.xlu0 %1905
        %1907 = vrot.lane.b32.xlu0 %v1761, 24
        %v1908 = vpop.permute.xlu0 %1907
        %1909 = vrot.lane.b32.xlu0 %v1762, 24
        %v1910 = vpop.permute.xlu0 %1909
        %1911 = vrot.lane.b32.xlu0 %v1763, 24
        %v1912 = vpop.permute.xlu0 %1911
        %1913 = vrot.lane.b32.xlu0 %v1764, 24
        %v1914 = vpop.permute.xlu0 %1913
        %1915 = vrot.lane.b32.xlu0 %v1765, 24
        %v1916 = vpop.permute.xlu0 %1915
        %1917 = vrot.lane.b32.xlu0 %v1766, 24
        %v1918 = vpop.permute.xlu0 %1917
        %1919 = vrot.lane.b32.xlu0 %v1767, 24
        %v1920 = vpop.permute.xlu0 %1919
        %1921 = vrot.lane.b32.xlu0 %v1768, 24
        %v1922 = vpop.permute.xlu0 %1921
        %1923 = vrot.lane.b32.xlu0 %v1769, 24
        %v1924 = vpop.permute.xlu0 %1923
        %1925 = vrot.lane.b32.xlu0 %v1770, 24
        %v1926 = vpop.permute.xlu0 %1925
        %1927 = vrot.lane.b32.xlu0 %v1771, 24
        %v1928 = vpop.permute.xlu0 %1927
        %1929 = vrot.lane.b32.xlu0 %v1772, 24
        %v1930 = vpop.permute.xlu0 %1929
        %1931 = vrot.lane.b32.xlu0 %v1773, 24
        %v1932 = vpop.permute.xlu0 %1931
        %1933 = vrot.lane.b32.xlu0 %v1774, 24
        %v1934 = vpop.permute.xlu0 %1933
        %1935 = vrot.lane.b32.xlu0 %v1775, 24
        %v1936 = vpop.permute.xlu0 %1935
        %1937 = vrot.lane.b32.xlu0 %v1776, 24
        %v1938 = vpop.permute.xlu0 %1937
        %1939 = vrot.lane.b32.xlu0 %v1777, 24
        %v1940 = vpop.permute.xlu0 %1939
        %1941 = vrot.lane.b32.xlu0 %v1778, 24
        %v1942 = vpop.permute.xlu0 %1941
        %1943 = vrot.lane.b32.xlu0 %v1779, 24
        %v1944 = vpop.permute.xlu0 %1943
        %1945 = vrot.lane.b32.xlu0 %v1780, 24
        %v1946 = vpop.permute.xlu0 %1945
        %1947 = vrot.lane.b32.xlu0 %v1781, 24
        %v1948 = vpop.permute.xlu0 %1947
        %1949 = vrot.lane.b32.xlu0 %v1782, 24
        %v1950 = vpop.permute.xlu0 %1949
        %1951 = vrot.lane.b32.xlu0 %v1783, 24
        %v1952 = vpop.permute.xlu0 %1951
        %1953 = vrot.lane.b32.xlu0 %v1784, 24
        %v1954 = vpop.permute.xlu0 %1953
        %1955 = vrot.lane.b32.xlu0 %v1785, 24
        %v1956 = vpop.permute.xlu0 %1955
        %1957 = vrot.lane.b32.xlu0 %v1786, 24
        %v1958 = vpop.permute.xlu0 %1957
        %1959 = vrot.lane.b32.xlu0 %v1787, 24
        %v1960 = vpop.permute.xlu0 %1959
        %1961 = vrot.lane.b32.xlu0 %v1788, 24
        %v1962 = vpop.permute.xlu0 %1961
        %1963 = vrot.lane.b32.xlu0 %v1789, 24
        %v1964 = vpop.permute.xlu0 %1963
        %1965 = vrot.lane.b32.xlu0 %v1790, 24
        %v1966 = vpop.permute.xlu0 %1965
        %1967 = vrot.lane.b32.xlu0 %v1791, 24
        %v1968 = vpop.permute.xlu0 %1967
        %1969 = vrot.lane.b32.xlu0 %v1792, 24
        %v1970 = vpop.permute.xlu0 %1969
        %1971 = vrot.lane.b32.xlu0 %v1793, 24
        %v1972 = vpop.permute.xlu0 %1971
        %1973 = vrot.lane.b32.xlu0 %v1794, 24
        %v1974 = vpop.permute.xlu0 %1973
        %1975 = vrot.lane.b32.xlu0 %v1795, 24
        %v1976 = vpop.permute.xlu0 %1975
        %1977 = vrot.lane.b32.xlu0 %v1796, 24
        %v1978 = vpop.permute.xlu0 %1977
        %1979 = vrot.lane.b32.xlu0 %v1797, 24
        %v1980 = vpop.permute.xlu0 %1979
        %1981 = vrot.lane.b32.xlu0 %v1798, 24
        %v1982 = vpop.permute.xlu0 %1981
        %1983 = vrot.lane.b32.xlu0 %v1799, 24
        %v1984 = vpop.permute.xlu0 %1983
        %1985 = vrot.lane.b32.xlu0 %v1800, 24
        %v1986 = vpop.permute.xlu0 %1985
        %1987 = vrot.lane.b32.xlu0 %v1801, 24
        %v1988 = vpop.permute.xlu0 %1987
        %1989 = vrot.lane.b32.xlu0 %v1802, 24
        %v1990 = vpop.permute.xlu0 %1989
        %1991 = vrot.lane.b32.xlu0 %v1803, 24
        %v1992 = vpop.permute.xlu0 %1991
        %1993 = vrot.lane.b32.xlu0 %v1804, 24
        %v1994 = vpop.permute.xlu0 %1993
        %1995 = vrot.lane.b32.xlu0 %v1805, 24
        %v1996 = vpop.permute.xlu0 %1995
        %1997 = vrot.lane.b32.xlu0 %v1806, 24
        %v1998 = vpop.permute.xlu0 %1997
        %1999 = vrot.lane.b32.xlu0 %v1807, 24
        %v2000 = vpop.permute.xlu0 %1999
        %vm2065 = vcmask 257216
        %2066 = vst.msk [vmem:[#allocation2] sm:$0xf] %vm2065, %v1874
        %2067 = vst.msk [vmem:[#allocation2 + $0x4] sm:$0xf] %vm2065, %v1876
        %2068 = vst.msk [vmem:[#allocation2 + $0x8] sm:$0xf] %vm2065, %v1878
        %2069 = vst.msk [vmem:[#allocation2 + $0xc] sm:$0xf] %vm2065, %v1880
        %2070 = vst.msk [vmem:[#allocation2 + $0x10] sm:$0xf] %vm2065, %v1882
        %2071 = vst.msk [vmem:[#allocation2 + $0x14] sm:$0xf] %vm2065, %v1884
        %2072 = vst.msk [vmem:[#allocation2 + $0x18] sm:$0xf] %vm2065, %v1886
        %2073 = vst.msk [vmem:[#allocation2 + $0x1c] sm:$0xf] %vm2065, %v1888
        %2074 = vst.msk [vmem:[#allocation2 + $0x20] sm:$0xf] %vm2065, %v1890
        %2075 = vst.msk [vmem:[#allocation2 + $0x24] sm:$0xf] %vm2065, %v1892
        %2076 = vst.msk [vmem:[#allocation2 + $0x28] sm:$0xf] %vm2065, %v1894
        %2077 = vst.msk [vmem:[#allocation2 + $0x2c] sm:$0xf] %vm2065, %v1896
        %2078 = vst.msk [vmem:[#allocation2 + $0x30] sm:$0xf] %vm2065, %v1898
        %2079 = vst.msk [vmem:[#allocation2 + $0x34] sm:$0xf] %vm2065, %v1900
        %2080 = vst.msk [vmem:[#allocation2 + $0x38] sm:$0xf] %vm2065, %v1902
        %2081 = vst.msk [vmem:[#allocation2 + $0x3c] sm:$0xf] %vm2065, %v1904
        %2082 = vst.msk [vmem:[#allocation2 + $0x40] sm:$0xf] %vm2065, %v1906
        %2083 = vst.msk [vmem:[#allocation2 + $0x44] sm:$0xf] %vm2065, %v1908
        %2084 = vst.msk [vmem:[#allocation2 + $0x48] sm:$0xf] %vm2065, %v1910
        %2085 = vst.msk [vmem:[#allocation2 + $0x4c] sm:$0xf] %vm2065, %v1912
        %2086 = vst.msk [vmem:[#allocation2 + $0x50] sm:$0xf] %vm2065, %v1914
        %2087 = vst.msk [vmem:[#allocation2 + $0x54] sm:$0xf] %vm2065, %v1916
        %2088 = vst.msk [vmem:[#allocation2 + $0x58] sm:$0xf] %vm2065, %v1918
        %2089 = vst.msk [vmem:[#allocation2 + $0x5c] sm:$0xf] %vm2065, %v1920
        %2090 = vst.msk [vmem:[#allocation2 + $0x60] sm:$0xf] %vm2065, %v1922
        %2091 = vst.msk [vmem:[#allocation2 + $0x64] sm:$0xf] %vm2065, %v1924
        %2092 = vst.msk [vmem:[#allocation2 + $0x68] sm:$0xf] %vm2065, %v1926
        %2093 = vst.msk [vmem:[#allocation2 + $0x6c] sm:$0xf] %vm2065, %v1928
        %2094 = vst.msk [vmem:[#allocation2 + $0x70] sm:$0xf] %vm2065, %v1930
        %2095 = vst.msk [vmem:[#allocation2 + $0x74] sm:$0xf] %vm2065, %v1932
        %2096 = vst.msk [vmem:[#allocation2 + $0x78] sm:$0xf] %vm2065, %v1934
        %2097 = vst.msk [vmem:[#allocation2 + $0x7c] sm:$0xf] %vm2065, %v1936
        %2098 = vst.msk [vmem:[#allocation2 + $0x80] sm:$0xf] %vm2065, %v1938
        %2099 = vst.msk [vmem:[#allocation2 + $0x84] sm:$0xf] %vm2065, %v1940
        %2100 = vst.msk [vmem:[#allocation2 + $0x88] sm:$0xf] %vm2065, %v1942
        %2101 = vst.msk [vmem:[#allocation2 + $0x8c] sm:$0xf] %vm2065, %v1944
        %2102 = vst.msk [vmem:[#allocation2 + $0x90] sm:$0xf] %vm2065, %v1946
        %2103 = vst.msk [vmem:[#allocation2 + $0x94] sm:$0xf] %vm2065, %v1948
        %2104 = vst.msk [vmem:[#allocation2 + $0x98] sm:$0xf] %vm2065, %v1950
        %2105 = vst.msk [vmem:[#allocation2 + $0x9c] sm:$0xf] %vm2065, %v1952
        %2106 = vst.msk [vmem:[#allocation2 + $0xa0] sm:$0xf] %vm2065, %v1954
        %2107 = vst.msk [vmem:[#allocation2 + $0xa4] sm:$0xf] %vm2065, %v1956
        %2108 = vst.msk [vmem:[#allocation2 + $0xa8] sm:$0xf] %vm2065, %v1958
        %2109 = vst.msk [vmem:[#allocation2 + $0xac] sm:$0xf] %vm2065, %v1960
        %2110 = vst.msk [vmem:[#allocation2 + $0xb0] sm:$0xf] %vm2065, %v1962
        %2111 = vst.msk [vmem:[#allocation2 + $0xb4] sm:$0xf] %vm2065, %v1964
        %2112 = vst.msk [vmem:[#allocation2 + $0xb8] sm:$0xf] %vm2065, %v1966
        %2113 = vst.msk [vmem:[#allocation2 + $0xbc] sm:$0xf] %vm2065, %v1968
        %2114 = vst.msk [vmem:[#allocation2 + $0xc0] sm:$0xf] %vm2065, %v1970
        %2115 = vst.msk [vmem:[#allocation2 + $0xc4] sm:$0xf] %vm2065, %v1972
        %2116 = vst.msk [vmem:[#allocation2 + $0xc8] sm:$0xf] %vm2065, %v1974
        %2117 = vst.msk [vmem:[#allocation2 + $0xcc] sm:$0xf] %vm2065, %v1976
        %2118 = vst.msk [vmem:[#allocation2 + $0xd0] sm:$0xf] %vm2065, %v1978
        %2119 = vst.msk [vmem:[#allocation2 + $0xd4] sm:$0xf] %vm2065, %v1980
        %2120 = vst.msk [vmem:[#allocation2 + $0xd8] sm:$0xf] %vm2065, %v1982
        %2121 = vst.msk [vmem:[#allocation2 + $0xdc] sm:$0xf] %vm2065, %v1984
        %2122 = vst.msk [vmem:[#allocation2 + $0xe0] sm:$0xf] %vm2065, %v1986
        %2123 = vst.msk [vmem:[#allocation2 + $0xe4] sm:$0xf] %vm2065, %v1988
        %2124 = vst.msk [vmem:[#allocation2 + $0xe8] sm:$0xf] %vm2065, %v1990
        %2125 = vst.msk [vmem:[#allocation2 + $0xec] sm:$0xf] %vm2065, %v1992
        %2126 = vst.msk [vmem:[#allocation2 + $0xf0] sm:$0xf] %vm2065, %v1994
        %2127 = vst.msk [vmem:[#allocation2 + $0xf4] sm:$0xf] %vm2065, %v1996
        %2128 = vst.msk [vmem:[#allocation2 + $0xf8] sm:$0xf] %vm2065, %v1998
        %2129 = vst.msk [vmem:[#allocation2 + $0xfc] sm:$0xf] %vm2065, %v2000
        %v2131 = vshrl.u32 %v1744, 16
        %v2133 = vrot.slane %v2131, 4
        %v2134 = vshll.u32 %v1744, 16
        %v2136 = vrot.slane %v2134, 5
        %v2137 = vor.u32 %v2133, %v2136
        %v2138 = vrot.slane %v2137, 4
        %v2140 = vshll.u32 %v1745, 16
        %v2142 = vrot.slane %v2140, 5
        %v2143 = vsel %vm324, %v2138, %v2142
        %v2144 = vshrl.u32 %v1745, 16
        %v2146 = vrot.slane %v2144, 4
        %v2147 = vor.u32 %v2146, %v2142
        %v2148 = vrot.slane %v2147, 4
        %v2150 = vshll.u32 %v1746, 16
        %v2152 = vrot.slane %v2150, 5
        %v2153 = vsel %vm324, %v2148, %v2152
        %v2154 = vshrl.u32 %v1746, 16
        %v2156 = vrot.slane %v2154, 4
        %v2157 = vor.u32 %v2156, %v2152
        %v2158 = vrot.slane %v2157, 4
        %v2160 = vshll.u32 %v1747, 16
        %v2162 = vrot.slane %v2160, 5
        %v2163 = vsel %vm324, %v2158, %v2162
        %v2164 = vshrl.u32 %v1747, 16
        %v2166 = vrot.slane %v2164, 4
        %v2167 = vor.u32 %v2166, %v2162
        %v2168 = vrot.slane %v2167, 4
        %v2170 = vshll.u32 %v1748, 16
        %v2172 = vrot.slane %v2170, 5
        %v2173 = vsel %vm324, %v2168, %v2172
        %v2174 = vshrl.u32 %v1748, 16
        %v2176 = vrot.slane %v2174, 4
        %v2177 = vor.u32 %v2176, %v2172
        %v2178 = vrot.slane %v2177, 4
        %v2180 = vshll.u32 %v1749, 16
        %v2182 = vrot.slane %v2180, 5
        %v2183 = vsel %vm324, %v2178, %v2182
        %v2184 = vshrl.u32 %v1749, 16
        %v2186 = vrot.slane %v2184, 4
        %v2187 = vor.u32 %v2186, %v2182
        %v2188 = vrot.slane %v2187, 4
        %v2190 = vshll.u32 %v1750, 16
        %v2192 = vrot.slane %v2190, 5
        %v2193 = vsel %vm324, %v2188, %v2192
        %v2194 = vshrl.u32 %v1750, 16
        %v2196 = vrot.slane %v2194, 4
        %v2197 = vor.u32 %v2196, %v2192
        %v2198 = vrot.slane %v2197, 4
        %v2200 = vshll.u32 %v1751, 16
        %v2202 = vrot.slane %v2200, 5
        %v2203 = vsel %vm324, %v2198, %v2202
        %v2204 = vshrl.u32 %v1751, 16
        %v2206 = vrot.slane %v2204, 4
        %v2207 = vor.u32 %v2206, %v2202
        %v2208 = vrot.slane %v2207, 4
        %v2210 = vshll.u32 %v1752, 16
        %v2212 = vrot.slane %v2210, 5
        %v2213 = vsel %vm324, %v2208, %v2212
        %v2214 = vshrl.u32 %v1752, 16
        %v2216 = vrot.slane %v2214, 4
        %v2217 = vor.u32 %v2216, %v2212
        %v2218 = vrot.slane %v2217, 4
        %v2220 = vshll.u32 %v1753, 16
        %v2222 = vrot.slane %v2220, 5
        %v2223 = vsel %vm324, %v2218, %v2222
        %v2224 = vshrl.u32 %v1753, 16
        %v2226 = vrot.slane %v2224, 4
        %v2227 = vor.u32 %v2226, %v2222
        %v2228 = vrot.slane %v2227, 4
        %v2230 = vshll.u32 %v1754, 16
        %v2232 = vrot.slane %v2230, 5
        %v2233 = vsel %vm324, %v2228, %v2232
        %v2234 = vshrl.u32 %v1754, 16
        %v2236 = vrot.slane %v2234, 4
        %v2237 = vor.u32 %v2236, %v2232
        %v2238 = vrot.slane %v2237, 4
        %v2240 = vshll.u32 %v1755, 16
        %v2242 = vrot.slane %v2240, 5
        %v2243 = vsel %vm324, %v2238, %v2242
        %v2244 = vshrl.u32 %v1755, 16
        %v2246 = vrot.slane %v2244, 4
        %v2247 = vor.u32 %v2246, %v2242
        %v2248 = vrot.slane %v2247, 4
        %v2250 = vshll.u32 %v1756, 16
        %v2252 = vrot.slane %v2250, 5
        %v2253 = vsel %vm324, %v2248, %v2252
        %v2254 = vshrl.u32 %v1756, 16
        %v2256 = vrot.slane %v2254, 4
        %v2257 = vor.u32 %v2256, %v2252
        %v2258 = vrot.slane %v2257, 4
        %v2260 = vshll.u32 %v1757, 16
        %v2262 = vrot.slane %v2260, 5
        %v2263 = vsel %vm324, %v2258, %v2262
        %v2264 = vshrl.u32 %v1757, 16
        %v2266 = vrot.slane %v2264, 4
        %v2267 = vor.u32 %v2266, %v2262
        %v2268 = vrot.slane %v2267, 4
        %v2270 = vshll.u32 %v1758, 16
        %v2272 = vrot.slane %v2270, 5
        %v2273 = vsel %vm324, %v2268, %v2272
        %v2274 = vshrl.u32 %v1758, 16
        %v2276 = vrot.slane %v2274, 4
        %v2277 = vor.u32 %v2276, %v2272
        %v2278 = vrot.slane %v2277, 4
        %v2280 = vshll.u32 %v1759, 16
        %v2282 = vrot.slane %v2280, 5
        %v2283 = vsel %vm324, %v2278, %v2282
        %v2284 = vshrl.u32 %v1759, 16
        %v2286 = vrot.slane %v2284, 4
        %v2287 = vor.u32 %v2286, %v2282
        %v2288 = vrot.slane %v2287, 4
        %v2290 = vshll.u32 %v1760, 16
        %v2292 = vrot.slane %v2290, 5
        %v2293 = vsel %vm324, %v2288, %v2292
        %v2294 = vshrl.u32 %v1760, 16
        %v2296 = vrot.slane %v2294, 4
        %v2297 = vor.u32 %v2296, %v2292
        %v2298 = vrot.slane %v2297, 4
        %v2300 = vshll.u32 %v1761, 16
        %v2302 = vrot.slane %v2300, 5
        %v2303 = vsel %vm324, %v2298, %v2302
        %v2304 = vshrl.u32 %v1761, 16
        %v2306 = vrot.slane %v2304, 4
        %v2307 = vor.u32 %v2306, %v2302
        %v2308 = vrot.slane %v2307, 4
        %v2310 = vshll.u32 %v1762, 16
        %v2312 = vrot.slane %v2310, 5
        %v2313 = vsel %vm324, %v2308, %v2312
        %v2314 = vshrl.u32 %v1762, 16
        %v2316 = vrot.slane %v2314, 4
        %v2317 = vor.u32 %v2316, %v2312
        %v2318 = vrot.slane %v2317, 4
        %v2320 = vshll.u32 %v1763, 16
        %v2322 = vrot.slane %v2320, 5
        %v2323 = vsel %vm324, %v2318, %v2322
        %v2324 = vshrl.u32 %v1763, 16
        %v2326 = vrot.slane %v2324, 4
        %v2327 = vor.u32 %v2326, %v2322
        %v2328 = vrot.slane %v2327, 4
        %v2330 = vshll.u32 %v1764, 16
        %v2332 = vrot.slane %v2330, 5
        %v2333 = vsel %vm324, %v2328, %v2332
        %v2334 = vshrl.u32 %v1764, 16
        %v2336 = vrot.slane %v2334, 4
        %v2337 = vor.u32 %v2336, %v2332
        %v2338 = vrot.slane %v2337, 4
        %v2340 = vshll.u32 %v1765, 16
        %v2342 = vrot.slane %v2340, 5
        %v2343 = vsel %vm324, %v2338, %v2342
        %v2344 = vshrl.u32 %v1765, 16
        %v2346 = vrot.slane %v2344, 4
        %v2347 = vor.u32 %v2346, %v2342
        %v2348 = vrot.slane %v2347, 4
        %v2350 = vshll.u32 %v1766, 16
        %v2352 = vrot.slane %v2350, 5
        %v2353 = vsel %vm324, %v2348, %v2352
        %v2354 = vshrl.u32 %v1766, 16
        %v2356 = vrot.slane %v2354, 4
        %v2357 = vor.u32 %v2356, %v2352
        %v2358 = vrot.slane %v2357, 4
        %v2360 = vshll.u32 %v1767, 16
        %v2362 = vrot.slane %v2360, 5
        %v2363 = vsel %vm324, %v2358, %v2362
        %v2364 = vshrl.u32 %v1767, 16
        %v2366 = vrot.slane %v2364, 4
        %v2367 = vor.u32 %v2366, %v2362
        %v2368 = vrot.slane %v2367, 4
        %v2370 = vshll.u32 %v1768, 16
        %v2372 = vrot.slane %v2370, 5
        %v2373 = vsel %vm324, %v2368, %v2372
        %v2374 = vshrl.u32 %v1768, 16
        %v2376 = vrot.slane %v2374, 4
        %v2377 = vor.u32 %v2376, %v2372
        %v2378 = vrot.slane %v2377, 4
        %v2380 = vshll.u32 %v1769, 16
        %v2382 = vrot.slane %v2380, 5
        %v2383 = vsel %vm324, %v2378, %v2382
        %v2384 = vshrl.u32 %v1769, 16
        %v2386 = vrot.slane %v2384, 4
        %v2387 = vor.u32 %v2386, %v2382
        %v2388 = vrot.slane %v2387, 4
        %v2390 = vshll.u32 %v1770, 16
        %v2392 = vrot.slane %v2390, 5
        %v2393 = vsel %vm324, %v2388, %v2392
        %v2394 = vshrl.u32 %v1770, 16
        %v2396 = vrot.slane %v2394, 4
        %v2397 = vor.u32 %v2396, %v2392
        %v2398 = vrot.slane %v2397, 4
        %v2400 = vshll.u32 %v1771, 16
        %v2402 = vrot.slane %v2400, 5
        %v2403 = vsel %vm324, %v2398, %v2402
        %v2404 = vshrl.u32 %v1771, 16
        %v2406 = vrot.slane %v2404, 4
        %v2407 = vor.u32 %v2406, %v2402
        %v2408 = vrot.slane %v2407, 4
        %v2410 = vshll.u32 %v1772, 16
        %v2412 = vrot.slane %v2410, 5
        %v2413 = vsel %vm324, %v2408, %v2412
        %v2414 = vshrl.u32 %v1772, 16
        %v2416 = vrot.slane %v2414, 4
        %v2417 = vor.u32 %v2416, %v2412
        %v2418 = vrot.slane %v2417, 4
        %v2420 = vshll.u32 %v1773, 16
        %v2422 = vrot.slane %v2420, 5
        %v2423 = vsel %vm324, %v2418, %v2422
        %v2424 = vshrl.u32 %v1773, 16
        %v2426 = vrot.slane %v2424, 4
        %v2427 = vor.u32 %v2426, %v2422
        %v2428 = vrot.slane %v2427, 4
        %v2430 = vshll.u32 %v1774, 16
        %v2432 = vrot.slane %v2430, 5
        %v2433 = vsel %vm324, %v2428, %v2432
        %v2434 = vshrl.u32 %v1774, 16
        %v2436 = vrot.slane %v2434, 4
        %v2437 = vor.u32 %v2436, %v2432
        %v2438 = vrot.slane %v2437, 4
        %v2440 = vshll.u32 %v1775, 16
        %v2442 = vrot.slane %v2440, 5
        %v2443 = vsel %vm324, %v2438, %v2442
        %v2444 = vshrl.u32 %v1775, 16
        %v2446 = vrot.slane %v2444, 4
        %v2447 = vor.u32 %v2446, %v2442
        %v2448 = vrot.slane %v2447, 4
        %v2450 = vshll.u32 %v1776, 16
        %v2452 = vrot.slane %v2450, 5
        %v2453 = vsel %vm324, %v2448, %v2452
        %v2454 = vshrl.u32 %v1776, 16
        %v2456 = vrot.slane %v2454, 4
        %v2457 = vor.u32 %v2456, %v2452
        %v2458 = vrot.slane %v2457, 4
        %v2460 = vshll.u32 %v1777, 16
        %v2462 = vrot.slane %v2460, 5
        %v2463 = vsel %vm324, %v2458, %v2462
        %v2464 = vshrl.u32 %v1777, 16
        %v2466 = vrot.slane %v2464, 4
        %v2467 = vor.u32 %v2466, %v2462
        %v2468 = vrot.slane %v2467, 4
        %v2470 = vshll.u32 %v1778, 16
        %v2472 = vrot.slane %v2470, 5
        %v2473 = vsel %vm324, %v2468, %v2472
        %v2474 = vshrl.u32 %v1778, 16
        %v2476 = vrot.slane %v2474, 4
        %v2477 = vor.u32 %v2476, %v2472
        %v2478 = vrot.slane %v2477, 4
        %v2480 = vshll.u32 %v1779, 16
        %v2482 = vrot.slane %v2480, 5
        %v2483 = vsel %vm324, %v2478, %v2482
        %v2484 = vshrl.u32 %v1779, 16
        %v2486 = vrot.slane %v2484, 4
        %v2487 = vor.u32 %v2486, %v2482
        %v2488 = vrot.slane %v2487, 4
        %v2490 = vshll.u32 %v1780, 16
        %v2492 = vrot.slane %v2490, 5
        %v2493 = vsel %vm324, %v2488, %v2492
        %v2494 = vshrl.u32 %v1780, 16
        %v2496 = vrot.slane %v2494, 4
        %v2497 = vor.u32 %v2496, %v2492
        %v2498 = vrot.slane %v2497, 4
        %v2500 = vshll.u32 %v1781, 16
        %v2502 = vrot.slane %v2500, 5
        %v2503 = vsel %vm324, %v2498, %v2502
        %v2504 = vshrl.u32 %v1781, 16
        %v2506 = vrot.slane %v2504, 4
        %v2507 = vor.u32 %v2506, %v2502
        %v2508 = vrot.slane %v2507, 4
        %v2510 = vshll.u32 %v1782, 16
        %v2512 = vrot.slane %v2510, 5
        %v2513 = vsel %vm324, %v2508, %v2512
        %v2514 = vshrl.u32 %v1782, 16
        %v2516 = vrot.slane %v2514, 4
        %v2517 = vor.u32 %v2516, %v2512
        %v2518 = vrot.slane %v2517, 4
        %v2520 = vshll.u32 %v1783, 16
        %v2522 = vrot.slane %v2520, 5
        %v2523 = vsel %vm324, %v2518, %v2522
        %v2524 = vshrl.u32 %v1783, 16
        %v2526 = vrot.slane %v2524, 4
        %v2527 = vor.u32 %v2526, %v2522
        %v2528 = vrot.slane %v2527, 4
        %v2530 = vshll.u32 %v1784, 16
        %v2532 = vrot.slane %v2530, 5
        %v2533 = vsel %vm324, %v2528, %v2532
        %v2534 = vshrl.u32 %v1784, 16
        %v2536 = vrot.slane %v2534, 4
        %v2537 = vor.u32 %v2536, %v2532
        %v2538 = vrot.slane %v2537, 4
        %v2540 = vshll.u32 %v1785, 16
        %v2542 = vrot.slane %v2540, 5
        %v2543 = vsel %vm324, %v2538, %v2542
        %v2544 = vshrl.u32 %v1785, 16
        %v2546 = vrot.slane %v2544, 4
        %v2547 = vor.u32 %v2546, %v2542
        %v2548 = vrot.slane %v2547, 4
        %v2550 = vshll.u32 %v1786, 16
        %v2552 = vrot.slane %v2550, 5
        %v2553 = vsel %vm324, %v2548, %v2552
        %v2554 = vshrl.u32 %v1786, 16
        %v2556 = vrot.slane %v2554, 4
        %v2557 = vor.u32 %v2556, %v2552
        %v2558 = vrot.slane %v2557, 4
        %v2560 = vshll.u32 %v1787, 16
        %v2562 = vrot.slane %v2560, 5
        %v2563 = vsel %vm324, %v2558, %v2562
        %v2564 = vshrl.u32 %v1787, 16
        %v2566 = vrot.slane %v2564, 4
        %v2567 = vor.u32 %v2566, %v2562
        %v2568 = vrot.slane %v2567, 4
        %v2570 = vshll.u32 %v1788, 16
        %v2572 = vrot.slane %v2570, 5
        %v2573 = vsel %vm324, %v2568, %v2572
        %v2574 = vshrl.u32 %v1788, 16
        %v2576 = vrot.slane %v2574, 4
        %v2577 = vor.u32 %v2576, %v2572
        %v2578 = vrot.slane %v2577, 4
        %v2580 = vshll.u32 %v1789, 16
        %v2582 = vrot.slane %v2580, 5
        %v2583 = vsel %vm324, %v2578, %v2582
        %v2584 = vshrl.u32 %v1789, 16
        %v2586 = vrot.slane %v2584, 4
        %v2587 = vor.u32 %v2586, %v2582
        %v2588 = vrot.slane %v2587, 4
        %v2590 = vshll.u32 %v1790, 16
        %v2592 = vrot.slane %v2590, 5
        %v2593 = vsel %vm324, %v2588, %v2592
        %v2594 = vshrl.u32 %v1790, 16
        %v2596 = vrot.slane %v2594, 4
        %v2597 = vor.u32 %v2596, %v2592
        %v2598 = vrot.slane %v2597, 4
        %v2600 = vshll.u32 %v1791, 16
        %v2602 = vrot.slane %v2600, 5
        %v2603 = vsel %vm324, %v2598, %v2602
        %v2604 = vshrl.u32 %v1791, 16
        %v2606 = vrot.slane %v2604, 4
        %v2607 = vor.u32 %v2606, %v2602
        %v2608 = vrot.slane %v2607, 4
        %v2610 = vshll.u32 %v1792, 16
        %v2612 = vrot.slane %v2610, 5
        %v2613 = vsel %vm324, %v2608, %v2612
        %v2614 = vshrl.u32 %v1792, 16
        %v2616 = vrot.slane %v2614, 4
        %v2617 = vor.u32 %v2616, %v2612
        %v2618 = vrot.slane %v2617, 4
        %v2620 = vshll.u32 %v1793, 16
        %v2622 = vrot.slane %v2620, 5
        %v2623 = vsel %vm324, %v2618, %v2622
        %v2624 = vshrl.u32 %v1793, 16
        %v2626 = vrot.slane %v2624, 4
        %v2627 = vor.u32 %v2626, %v2622
        %v2628 = vrot.slane %v2627, 4
        %v2630 = vshll.u32 %v1794, 16
        %v2632 = vrot.slane %v2630, 5
        %v2633 = vsel %vm324, %v2628, %v2632
        %v2634 = vshrl.u32 %v1794, 16
        %v2636 = vrot.slane %v2634, 4
        %v2637 = vor.u32 %v2636, %v2632
        %v2638 = vrot.slane %v2637, 4
        %v2640 = vshll.u32 %v1795, 16
        %v2642 = vrot.slane %v2640, 5
        %v2643 = vsel %vm324, %v2638, %v2642
        %v2644 = vshrl.u32 %v1795, 16
        %v2646 = vrot.slane %v2644, 4
        %v2647 = vor.u32 %v2646, %v2642
        %v2648 = vrot.slane %v2647, 4
        %v2650 = vshll.u32 %v1796, 16
        %v2652 = vrot.slane %v2650, 5
        %v2653 = vsel %vm324, %v2648, %v2652
        %v2654 = vshrl.u32 %v1796, 16
        %v2656 = vrot.slane %v2654, 4
        %v2657 = vor.u32 %v2656, %v2652
        %v2658 = vrot.slane %v2657, 4
        %v2660 = vshll.u32 %v1797, 16
        %v2662 = vrot.slane %v2660, 5
        %v2663 = vsel %vm324, %v2658, %v2662
        %v2664 = vshrl.u32 %v1797, 16
        %v2666 = vrot.slane %v2664, 4
        %v2667 = vor.u32 %v2666, %v2662
        %v2668 = vrot.slane %v2667, 4
        %v2670 = vshll.u32 %v1798, 16
        %v2672 = vrot.slane %v2670, 5
        %v2673 = vsel %vm324, %v2668, %v2672
        %v2674 = vshrl.u32 %v1798, 16
        %v2676 = vrot.slane %v2674, 4
        %v2677 = vor.u32 %v2676, %v2672
        %v2678 = vrot.slane %v2677, 4
        %v2680 = vshll.u32 %v1799, 16
        %v2682 = vrot.slane %v2680, 5
        %v2683 = vsel %vm324, %v2678, %v2682
        %v2684 = vshrl.u32 %v1799, 16
        %v2686 = vrot.slane %v2684, 4
        %v2687 = vor.u32 %v2686, %v2682
        %v2688 = vrot.slane %v2687, 4
        %v2690 = vshll.u32 %v1800, 16
        %v2692 = vrot.slane %v2690, 5
        %v2693 = vsel %vm324, %v2688, %v2692
        %v2694 = vshrl.u32 %v1800, 16
        %v2696 = vrot.slane %v2694, 4
        %v2697 = vor.u32 %v2696, %v2692
        %v2698 = vrot.slane %v2697, 4
        %v2700 = vshll.u32 %v1801, 16
        %v2702 = vrot.slane %v2700, 5
        %v2703 = vsel %vm324, %v2698, %v2702
        %v2704 = vshrl.u32 %v1801, 16
        %v2706 = vrot.slane %v2704, 4
        %v2707 = vor.u32 %v2706, %v2702
        %v2708 = vrot.slane %v2707, 4
        %v2710 = vshll.u32 %v1802, 16
        %v2712 = vrot.slane %v2710, 5
        %v2713 = vsel %vm324, %v2708, %v2712
        %v2714 = vshrl.u32 %v1802, 16
        %v2716 = vrot.slane %v2714, 4
        %v2717 = vor.u32 %v2716, %v2712
        %v2718 = vrot.slane %v2717, 4
        %v2720 = vshll.u32 %v1803, 16
        %v2722 = vrot.slane %v2720, 5
        %v2723 = vsel %vm324, %v2718, %v2722
        %v2724 = vshrl.u32 %v1803, 16
        %v2726 = vrot.slane %v2724, 4
        %v2727 = vor.u32 %v2726, %v2722
        %v2728 = vrot.slane %v2727, 4
        %v2730 = vshll.u32 %v1804, 16
        %v2732 = vrot.slane %v2730, 5
        %v2733 = vsel %vm324, %v2728, %v2732
        %v2734 = vshrl.u32 %v1804, 16
        %v2736 = vrot.slane %v2734, 4
        %v2737 = vor.u32 %v2736, %v2732
        %v2738 = vrot.slane %v2737, 4
        %v2740 = vshll.u32 %v1805, 16
        %v2742 = vrot.slane %v2740, 5
        %v2743 = vsel %vm324, %v2738, %v2742
        %v2744 = vshrl.u32 %v1805, 16
        %v2746 = vrot.slane %v2744, 4
        %v2747 = vor.u32 %v2746, %v2742
        %v2748 = vrot.slane %v2747, 4
        %v2750 = vshll.u32 %v1806, 16
        %v2752 = vrot.slane %v2750, 5
        %v2753 = vsel %vm324, %v2748, %v2752
        %v2754 = vshrl.u32 %v1806, 16
        %v2756 = vrot.slane %v2754, 4
        %v2757 = vor.u32 %v2756, %v2752
        %v2758 = vrot.slane %v2757, 4
        %v2760 = vshll.u32 %v1807, 16
        %v2762 = vrot.slane %v2760, 5
        %v2763 = vsel %vm324, %v2758, %v2762
        %v2764 = vshrl.u32 %v1807, 16
        %v2766 = vrot.slane %v2764, 4
        %v2767 = vor.u32 %v2766, %v2762
        %v2768 = vrot.slane %v2767, 4
        %v2770 = vshll.u32 %v1808, 16
        %v2772 = vrot.slane %v2770, 5
        %v2773 = vsel %vm324, %v2768, %v2772
        %2774 = vrot.lane.b32.xlu0 %v2143, 32
        %v2775 = vpop.permute.xlu0 %2774
        %2776 = vrot.lane.b32.xlu0 %v2153, 32
        %v2777 = vpop.permute.xlu0 %2776
        %2778 = vrot.lane.b32.xlu0 %v2163, 32
        %v2779 = vpop.permute.xlu0 %2778
        %2780 = vrot.lane.b32.xlu0 %v2173, 32
        %v2781 = vpop.permute.xlu0 %2780
        %2782 = vrot.lane.b32.xlu0 %v2183, 32
        %v2783 = vpop.permute.xlu0 %2782
        %2784 = vrot.lane.b32.xlu0 %v2193, 32
        %v2785 = vpop.permute.xlu0 %2784
        %2786 = vrot.lane.b32.xlu0 %v2203, 32
        %v2787 = vpop.permute.xlu0 %2786
        %2788 = vrot.lane.b32.xlu0 %v2213, 32
        %v2789 = vpop.permute.xlu0 %2788
        %2790 = vrot.lane.b32.xlu0 %v2223, 32
        %v2791 = vpop.permute.xlu0 %2790
        %2792 = vrot.lane.b32.xlu0 %v2233, 32
        %v2793 = vpop.permute.xlu0 %2792
        %2794 = vrot.lane.b32.xlu0 %v2243, 32
        %v2795 = vpop.permute.xlu0 %2794
        %2796 = vrot.lane.b32.xlu0 %v2253, 32
        %v2797 = vpop.permute.xlu0 %2796
        %2798 = vrot.lane.b32.xlu0 %v2263, 32
        %v2799 = vpop.permute.xlu0 %2798
        %2800 = vrot.lane.b32.xlu0 %v2273, 32
        %v2801 = vpop.permute.xlu0 %2800
        %2802 = vrot.lane.b32.xlu0 %v2283, 32
        %v2803 = vpop.permute.xlu0 %2802
        %2804 = vrot.lane.b32.xlu0 %v2293, 32
        %v2805 = vpop.permute.xlu0 %2804
        %2806 = vrot.lane.b32.xlu0 %v2303, 32
        %v2807 = vpop.permute.xlu0 %2806
        %2808 = vrot.lane.b32.xlu0 %v2313, 32
        %v2809 = vpop.permute.xlu0 %2808
        %2810 = vrot.lane.b32.xlu0 %v2323, 32
        %v2811 = vpop.permute.xlu0 %2810
        %2812 = vrot.lane.b32.xlu0 %v2333, 32
        %v2813 = vpop.permute.xlu0 %2812
        %2814 = vrot.lane.b32.xlu0 %v2343, 32
        %v2815 = vpop.permute.xlu0 %2814
        %2816 = vrot.lane.b32.xlu0 %v2353, 32
        %v2817 = vpop.permute.xlu0 %2816
        %2818 = vrot.lane.b32.xlu0 %v2363, 32
        %v2819 = vpop.permute.xlu0 %2818
        %2820 = vrot.lane.b32.xlu0 %v2373, 32
        %v2821 = vpop.permute.xlu0 %2820
        %2822 = vrot.lane.b32.xlu0 %v2383, 32
        %v2823 = vpop.permute.xlu0 %2822
        %2824 = vrot.lane.b32.xlu0 %v2393, 32
        %v2825 = vpop.permute.xlu0 %2824
        %2826 = vrot.lane.b32.xlu0 %v2403, 32
        %v2827 = vpop.permute.xlu0 %2826
        %2828 = vrot.lane.b32.xlu0 %v2413, 32
        %v2829 = vpop.permute.xlu0 %2828
        %2830 = vrot.lane.b32.xlu0 %v2423, 32
        %v2831 = vpop.permute.xlu0 %2830
        %2832 = vrot.lane.b32.xlu0 %v2433, 32
        %v2833 = vpop.permute.xlu0 %2832
        %2834 = vrot.lane.b32.xlu0 %v2443, 32
        %v2835 = vpop.permute.xlu0 %2834
        %2836 = vrot.lane.b32.xlu0 %v2453, 32
        %v2837 = vpop.permute.xlu0 %2836
        %2838 = vrot.lane.b32.xlu0 %v2463, 32
        %v2839 = vpop.permute.xlu0 %2838
        %2840 = vrot.lane.b32.xlu0 %v2473, 32
        %v2841 = vpop.permute.xlu0 %2840
        %2842 = vrot.lane.b32.xlu0 %v2483, 32
        %v2843 = vpop.permute.xlu0 %2842
        %2844 = vrot.lane.b32.xlu0 %v2493, 32
        %v2845 = vpop.permute.xlu0 %2844
        %2846 = vrot.lane.b32.xlu0 %v2503, 32
        %v2847 = vpop.permute.xlu0 %2846
        %2848 = vrot.lane.b32.xlu0 %v2513, 32
        %v2849 = vpop.permute.xlu0 %2848
        %2850 = vrot.lane.b32.xlu0 %v2523, 32
        %v2851 = vpop.permute.xlu0 %2850
        %2852 = vrot.lane.b32.xlu0 %v2533, 32
        %v2853 = vpop.permute.xlu0 %2852
        %2854 = vrot.lane.b32.xlu0 %v2543, 32
        %v2855 = vpop.permute.xlu0 %2854
        %2856 = vrot.lane.b32.xlu0 %v2553, 32
        %v2857 = vpop.permute.xlu0 %2856
        %2858 = vrot.lane.b32.xlu0 %v2563, 32
        %v2859 = vpop.permute.xlu0 %2858
        %2860 = vrot.lane.b32.xlu0 %v2573, 32
        %v2861 = vpop.permute.xlu0 %2860
        %2862 = vrot.lane.b32.xlu0 %v2583, 32
        %v2863 = vpop.permute.xlu0 %2862
        %2864 = vrot.lane.b32.xlu0 %v2593, 32
        %v2865 = vpop.permute.xlu0 %2864
        %2866 = vrot.lane.b32.xlu0 %v2603, 32
        %v2867 = vpop.permute.xlu0 %2866
        %2868 = vrot.lane.b32.xlu0 %v2613, 32
        %v2869 = vpop.permute.xlu0 %2868
        %2870 = vrot.lane.b32.xlu0 %v2623, 32
        %v2871 = vpop.permute.xlu0 %2870
        %2872 = vrot.lane.b32.xlu0 %v2633, 32
        %v2873 = vpop.permute.xlu0 %2872
        %2874 = vrot.lane.b32.xlu0 %v2643, 32
        %v2875 = vpop.permute.xlu0 %2874
        %2876 = vrot.lane.b32.xlu0 %v2653, 32
        %v2877 = vpop.permute.xlu0 %2876
        %2878 = vrot.lane.b32.xlu0 %v2663, 32
        %v2879 = vpop.permute.xlu0 %2878
        %2880 = vrot.lane.b32.xlu0 %v2673, 32
        %v2881 = vpop.permute.xlu0 %2880
        %2882 = vrot.lane.b32.xlu0 %v2683, 32
        %v2883 = vpop.permute.xlu0 %2882
        %2884 = vrot.lane.b32.xlu0 %v2693, 32
        %v2885 = vpop.permute.xlu0 %2884
        %2886 = vrot.lane.b32.xlu0 %v2703, 32
        %v2887 = vpop.permute.xlu0 %2886
        %2888 = vrot.lane.b32.xlu0 %v2713, 32
        %v2889 = vpop.permute.xlu0 %2888
        %2890 = vrot.lane.b32.xlu0 %v2723, 32
        %v2891 = vpop.permute.xlu0 %2890
        %2892 = vrot.lane.b32.xlu0 %v2733, 32
        %v2893 = vpop.permute.xlu0 %2892
        %2894 = vrot.lane.b32.xlu0 %v2743, 32
        %v2895 = vpop.permute.xlu0 %2894
        %2896 = vrot.lane.b32.xlu0 %v2753, 32
        %v2897 = vpop.permute.xlu0 %2896
        %2898 = vrot.lane.b32.xlu0 %v2763, 32
        %v2899 = vpop.permute.xlu0 %2898
        %2900 = vrot.lane.b32.xlu0 %v2773, 32
        %v2901 = vpop.permute.xlu0 %2900
        %vm2966 = vcmask 322816
        %2967 = vst.msk [vmem:[#allocation2] sm:$0xf] %vm2966, %v2775
        %2968 = vst.msk [vmem:[#allocation2 + $0x4] sm:$0xf] %vm2966, %v2777
        %2969 = vst.msk [vmem:[#allocation2 + $0x8] sm:$0xf] %vm2966, %v2779
        %2970 = vst.msk [vmem:[#allocation2 + $0xc] sm:$0xf] %vm2966, %v2781
        %2971 = vst.msk [vmem:[#allocation2 + $0x10] sm:$0xf] %vm2966, %v2783
        %2972 = vst.msk [vmem:[#allocation2 + $0x14] sm:$0xf] %vm2966, %v2785
        %2973 = vst.msk [vmem:[#allocation2 + $0x18] sm:$0xf] %vm2966, %v2787
        %2974 = vst.msk [vmem:[#allocation2 + $0x1c] sm:$0xf] %vm2966, %v2789
        %2975 = vst.msk [vmem:[#allocation2 + $0x20] sm:$0xf] %vm2966, %v2791
        %2976 = vst.msk [vmem:[#allocation2 + $0x24] sm:$0xf] %vm2966, %v2793
        %2977 = vst.msk [vmem:[#allocation2 + $0x28] sm:$0xf] %vm2966, %v2795
        %2978 = vst.msk [vmem:[#allocation2 + $0x2c] sm:$0xf] %vm2966, %v2797
        %2979 = vst.msk [vmem:[#allocation2 + $0x30] sm:$0xf] %vm2966, %v2799
        %2980 = vst.msk [vmem:[#allocation2 + $0x34] sm:$0xf] %vm2966, %v2801
        %2981 = vst.msk [vmem:[#allocation2 + $0x38] sm:$0xf] %vm2966, %v2803
        %2982 = vst.msk [vmem:[#allocation2 + $0x3c] sm:$0xf] %vm2966, %v2805
        %2983 = vst.msk [vmem:[#allocation2 + $0x40] sm:$0xf] %vm2966, %v2807
        %2984 = vst.msk [vmem:[#allocation2 + $0x44] sm:$0xf] %vm2966, %v2809
        %2985 = vst.msk [vmem:[#allocation2 + $0x48] sm:$0xf] %vm2966, %v2811
        %2986 = vst.msk [vmem:[#allocation2 + $0x4c] sm:$0xf] %vm2966, %v2813
        %2987 = vst.msk [vmem:[#allocation2 + $0x50] sm:$0xf] %vm2966, %v2815
        %2988 = vst.msk [vmem:[#allocation2 + $0x54] sm:$0xf] %vm2966, %v2817
        %2989 = vst.msk [vmem:[#allocation2 + $0x58] sm:$0xf] %vm2966, %v2819
        %2990 = vst.msk [vmem:[#allocation2 + $0x5c] sm:$0xf] %vm2966, %v2821
        %2991 = vst.msk [vmem:[#allocation2 + $0x60] sm:$0xf] %vm2966, %v2823
        %2992 = vst.msk [vmem:[#allocation2 + $0x64] sm:$0xf] %vm2966, %v2825
        %2993 = vst.msk [vmem:[#allocation2 + $0x68] sm:$0xf] %vm2966, %v2827
        %2994 = vst.msk [vmem:[#allocation2 + $0x6c] sm:$0xf] %vm2966, %v2829
        %2995 = vst.msk [vmem:[#allocation2 + $0x70] sm:$0xf] %vm2966, %v2831
        %2996 = vst.msk [vmem:[#allocation2 + $0x74] sm:$0xf] %vm2966, %v2833
        %2997 = vst.msk [vmem:[#allocation2 + $0x78] sm:$0xf] %vm2966, %v2835
        %2998 = vst.msk [vmem:[#allocation2 + $0x7c] sm:$0xf] %vm2966, %v2837
        %2999 = vst.msk [vmem:[#allocation2 + $0x80] sm:$0xf] %vm2966, %v2839
        %3000 = vst.msk [vmem:[#allocation2 + $0x84] sm:$0xf] %vm2966, %v2841
        %3001 = vst.msk [vmem:[#allocation2 + $0x88] sm:$0xf] %vm2966, %v2843
        %3002 = vst.msk [vmem:[#allocation2 + $0x8c] sm:$0xf] %vm2966, %v2845
        %3003 = vst.msk [vmem:[#allocation2 + $0x90] sm:$0xf] %vm2966, %v2847
        %3004 = vst.msk [vmem:[#allocation2 + $0x94] sm:$0xf] %vm2966, %v2849
        %3005 = vst.msk [vmem:[#allocation2 + $0x98] sm:$0xf] %vm2966, %v2851
        %3006 = vst.msk [vmem:[#allocation2 + $0x9c] sm:$0xf] %vm2966, %v2853
        %3007 = vst.msk [vmem:[#allocation2 + $0xa0] sm:$0xf] %vm2966, %v2855
        %3008 = vst.msk [vmem:[#allocation2 + $0xa4] sm:$0xf] %vm2966, %v2857
        %3009 = vst.msk [vmem:[#allocation2 + $0xa8] sm:$0xf] %vm2966, %v2859
        %3010 = vst.msk [vmem:[#allocation2 + $0xac] sm:$0xf] %vm2966, %v2861
        %3011 = vst.msk [vmem:[#allocation2 + $0xb0] sm:$0xf] %vm2966, %v2863
        %3012 = vst.msk [vmem:[#allocation2 + $0xb4] sm:$0xf] %vm2966, %v2865
        %3013 = vst.msk [vmem:[#allocation2 + $0xb8] sm:$0xf] %vm2966, %v2867
        %3014 = vst.msk [vmem:[#allocation2 + $0xbc] sm:$0xf] %vm2966, %v2869
        %3015 = vst.msk [vmem:[#allocation2 + $0xc0] sm:$0xf] %vm2966, %v2871
        %3016 = vst.msk [vmem:[#allocation2 + $0xc4] sm:$0xf] %vm2966, %v2873
        %3017 = vst.msk [vmem:[#allocation2 + $0xc8] sm:$0xf] %vm2966, %v2875
        %3018 = vst.msk [vmem:[#allocation2 + $0xcc] sm:$0xf] %vm2966, %v2877
        %3019 = vst.msk [vmem:[#allocation2 + $0xd0] sm:$0xf] %vm2966, %v2879
        %3020 = vst.msk [vmem:[#allocation2 + $0xd4] sm:$0xf] %vm2966, %v2881
        %3021 = vst.msk [vmem:[#allocation2 + $0xd8] sm:$0xf] %vm2966, %v2883
        %3022 = vst.msk [vmem:[#allocation2 + $0xdc] sm:$0xf] %vm2966, %v2885
        %3023 = vst.msk [vmem:[#allocation2 + $0xe0] sm:$0xf] %vm2966, %v2887
        %3024 = vst.msk [vmem:[#allocation2 + $0xe4] sm:$0xf] %vm2966, %v2889
        %3025 = vst.msk [vmem:[#allocation2 + $0xe8] sm:$0xf] %vm2966, %v2891
        %3026 = vst.msk [vmem:[#allocation2 + $0xec] sm:$0xf] %vm2966, %v2893
        %3027 = vst.msk [vmem:[#allocation2 + $0xf0] sm:$0xf] %vm2966, %v2895
        %3028 = vst.msk [vmem:[#allocation2 + $0xf4] sm:$0xf] %vm2966, %v2897
        %3029 = vst.msk [vmem:[#allocation2 + $0xf8] sm:$0xf] %vm2966, %v2899
        %3030 = vst.msk [vmem:[#allocation2 + $0xfc] sm:$0xf] %vm2966, %v2901
        %v3032 = vrot.slane %v1744, 5
        %v3033 = vrot.slane %v3032, 4
        %v3034 = vrot.slane %v1745, 5
        %v3035 = vsel %vm1293, %v3033, %v3034
        %v3036 = vrot.slane %v3034, 4
        %v3037 = vrot.slane %v1746, 5
        %v3038 = vsel %vm1293, %v3036, %v3037
        %v3039 = vrot.slane %v3037, 4
        %v3040 = vrot.slane %v1747, 5
        %v3041 = vsel %vm1293, %v3039, %v3040
        %v3042 = vrot.slane %v3040, 4
        %v3043 = vrot.slane %v1748, 5
        %v3044 = vsel %vm1293, %v3042, %v3043
        %v3045 = vrot.slane %v3043, 4
        %v3046 = vrot.slane %v1749, 5
        %v3047 = vsel %vm1293, %v3045, %v3046
        %v3048 = vrot.slane %v3046, 4
        %v3049 = vrot.slane %v1750, 5
        %v3050 = vsel %vm1293, %v3048, %v3049
        %v3051 = vrot.slane %v3049, 4
        %v3052 = vrot.slane %v1751, 5
        %v3053 = vsel %vm1293, %v3051, %v3052
        %v3054 = vrot.slane %v3052, 4
        %v3055 = vrot.slane %v1752, 5
        %v3056 = vsel %vm1293, %v3054, %v3055
        %v3057 = vrot.slane %v3055, 4
        %v3058 = vrot.slane %v1753, 5
        %v3059 = vsel %vm1293, %v3057, %v3058
        %v3060 = vrot.slane %v3058, 4
        %v3061 = vrot.slane %v1754, 5
        %v3062 = vsel %vm1293, %v3060, %v3061
        %v3063 = vrot.slane %v3061, 4
        %v3064 = vrot.slane %v1755, 5
        %v3065 = vsel %vm1293, %v3063, %v3064
        %v3066 = vrot.slane %v3064, 4
        %v3067 = vrot.slane %v1756, 5
        %v3068 = vsel %vm1293, %v3066, %v3067
        %v3069 = vrot.slane %v3067, 4
        %v3070 = vrot.slane %v1757, 5
        %v3071 = vsel %vm1293, %v3069, %v3070
        %v3072 = vrot.slane %v3070, 4
        %v3073 = vrot.slane %v1758, 5
        %v3074 = vsel %vm1293, %v3072, %v3073
        %v3075 = vrot.slane %v3073, 4
        %v3076 = vrot.slane %v1759, 5
        %v3077 = vsel %vm1293, %v3075, %v3076
        %v3078 = vrot.slane %v3076, 4
        %v3079 = vrot.slane %v1760, 5
        %v3080 = vsel %vm1293, %v3078, %v3079
        %v3081 = vrot.slane %v3079, 4
        %v3082 = vrot.slane %v1761, 5
        %v3083 = vsel %vm1293, %v3081, %v3082
        %v3084 = vrot.slane %v3082, 4
        %v3085 = vrot.slane %v1762, 5
        %v3086 = vsel %vm1293, %v3084, %v3085
        %v3087 = vrot.slane %v3085, 4
        %v3088 = vrot.slane %v1763, 5
        %v3089 = vsel %vm1293, %v3087, %v3088
        %v3090 = vrot.slane %v3088, 4
        %v3091 = vrot.slane %v1764, 5
        %v3092 = vsel %vm1293, %v3090, %v3091
        %v3093 = vrot.slane %v3091, 4
        %v3094 = vrot.slane %v1765, 5
        %v3095 = vsel %vm1293, %v3093, %v3094
        %v3096 = vrot.slane %v3094, 4
        %v3097 = vrot.slane %v1766, 5
        %v3098 = vsel %vm1293, %v3096, %v3097
        %v3099 = vrot.slane %v3097, 4
        %v3100 = vrot.slane %v1767, 5
        %v3101 = vsel %vm1293, %v3099, %v3100
        %v3102 = vrot.slane %v3100, 4
        %v3103 = vrot.slane %v1768, 5
        %v3104 = vsel %vm1293, %v3102, %v3103
        %v3105 = vrot.slane %v3103, 4
        %v3106 = vrot.slane %v1769, 5
        %v3107 = vsel %vm1293, %v3105, %v3106
        %v3108 = vrot.slane %v3106, 4
        %v3109 = vrot.slane %v1770, 5
        %v3110 = vsel %vm1293, %v3108, %v3109
        %v3111 = vrot.slane %v3109, 4
        %v3112 = vrot.slane %v1771, 5
        %v3113 = vsel %vm1293, %v3111, %v3112
        %v3114 = vrot.slane %v3112, 4
        %v3115 = vrot.slane %v1772, 5
        %v3116 = vsel %vm1293, %v3114, %v3115
        %v3117 = vrot.slane %v3115, 4
        %v3118 = vrot.slane %v1773, 5
        %v3119 = vsel %vm1293, %v3117, %v3118
        %v3120 = vrot.slane %v3118, 4
        %v3121 = vrot.slane %v1774, 5
        %v3122 = vsel %vm1293, %v3120, %v3121
        %v3123 = vrot.slane %v3121, 4
        %v3124 = vrot.slane %v1775, 5
        %v3125 = vsel %vm1293, %v3123, %v3124
        %v3126 = vrot.slane %v3124, 4
        %v3127 = vrot.slane %v1776, 5
        %v3128 = vsel %vm1293, %v3126, %v3127
        %v3129 = vrot.slane %v3127, 4
        %v3130 = vrot.slane %v1777, 5
        %v3131 = vsel %vm1293, %v3129, %v3130
        %v3132 = vrot.slane %v3130, 4
        %v3133 = vrot.slane %v1778, 5
        %v3134 = vsel %vm1293, %v3132, %v3133
        %v3135 = vrot.slane %v3133, 4
        %v3136 = vrot.slane %v1779, 5
        %v3137 = vsel %vm1293, %v3135, %v3136
        %v3138 = vrot.slane %v3136, 4
        %v3139 = vrot.slane %v1780, 5
        %v3140 = vsel %vm1293, %v3138, %v3139
        %v3141 = vrot.slane %v3139, 4
        %v3142 = vrot.slane %v1781, 5
        %v3143 = vsel %vm1293, %v3141, %v3142
        %v3144 = vrot.slane %v3142, 4
        %v3145 = vrot.slane %v1782, 5
        %v3146 = vsel %vm1293, %v3144, %v3145
        %v3147 = vrot.slane %v3145, 4
        %v3148 = vrot.slane %v1783, 5
        %v3149 = vsel %vm1293, %v3147, %v3148
        %v3150 = vrot.slane %v3148, 4
        %v3151 = vrot.slane %v1784, 5
        %v3152 = vsel %vm1293, %v3150, %v3151
        %v3153 = vrot.slane %v3151, 4
        %v3154 = vrot.slane %v1785, 5
        %v3155 = vsel %vm1293, %v3153, %v3154
        %v3156 = vrot.slane %v3154, 4
        %v3157 = vrot.slane %v1786, 5
        %v3158 = vsel %vm1293, %v3156, %v3157
        %v3159 = vrot.slane %v3157, 4
        %v3160 = vrot.slane %v1787, 5
        %v3161 = vsel %vm1293, %v3159, %v3160
        %v3162 = vrot.slane %v3160, 4
        %v3163 = vrot.slane %v1788, 5
        %v3164 = vsel %vm1293, %v3162, %v3163
        %v3165 = vrot.slane %v3163, 4
        %v3166 = vrot.slane %v1789, 5
        %v3167 = vsel %vm1293, %v3165, %v3166
        %v3168 = vrot.slane %v3166, 4
        %v3169 = vrot.slane %v1790, 5
        %v3170 = vsel %vm1293, %v3168, %v3169
        %v3171 = vrot.slane %v3169, 4
        %v3172 = vrot.slane %v1791, 5
        %v3173 = vsel %vm1293, %v3171, %v3172
        %v3174 = vrot.slane %v3172, 4
        %v3175 = vrot.slane %v1792, 5
        %v3176 = vsel %vm1293, %v3174, %v3175
        %v3177 = vrot.slane %v3175, 4
        %v3178 = vrot.slane %v1793, 5
        %v3179 = vsel %vm1293, %v3177, %v3178
        %v3180 = vrot.slane %v3178, 4
        %v3181 = vrot.slane %v1794, 5
        %v3182 = vsel %vm1293, %v3180, %v3181
        %v3183 = vrot.slane %v3181, 4
        %v3184 = vrot.slane %v1795, 5
        %v3185 = vsel %vm1293, %v3183, %v3184
        %v3186 = vrot.slane %v3184, 4
        %v3187 = vrot.slane %v1796, 5
        %v3188 = vsel %vm1293, %v3186, %v3187
        %v3189 = vrot.slane %v3187, 4
        %v3190 = vrot.slane %v1797, 5
        %v3191 = vsel %vm1293, %v3189, %v3190
        %v3192 = vrot.slane %v3190, 4
        %v3193 = vrot.slane %v1798, 5
        %v3194 = vsel %vm1293, %v3192, %v3193
        %v3195 = vrot.slane %v3193, 4
        %v3196 = vrot.slane %v1799, 5
        %v3197 = vsel %vm1293, %v3195, %v3196
        %v3198 = vrot.slane %v3196, 4
        %v3199 = vrot.slane %v1800, 5
        %v3200 = vsel %vm1293, %v3198, %v3199
        %v3201 = vrot.slane %v3199, 4
        %v3202 = vrot.slane %v1801, 5
        %v3203 = vsel %vm1293, %v3201, %v3202
        %v3204 = vrot.slane %v3202, 4
        %v3205 = vrot.slane %v1802, 5
        %v3206 = vsel %vm1293, %v3204, %v3205
        %v3207 = vrot.slane %v3205, 4
        %v3208 = vrot.slane %v1803, 5
        %v3209 = vsel %vm1293, %v3207, %v3208
        %v3210 = vrot.slane %v3208, 4
        %v3211 = vrot.slane %v1804, 5
        %v3212 = vsel %vm1293, %v3210, %v3211
        %v3213 = vrot.slane %v3211, 4
        %v3214 = vrot.slane %v1805, 5
        %v3215 = vsel %vm1293, %v3213, %v3214
        %v3216 = vrot.slane %v3214, 4
        %v3217 = vrot.slane %v1806, 5
        %v3218 = vsel %vm1293, %v3216, %v3217
        %v3219 = vrot.slane %v3217, 4
        %v3220 = vrot.slane %v1807, 5
        %v3221 = vsel %vm1293, %v3219, %v3220
        %v3222 = vrot.slane %v3220, 4
        %v3223 = vrot.slane %v1808, 5
        %v3224 = vsel %vm1293, %v3222, %v3223
        %3225 = vrot.lane.b32.xlu0 %v3035, 40
        %v3226 = vpop.permute.xlu0 %3225
        %3227 = vrot.lane.b32.xlu0 %v3038, 40
        %v3228 = vpop.permute.xlu0 %3227
        %3229 = vrot.lane.b32.xlu0 %v3041, 40
        %v3230 = vpop.permute.xlu0 %3229
        %3231 = vrot.lane.b32.xlu0 %v3044, 40
        %v3232 = vpop.permute.xlu0 %3231
        %3233 = vrot.lane.b32.xlu0 %v3047, 40
        %v3234 = vpop.permute.xlu0 %3233
        %3235 = vrot.lane.b32.xlu0 %v3050, 40
        %v3236 = vpop.permute.xlu0 %3235
        %3237 = vrot.lane.b32.xlu0 %v3053, 40
        %v3238 = vpop.permute.xlu0 %3237
        %3239 = vrot.lane.b32.xlu0 %v3056, 40
        %v3240 = vpop.permute.xlu0 %3239
        %3241 = vrot.lane.b32.xlu0 %v3059, 40
        %v3242 = vpop.permute.xlu0 %3241
        %3243 = vrot.lane.b32.xlu0 %v3062, 40
        %v3244 = vpop.permute.xlu0 %3243
        %3245 = vrot.lane.b32.xlu0 %v3065, 40
        %v3246 = vpop.permute.xlu0 %3245
        %3247 = vrot.lane.b32.xlu0 %v3068, 40
        %v3248 = vpop.permute.xlu0 %3247
        %3249 = vrot.lane.b32.xlu0 %v3071, 40
        %v3250 = vpop.permute.xlu0 %3249
        %3251 = vrot.lane.b32.xlu0 %v3074, 40
        %v3252 = vpop.permute.xlu0 %3251
        %3253 = vrot.lane.b32.xlu0 %v3077, 40
        %v3254 = vpop.permute.xlu0 %3253
        %3255 = vrot.lane.b32.xlu0 %v3080, 40
        %v3256 = vpop.permute.xlu0 %3255
        %3257 = vrot.lane.b32.xlu0 %v3083, 40
        %v3258 = vpop.permute.xlu0 %3257
        %3259 = vrot.lane.b32.xlu0 %v3086, 40
        %v3260 = vpop.permute.xlu0 %3259
        %3261 = vrot.lane.b32.xlu0 %v3089, 40
        %v3262 = vpop.permute.xlu0 %3261
        %3263 = vrot.lane.b32.xlu0 %v3092, 40
        %v3264 = vpop.permute.xlu0 %3263
        %3265 = vrot.lane.b32.xlu0 %v3095, 40
        %v3266 = vpop.permute.xlu0 %3265
        %3267 = vrot.lane.b32.xlu0 %v3098, 40
        %v3268 = vpop.permute.xlu0 %3267
        %3269 = vrot.lane.b32.xlu0 %v3101, 40
        %v3270 = vpop.permute.xlu0 %3269
        %3271 = vrot.lane.b32.xlu0 %v3104, 40
        %v3272 = vpop.permute.xlu0 %3271
        %3273 = vrot.lane.b32.xlu0 %v3107, 40
        %v3274 = vpop.permute.xlu0 %3273
        %3275 = vrot.lane.b32.xlu0 %v3110, 40
        %v3276 = vpop.permute.xlu0 %3275
        %3277 = vrot.lane.b32.xlu0 %v3113, 40
        %v3278 = vpop.permute.xlu0 %3277
        %3279 = vrot.lane.b32.xlu0 %v3116, 40
        %v3280 = vpop.permute.xlu0 %3279
        %3281 = vrot.lane.b32.xlu0 %v3119, 40
        %v3282 = vpop.permute.xlu0 %3281
        %3283 = vrot.lane.b32.xlu0 %v3122, 40
        %v3284 = vpop.permute.xlu0 %3283
        %3285 = vrot.lane.b32.xlu0 %v3125, 40
        %v3286 = vpop.permute.xlu0 %3285
        %3287 = vrot.lane.b32.xlu0 %v3128, 40
        %v3288 = vpop.permute.xlu0 %3287
        %3289 = vrot.lane.b32.xlu0 %v3131, 40
        %v3290 = vpop.permute.xlu0 %3289
        %3291 = vrot.lane.b32.xlu0 %v3134, 40
        %v3292 = vpop.permute.xlu0 %3291
        %3293 = vrot.lane.b32.xlu0 %v3137, 40
        %v3294 = vpop.permute.xlu0 %3293
        %3295 = vrot.lane.b32.xlu0 %v3140, 40
        %v3296 = vpop.permute.xlu0 %3295
        %3297 = vrot.lane.b32.xlu0 %v3143, 40
        %v3298 = vpop.permute.xlu0 %3297
        %3299 = vrot.lane.b32.xlu0 %v3146, 40
        %v3300 = vpop.permute.xlu0 %3299
        %3301 = vrot.lane.b32.xlu0 %v3149, 40
        %v3302 = vpop.permute.xlu0 %3301
        %3303 = vrot.lane.b32.xlu0 %v3152, 40
        %v3304 = vpop.permute.xlu0 %3303
        %3305 = vrot.lane.b32.xlu0 %v3155, 40
        %v3306 = vpop.permute.xlu0 %3305
        %3307 = vrot.lane.b32.xlu0 %v3158, 40
        %v3308 = vpop.permute.xlu0 %3307
        %3309 = vrot.lane.b32.xlu0 %v3161, 40
        %v3310 = vpop.permute.xlu0 %3309
        %3311 = vrot.lane.b32.xlu0 %v3164, 40
        %v3312 = vpop.permute.xlu0 %3311
        %3313 = vrot.lane.b32.xlu0 %v3167, 40
        %v3314 = vpop.permute.xlu0 %3313
        %3315 = vrot.lane.b32.xlu0 %v3170, 40
        %v3316 = vpop.permute.xlu0 %3315
        %3317 = vrot.lane.b32.xlu0 %v3173, 40
        %v3318 = vpop.permute.xlu0 %3317
        %3319 = vrot.lane.b32.xlu0 %v3176, 40
        %v3320 = vpop.permute.xlu0 %3319
        %3321 = vrot.lane.b32.xlu0 %v3179, 40
        %v3322 = vpop.permute.xlu0 %3321
        %3323 = vrot.lane.b32.xlu0 %v3182, 40
        %v3324 = vpop.permute.xlu0 %3323
        %3325 = vrot.lane.b32.xlu0 %v3185, 40
        %v3326 = vpop.permute.xlu0 %3325
        %3327 = vrot.lane.b32.xlu0 %v3188, 40
        %v3328 = vpop.permute.xlu0 %3327
        %3329 = vrot.lane.b32.xlu0 %v3191, 40
        %v3330 = vpop.permute.xlu0 %3329
        %3331 = vrot.lane.b32.xlu0 %v3194, 40
        %v3332 = vpop.permute.xlu0 %3331
        %3333 = vrot.lane.b32.xlu0 %v3197, 40
        %v3334 = vpop.permute.xlu0 %3333
        %3335 = vrot.lane.b32.xlu0 %v3200, 40
        %v3336 = vpop.permute.xlu0 %3335
        %3337 = vrot.lane.b32.xlu0 %v3203, 40
        %v3338 = vpop.permute.xlu0 %3337
        %3339 = vrot.lane.b32.xlu0 %v3206, 40
        %v3340 = vpop.permute.xlu0 %3339
        %3341 = vrot.lane.b32.xlu0 %v3209, 40
        %v3342 = vpop.permute.xlu0 %3341
        %3343 = vrot.lane.b32.xlu0 %v3212, 40
        %v3344 = vpop.permute.xlu0 %3343
        %3345 = vrot.lane.b32.xlu0 %v3215, 40
        %v3346 = vpop.permute.xlu0 %3345
        %3347 = vrot.lane.b32.xlu0 %v3218, 40
        %v3348 = vpop.permute.xlu0 %3347
        %3349 = vrot.lane.b32.xlu0 %v3221, 40
        %v3350 = vpop.permute.xlu0 %3349
        %3351 = vrot.lane.b32.xlu0 %v3224, 40
        %v3352 = vpop.permute.xlu0 %3351
        %vm3417 = vcmask 388416
        %3418 = vst.msk [vmem:[#allocation2] sm:$0xf] %vm3417, %v3226
        %3419 = vst.msk [vmem:[#allocation2 + $0x4] sm:$0xf] %vm3417, %v3228
        %3420 = vst.msk [vmem:[#allocation2 + $0x8] sm:$0xf] %vm3417, %v3230
        %3421 = vst.msk [vmem:[#allocation2 + $0xc] sm:$0xf] %vm3417, %v3232
        %3422 = vst.msk [vmem:[#allocation2 + $0x10] sm:$0xf] %vm3417, %v3234
        %3423 = vst.msk [vmem:[#allocation2 + $0x14] sm:$0xf] %vm3417, %v3236
        %3424 = vst.msk [vmem:[#allocation2 + $0x18] sm:$0xf] %vm3417, %v3238
        %3425 = vst.msk [vmem:[#allocation2 + $0x1c] sm:$0xf] %vm3417, %v3240
        %3426 = vst.msk [vmem:[#allocation2 + $0x20] sm:$0xf] %vm3417, %v3242
        %3427 = vst.msk [vmem:[#allocation2 + $0x24] sm:$0xf] %vm3417, %v3244
        %3428 = vst.msk [vmem:[#allocation2 + $0x28] sm:$0xf] %vm3417, %v3246
        %3429 = vst.msk [vmem:[#allocation2 + $0x2c] sm:$0xf] %vm3417, %v3248
        %3430 = vst.msk [vmem:[#allocation2 + $0x30] sm:$0xf] %vm3417, %v3250
        %3431 = vst.msk [vmem:[#allocation2 + $0x34] sm:$0xf] %vm3417, %v3252
        %3432 = vst.msk [vmem:[#allocation2 + $0x38] sm:$0xf] %vm3417, %v3254
        %3433 = vst.msk [vmem:[#allocation2 + $0x3c] sm:$0xf] %vm3417, %v3256
        %3434 = vst.msk [vmem:[#allocation2 + $0x40] sm:$0xf] %vm3417, %v3258
        %3435 = vst.msk [vmem:[#allocation2 + $0x44] sm:$0xf] %vm3417, %v3260
        %3436 = vst.msk [vmem:[#allocation2 + $0x48] sm:$0xf] %vm3417, %v3262
        %3437 = vst.msk [vmem:[#allocation2 + $0x4c] sm:$0xf] %vm3417, %v3264
        %3438 = vst.msk [vmem:[#allocation2 + $0x50] sm:$0xf] %vm3417, %v3266
        %3439 = vst.msk [vmem:[#allocation2 + $0x54] sm:$0xf] %vm3417, %v3268
        %3440 = vst.msk [vmem:[#allocation2 + $0x58] sm:$0xf] %vm3417, %v3270
        %3441 = vst.msk [vmem:[#allocation2 + $0x5c] sm:$0xf] %vm3417, %v3272
        %3442 = vst.msk [vmem:[#allocation2 + $0x60] sm:$0xf] %vm3417, %v3274
        %3443 = vst.msk [vmem:[#allocation2 + $0x64] sm:$0xf] %vm3417, %v3276
        %3444 = vst.msk [vmem:[#allocation2 + $0x68] sm:$0xf] %vm3417, %v3278
        %3445 = vst.msk [vmem:[#allocation2 + $0x6c] sm:$0xf] %vm3417, %v3280
        %3446 = vst.msk [vmem:[#allocation2 + $0x70] sm:$0xf] %vm3417, %v3282
        %3447 = vst.msk [vmem:[#allocation2 + $0x74] sm:$0xf] %vm3417, %v3284
        %3448 = vst.msk [vmem:[#allocation2 + $0x78] sm:$0xf] %vm3417, %v3286
        %3449 = vst.msk [vmem:[#allocation2 + $0x7c] sm:$0xf] %vm3417, %v3288
        %3450 = vst.msk [vmem:[#allocation2 + $0x80] sm:$0xf] %vm3417, %v3290
        %3451 = vst.msk [vmem:[#allocation2 + $0x84] sm:$0xf] %vm3417, %v3292
        %3452 = vst.msk [vmem:[#allocation2 + $0x88] sm:$0xf] %vm3417, %v3294
        %3453 = vst.msk [vmem:[#allocation2 + $0x8c] sm:$0xf] %vm3417, %v3296
        %3454 = vst.msk [vmem:[#allocation2 + $0x90] sm:$0xf] %vm3417, %v3298
        %3455 = vst.msk [vmem:[#allocation2 + $0x94] sm:$0xf] %vm3417, %v3300
        %3456 = vst.msk [vmem:[#allocation2 + $0x98] sm:$0xf] %vm3417, %v3302
        %3457 = vst.msk [vmem:[#allocation2 + $0x9c] sm:$0xf] %vm3417, %v3304
        %3458 = vst.msk [vmem:[#allocation2 + $0xa0] sm:$0xf] %vm3417, %v3306
        %3459 = vst.msk [vmem:[#allocation2 + $0xa4] sm:$0xf] %vm3417, %v3308
        %3460 = vst.msk [vmem:[#allocation2 + $0xa8] sm:$0xf] %vm3417, %v3310
        %3461 = vst.msk [vmem:[#allocation2 + $0xac] sm:$0xf] %vm3417, %v3312
        %3462 = vst.msk [vmem:[#allocation2 + $0xb0] sm:$0xf] %vm3417, %v3314
        %3463 = vst.msk [vmem:[#allocation2 + $0xb4] sm:$0xf] %vm3417, %v3316
        %3464 = vst.msk [vmem:[#allocation2 + $0xb8] sm:$0xf] %vm3417, %v3318
        %3465 = vst.msk [vmem:[#allocation2 + $0xbc] sm:$0xf] %vm3417, %v3320
        %3466 = vst.msk [vmem:[#allocation2 + $0xc0] sm:$0xf] %vm3417, %v3322
        %3467 = vst.msk [vmem:[#allocation2 + $0xc4] sm:$0xf] %vm3417, %v3324
        %3468 = vst.msk [vmem:[#allocation2 + $0xc8] sm:$0xf] %vm3417, %v3326
        %3469 = vst.msk [vmem:[#allocation2 + $0xcc] sm:$0xf] %vm3417, %v3328
        %3470 = vst.msk [vmem:[#allocation2 + $0xd0] sm:$0xf] %vm3417, %v3330
        %3471 = vst.msk [vmem:[#allocation2 + $0xd4] sm:$0xf] %vm3417, %v3332
        %3472 = vst.msk [vmem:[#allocation2 + $0xd8] sm:$0xf] %vm3417, %v3334
        %3473 = vst.msk [vmem:[#allocation2 + $0xdc] sm:$0xf] %vm3417, %v3336
        %3474 = vst.msk [vmem:[#allocation2 + $0xe0] sm:$0xf] %vm3417, %v3338
        %3475 = vst.msk [vmem:[#allocation2 + $0xe4] sm:$0xf] %vm3417, %v3340
        %3476 = vst.msk [vmem:[#allocation2 + $0xe8] sm:$0xf] %vm3417, %v3342
        %3477 = vst.msk [vmem:[#allocation2 + $0xec] sm:$0xf] %vm3417, %v3344
        %3478 = vst.msk [vmem:[#allocation2 + $0xf0] sm:$0xf] %vm3417, %v3346
        %3479 = vst.msk [vmem:[#allocation2 + $0xf4] sm:$0xf] %vm3417, %v3348
        %3480 = vst.msk [vmem:[#allocation2 + $0xf8] sm:$0xf] %vm3417, %v3350
        %3481 = vst.msk [vmem:[#allocation2 + $0xfc] sm:$0xf] %vm3417, %v3352
        %v3482 = vld [vmem:[%s188 + $0x20] sm:$0xf]
        %v3483 = vld [vmem:[%s188 + $0x24] sm:$0xf]
        %v3484 = vld [vmem:[%s188 + $0x28] sm:$0xf]
        %v3485 = vld [vmem:[%s188 + $0x2c] sm:$0xf]
        %v3486 = vld [vmem:[%s188 + $0x30] sm:$0xf]
        %v3487 = vld [vmem:[%s188 + $0x34] sm:$0xf]
        %v3488 = vld [vmem:[%s188 + $0x38] sm:$0xf]
        %v3489 = vld [vmem:[%s188 + $0x3c] sm:$0xf]
        %v3490 = vld [vmem:[%s188 + $0x40] sm:$0xf]
        %v3491 = vld [vmem:[%s188 + $0x44] sm:$0xf]
        %v3492 = vld [vmem:[%s188 + $0x48] sm:$0xf]
        %v3493 = vld [vmem:[%s188 + $0x4c] sm:$0xf]
        %v3494 = vld [vmem:[%s188 + $0x50] sm:$0xf]
        %v3495 = vld [vmem:[%s188 + $0x54] sm:$0xf]
        %v3496 = vld [vmem:[%s188 + $0x58] sm:$0xf]
        %v3497 = vld [vmem:[%s188 + $0x5c] sm:$0xf]
        %v3498 = vld [vmem:[%s188 + $0x60] sm:$0xf]
        %v3499 = vld [vmem:[%s188 + $0x64] sm:$0xf]
        %v3500 = vld [vmem:[%s188 + $0x68] sm:$0xf]
        %v3501 = vld [vmem:[%s188 + $0x6c] sm:$0xf]
        %v3502 = vld [vmem:[%s188 + $0x70] sm:$0xf]
        %v3503 = vld [vmem:[%s188 + $0x74] sm:$0xf]
        %v3504 = vld [vmem:[%s188 + $0x78] sm:$0xf]
        %v3505 = vld [vmem:[%s188 + $0x7c] sm:$0xf]
        %v3506 = vld [vmem:[%s188 + $0x80] sm:$0xf]
        %v3507 = vld [vmem:[%s188 + $0x84] sm:$0xf]
        %v3508 = vld [vmem:[%s188 + $0x88] sm:$0xf]
        %v3509 = vld [vmem:[%s188 + $0x8c] sm:$0xf]
        %v3510 = vld [vmem:[%s188 + $0x90] sm:$0xf]
        %v3511 = vld [vmem:[%s188 + $0x94] sm:$0xf]
        %v3512 = vld [vmem:[%s188 + $0x98] sm:$0xf]
        %v3513 = vld [vmem:[%s188 + $0x9c] sm:$0xf]
        %v3514 = vld [vmem:[%s188 + $0xa0] sm:$0xf]
        %v3515 = vld [vmem:[%s188 + $0xa4] sm:$0xf]
        %v3516 = vld [vmem:[%s188 + $0xa8] sm:$0xf]
        %v3517 = vld [vmem:[%s188 + $0xac] sm:$0xf]
        %v3518 = vld [vmem:[%s188 + $0xb0] sm:$0xf]
        %v3519 = vld [vmem:[%s188 + $0xb4] sm:$0xf]
        %v3520 = vld [vmem:[%s188 + $0xb8] sm:$0xf]
        %v3521 = vld [vmem:[%s188 + $0xbc] sm:$0xf]
        %v3522 = vld [vmem:[%s188 + $0xc0] sm:$0xf]
        %v3523 = vld [vmem:[%s188 + $0xc4] sm:$0xf]
        %v3524 = vld [vmem:[%s188 + $0xc8] sm:$0xf]
        %v3525 = vld [vmem:[%s188 + $0xcc] sm:$0xf]
        %v3526 = vld [vmem:[%s188 + $0xd0] sm:$0xf]
        %v3527 = vld [vmem:[%s188 + $0xd4] sm:$0xf]
        %v3528 = vld [vmem:[%s188 + $0xd8] sm:$0xf]
        %v3529 = vld [vmem:[%s188 + $0xdc] sm:$0xf]
        %v3530 = vld [vmem:[%s188 + $0xe0] sm:$0xf]
        %v3531 = vld [vmem:[%s188 + $0xe4] sm:$0xf]
        %v3532 = vld [vmem:[%s188 + $0xe8] sm:$0xf]
        %v3533 = vld [vmem:[%s188 + $0xec] sm:$0xf]
        %v3534 = vld [vmem:[%s188 + $0xf0] sm:$0xf]
        %v3535 = vld [vmem:[%s188 + $0xf4] sm:$0xf]
        %v3536 = vld [vmem:[%s188 + $0xf8] sm:$0xf]
        %v3537 = vld [vmem:[%s188 + $0xfc] sm:$0xf]
        %v3538 = vld [vmem:[%s188 + $0x100] sm:$0xf]
        %v3539 = vld [vmem:[%s188 + $0x104] sm:$0xf]
        %v3540 = vld [vmem:[%s188 + $0x108] sm:$0xf]
        %v3541 = vld [vmem:[%s188 + $0x10c] sm:$0xf]
        %v3542 = vld [vmem:[%s188 + $0x110] sm:$0xf]
        %v3543 = vld [vmem:[%s188 + $0x114] sm:$0xf]
        %v3544 = vld [vmem:[%s188 + $0x118] sm:$0xf]
        %v3545 = vld [vmem:[%s188 + $0x11c] sm:$0xf]
        %v3546 = vld [vmem:[%s188 + $0x120] sm:$0xf]
        %3611 = vrot.lane.b32.xlu0 %v3482, 48
        %v3612 = vpop.permute.xlu0 %3611
        %3613 = vrot.lane.b32.xlu0 %v3483, 48
        %v3614 = vpop.permute.xlu0 %3613
        %3615 = vrot.lane.b32.xlu0 %v3484, 48
        %v3616 = vpop.permute.xlu0 %3615
        %3617 = vrot.lane.b32.xlu0 %v3485, 48
        %v3618 = vpop.permute.xlu0 %3617
        %3619 = vrot.lane.b32.xlu0 %v3486, 48
        %v3620 = vpop.permute.xlu0 %3619
        %3621 = vrot.lane.b32.xlu0 %v3487, 48
        %v3622 = vpop.permute.xlu0 %3621
        %3623 = vrot.lane.b32.xlu0 %v3488, 48
        %v3624 = vpop.permute.xlu0 %3623
        %3625 = vrot.lane.b32.xlu0 %v3489, 48
        %v3626 = vpop.permute.xlu0 %3625
        %3627 = vrot.lane.b32.xlu0 %v3490, 48
        %v3628 = vpop.permute.xlu0 %3627
        %3629 = vrot.lane.b32.xlu0 %v3491, 48
        %v3630 = vpop.permute.xlu0 %3629
        %3631 = vrot.lane.b32.xlu0 %v3492, 48
        %v3632 = vpop.permute.xlu0 %3631
        %3633 = vrot.lane.b32.xlu0 %v3493, 48
        %v3634 = vpop.permute.xlu0 %3633
        %3635 = vrot.lane.b32.xlu0 %v3494, 48
        %v3636 = vpop.permute.xlu0 %3635
        %3637 = vrot.lane.b32.xlu0 %v3495, 48
        %v3638 = vpop.permute.xlu0 %3637
        %3639 = vrot.lane.b32.xlu0 %v3496, 48
        %v3640 = vpop.permute.xlu0 %3639
        %3641 = vrot.lane.b32.xlu0 %v3497, 48
        %v3642 = vpop.permute.xlu0 %3641
        %3643 = vrot.lane.b32.xlu0 %v3498, 48
        %v3644 = vpop.permute.xlu0 %3643
        %3645 = vrot.lane.b32.xlu0 %v3499, 48
        %v3646 = vpop.permute.xlu0 %3645
        %3647 = vrot.lane.b32.xlu0 %v3500, 48
        %v3648 = vpop.permute.xlu0 %3647
        %3649 = vrot.lane.b32.xlu0 %v3501, 48
        %v3650 = vpop.permute.xlu0 %3649
        %3651 = vrot.lane.b32.xlu0 %v3502, 48
        %v3652 = vpop.permute.xlu0 %3651
        %3653 = vrot.lane.b32.xlu0 %v3503, 48
        %v3654 = vpop.permute.xlu0 %3653
        %3655 = vrot.lane.b32.xlu0 %v3504, 48
        %v3656 = vpop.permute.xlu0 %3655
        %3657 = vrot.lane.b32.xlu0 %v3505, 48
        %v3658 = vpop.permute.xlu0 %3657
        %3659 = vrot.lane.b32.xlu0 %v3506, 48
        %v3660 = vpop.permute.xlu0 %3659
        %3661 = vrot.lane.b32.xlu0 %v3507, 48
        %v3662 = vpop.permute.xlu0 %3661
        %3663 = vrot.lane.b32.xlu0 %v3508, 48
        %v3664 = vpop.permute.xlu0 %3663
        %3665 = vrot.lane.b32.xlu0 %v3509, 48
        %v3666 = vpop.permute.xlu0 %3665
        %3667 = vrot.lane.b32.xlu0 %v3510, 48
        %v3668 = vpop.permute.xlu0 %3667
        %3669 = vrot.lane.b32.xlu0 %v3511, 48
        %v3670 = vpop.permute.xlu0 %3669
        %3671 = vrot.lane.b32.xlu0 %v3512, 48
        %v3672 = vpop.permute.xlu0 %3671
        %3673 = vrot.lane.b32.xlu0 %v3513, 48
        %v3674 = vpop.permute.xlu0 %3673
        %3675 = vrot.lane.b32.xlu0 %v3514, 48
        %v3676 = vpop.permute.xlu0 %3675
        %3677 = vrot.lane.b32.xlu0 %v3515, 48
        %v3678 = vpop.permute.xlu0 %3677
        %3679 = vrot.lane.b32.xlu0 %v3516, 48
        %v3680 = vpop.permute.xlu0 %3679
        %3681 = vrot.lane.b32.xlu0 %v3517, 48
        %v3682 = vpop.permute.xlu0 %3681
        %3683 = vrot.lane.b32.xlu0 %v3518, 48
        %v3684 = vpop.permute.xlu0 %3683
        %3685 = vrot.lane.b32.xlu0 %v3519, 48
        %v3686 = vpop.permute.xlu0 %3685
        %3687 = vrot.lane.b32.xlu0 %v3520, 48
        %v3688 = vpop.permute.xlu0 %3687
        %3689 = vrot.lane.b32.xlu0 %v3521, 48
        %v3690 = vpop.permute.xlu0 %3689
        %3691 = vrot.lane.b32.xlu0 %v3522, 48
        %v3692 = vpop.permute.xlu0 %3691
        %3693 = vrot.lane.b32.xlu0 %v3523, 48
        %v3694 = vpop.permute.xlu0 %3693
        %3695 = vrot.lane.b32.xlu0 %v3524, 48
        %v3696 = vpop.permute.xlu0 %3695
        %3697 = vrot.lane.b32.xlu0 %v3525, 48
        %v3698 = vpop.permute.xlu0 %3697
        %3699 = vrot.lane.b32.xlu0 %v3526, 48
        %v3700 = vpop.permute.xlu0 %3699
        %3701 = vrot.lane.b32.xlu0 %v3527, 48
        %v3702 = vpop.permute.xlu0 %3701
        %3703 = vrot.lane.b32.xlu0 %v3528, 48
        %v3704 = vpop.permute.xlu0 %3703
        %3705 = vrot.lane.b32.xlu0 %v3529, 48
        %v3706 = vpop.permute.xlu0 %3705
        %3707 = vrot.lane.b32.xlu0 %v3530, 48
        %v3708 = vpop.permute.xlu0 %3707
        %3709 = vrot.lane.b32.xlu0 %v3531, 48
        %v3710 = vpop.permute.xlu0 %3709
        %3711 = vrot.lane.b32.xlu0 %v3532, 48
        %v3712 = vpop.permute.xlu0 %3711
        %3713 = vrot.lane.b32.xlu0 %v3533, 48
        %v3714 = vpop.permute.xlu0 %3713
        %3715 = vrot.lane.b32.xlu0 %v3534, 48
        %v3716 = vpop.permute.xlu0 %3715
        %3717 = vrot.lane.b32.xlu0 %v3535, 48
        %v3718 = vpop.permute.xlu0 %3717
        %3719 = vrot.lane.b32.xlu0 %v3536, 48
        %v3720 = vpop.permute.xlu0 %3719
        %3721 = vrot.lane.b32.xlu0 %v3537, 48
        %v3722 = vpop.permute.xlu0 %3721
        %3723 = vrot.lane.b32.xlu0 %v3538, 48
        %v3724 = vpop.permute.xlu0 %3723
        %3725 = vrot.lane.b32.xlu0 %v3539, 48
        %v3726 = vpop.permute.xlu0 %3725
        %3727 = vrot.lane.b32.xlu0 %v3540, 48
        %v3728 = vpop.permute.xlu0 %3727
        %3729 = vrot.lane.b32.xlu0 %v3541, 48
        %v3730 = vpop.permute.xlu0 %3729
        %3731 = vrot.lane.b32.xlu0 %v3542, 48
        %v3732 = vpop.permute.xlu0 %3731
        %3733 = vrot.lane.b32.xlu0 %v3543, 48
        %v3734 = vpop.permute.xlu0 %3733
        %3735 = vrot.lane.b32.xlu0 %v3544, 48
        %v3736 = vpop.permute.xlu0 %3735
        %3737 = vrot.lane.b32.xlu0 %v3545, 48
        %v3738 = vpop.permute.xlu0 %3737
        %vm3803 = vcmask 454016
        %3804 = vst.msk [vmem:[#allocation2] sm:$0xf] %vm3803, %v3612
        %3805 = vst.msk [vmem:[#allocation2 + $0x4] sm:$0xf] %vm3803, %v3614
        %3806 = vst.msk [vmem:[#allocation2 + $0x8] sm:$0xf] %vm3803, %v3616
        %3807 = vst.msk [vmem:[#allocation2 + $0xc] sm:$0xf] %vm3803, %v3618
        %3808 = vst.msk [vmem:[#allocation2 + $0x10] sm:$0xf] %vm3803, %v3620
        %3809 = vst.msk [vmem:[#allocation2 + $0x14] sm:$0xf] %vm3803, %v3622
        %3810 = vst.msk [vmem:[#allocation2 + $0x18] sm:$0xf] %vm3803, %v3624
        %3811 = vst.msk [vmem:[#allocation2 + $0x1c] sm:$0xf] %vm3803, %v3626
        %3812 = vst.msk [vmem:[#allocation2 + $0x20] sm:$0xf] %vm3803, %v3628
        %3813 = vst.msk [vmem:[#allocation2 + $0x24] sm:$0xf] %vm3803, %v3630
        %3814 = vst.msk [vmem:[#allocation2 + $0x28] sm:$0xf] %vm3803, %v3632
        %3815 = vst.msk [vmem:[#allocation2 + $0x2c] sm:$0xf] %vm3803, %v3634
        %3816 = vst.msk [vmem:[#allocation2 + $0x30] sm:$0xf] %vm3803, %v3636
        %3817 = vst.msk [vmem:[#allocation2 + $0x34] sm:$0xf] %vm3803, %v3638
        %3818 = vst.msk [vmem:[#allocation2 + $0x38] sm:$0xf] %vm3803, %v3640
        %3819 = vst.msk [vmem:[#allocation2 + $0x3c] sm:$0xf] %vm3803, %v3642
        %3820 = vst.msk [vmem:[#allocation2 + $0x40] sm:$0xf] %vm3803, %v3644
        %3821 = vst.msk [vmem:[#allocation2 + $0x44] sm:$0xf] %vm3803, %v3646
        %3822 = vst.msk [vmem:[#allocation2 + $0x48] sm:$0xf] %vm3803, %v3648
        %3823 = vst.msk [vmem:[#allocation2 + $0x4c] sm:$0xf] %vm3803, %v3650
        %3824 = vst.msk [vmem:[#allocation2 + $0x50] sm:$0xf] %vm3803, %v3652
        %3825 = vst.msk [vmem:[#allocation2 + $0x54] sm:$0xf] %vm3803, %v3654
        %3826 = vst.msk [vmem:[#allocation2 + $0x58] sm:$0xf] %vm3803, %v3656
        %3827 = vst.msk [vmem:[#allocation2 + $0x5c] sm:$0xf] %vm3803, %v3658
        %3828 = vst.msk [vmem:[#allocation2 + $0x60] sm:$0xf] %vm3803, %v3660
        %3829 = vst.msk [vmem:[#allocation2 + $0x64] sm:$0xf] %vm3803, %v3662
        %3830 = vst.msk [vmem:[#allocation2 + $0x68] sm:$0xf] %vm3803, %v3664
        %3831 = vst.msk [vmem:[#allocation2 + $0x6c] sm:$0xf] %vm3803, %v3666
        %3832 = vst.msk [vmem:[#allocation2 + $0x70] sm:$0xf] %vm3803, %v3668
        %3833 = vst.msk [vmem:[#allocation2 + $0x74] sm:$0xf] %vm3803, %v3670
        %3834 = vst.msk [vmem:[#allocation2 + $0x78] sm:$0xf] %vm3803, %v3672
        %3835 = vst.msk [vmem:[#allocation2 + $0x7c] sm:$0xf] %vm3803, %v3674
        %3836 = vst.msk [vmem:[#allocation2 + $0x80] sm:$0xf] %vm3803, %v3676
        %3837 = vst.msk [vmem:[#allocation2 + $0x84] sm:$0xf] %vm3803, %v3678
        %3838 = vst.msk [vmem:[#allocation2 + $0x88] sm:$0xf] %vm3803, %v3680
        %3839 = vst.msk [vmem:[#allocation2 + $0x8c] sm:$0xf] %vm3803, %v3682
        %3840 = vst.msk [vmem:[#allocation2 + $0x90] sm:$0xf] %vm3803, %v3684
        %3841 = vst.msk [vmem:[#allocation2 + $0x94] sm:$0xf] %vm3803, %v3686
        %3842 = vst.msk [vmem:[#allocation2 + $0x98] sm:$0xf] %vm3803, %v3688
        %3843 = vst.msk [vmem:[#allocation2 + $0x9c] sm:$0xf] %vm3803, %v3690
        %3844 = vst.msk [vmem:[#allocation2 + $0xa0] sm:$0xf] %vm3803, %v3692
        %3845 = vst.msk [vmem:[#allocation2 + $0xa4] sm:$0xf] %vm3803, %v3694
        %3846 = vst.msk [vmem:[#allocation2 + $0xa8] sm:$0xf] %vm3803, %v3696
        %3847 = vst.msk [vmem:[#allocation2 + $0xac] sm:$0xf] %vm3803, %v3698
        %3848 = vst.msk [vmem:[#allocation2 + $0xb0] sm:$0xf] %vm3803, %v3700
        %3849 = vst.msk [vmem:[#allocation2 + $0xb4] sm:$0xf] %vm3803, %v3702
        %3850 = vst.msk [vmem:[#allocation2 + $0xb8] sm:$0xf] %vm3803, %v3704
        %3851 = vst.msk [vmem:[#allocation2 + $0xbc] sm:$0xf] %vm3803, %v3706
        %3852 = vst.msk [vmem:[#allocation2 + $0xc0] sm:$0xf] %vm3803, %v3708
        %3853 = vst.msk [vmem:[#allocation2 + $0xc4] sm:$0xf] %vm3803, %v3710
        %3854 = vst.msk [vmem:[#allocation2 + $0xc8] sm:$0xf] %vm3803, %v3712
        %3855 = vst.msk [vmem:[#allocation2 + $0xcc] sm:$0xf] %vm3803, %v3714
        %3856 = vst.msk [vmem:[#allocation2 + $0xd0] sm:$0xf] %vm3803, %v3716
        %3857 = vst.msk [vmem:[#allocation2 + $0xd4] sm:$0xf] %vm3803, %v3718
        %3858 = vst.msk [vmem:[#allocation2 + $0xd8] sm:$0xf] %vm3803, %v3720
        %3859 = vst.msk [vmem:[#allocation2 + $0xdc] sm:$0xf] %vm3803, %v3722
        %3860 = vst.msk [vmem:[#allocation2 + $0xe0] sm:$0xf] %vm3803, %v3724
        %3861 = vst.msk [vmem:[#allocation2 + $0xe4] sm:$0xf] %vm3803, %v3726
        %3862 = vst.msk [vmem:[#allocation2 + $0xe8] sm:$0xf] %vm3803, %v3728
        %3863 = vst.msk [vmem:[#allocation2 + $0xec] sm:$0xf] %vm3803, %v3730
        %3864 = vst.msk [vmem:[#allocation2 + $0xf0] sm:$0xf] %vm3803, %v3732
        %3865 = vst.msk [vmem:[#allocation2 + $0xf4] sm:$0xf] %vm3803, %v3734
        %3866 = vst.msk [vmem:[#allocation2 + $0xf8] sm:$0xf] %vm3803, %v3736
        %3867 = vst.msk [vmem:[#allocation2 + $0xfc] sm:$0xf] %vm3803, %v3738
        %v3869 = vshrl.u32 %v3482, 16
        %v3871 = vrot.slane %v3869, 4
        %v3872 = vshll.u32 %v3482, 16
        %v3874 = vrot.slane %v3872, 5
        %v3875 = vor.u32 %v3871, %v3874
        %v3876 = vrot.slane %v3875, 4
        %v3878 = vshll.u32 %v3483, 16
        %v3880 = vrot.slane %v3878, 5
        %v3881 = vsel %vm324, %v3876, %v3880
        %v3882 = vshrl.u32 %v3483, 16
        %v3884 = vrot.slane %v3882, 4
        %v3885 = vor.u32 %v3884, %v3880
        %v3886 = vrot.slane %v3885, 4
        %v3888 = vshll.u32 %v3484, 16
        %v3890 = vrot.slane %v3888, 5
        %v3891 = vsel %vm324, %v3886, %v3890
        %v3892 = vshrl.u32 %v3484, 16
        %v3894 = vrot.slane %v3892, 4
        %v3895 = vor.u32 %v3894, %v3890
        %v3896 = vrot.slane %v3895, 4
        %v3898 = vshll.u32 %v3485, 16
        %v3900 = vrot.slane %v3898, 5
        %v3901 = vsel %vm324, %v3896, %v3900
        %v3902 = vshrl.u32 %v3485, 16
        %v3904 = vrot.slane %v3902, 4
        %v3905 = vor.u32 %v3904, %v3900
        %v3906 = vrot.slane %v3905, 4
        %v3908 = vshll.u32 %v3486, 16
        %v3910 = vrot.slane %v3908, 5
        %v3911 = vsel %vm324, %v3906, %v3910
        %v3912 = vshrl.u32 %v3486, 16
        %v3914 = vrot.slane %v3912, 4
        %v3915 = vor.u32 %v3914, %v3910
        %v3916 = vrot.slane %v3915, 4
        %v3918 = vshll.u32 %v3487, 16
        %v3920 = vrot.slane %v3918, 5
        %v3921 = vsel %vm324, %v3916, %v3920
        %v3922 = vshrl.u32 %v3487, 16
        %v3924 = vrot.slane %v3922, 4
        %v3925 = vor.u32 %v3924, %v3920
        %v3926 = vrot.slane %v3925, 4
        %v3928 = vshll.u32 %v3488, 16
        %v3930 = vrot.slane %v3928, 5
        %v3931 = vsel %vm324, %v3926, %v3930
        %v3932 = vshrl.u32 %v3488, 16
        %v3934 = vrot.slane %v3932, 4
        %v3935 = vor.u32 %v3934, %v3930
        %v3936 = vrot.slane %v3935, 4
        %v3938 = vshll.u32 %v3489, 16
        %v3940 = vrot.slane %v3938, 5
        %v3941 = vsel %vm324, %v3936, %v3940
        %v3942 = vshrl.u32 %v3489, 16
        %v3944 = vrot.slane %v3942, 4
        %v3945 = vor.u32 %v3944, %v3940
        %v3946 = vrot.slane %v3945, 4
        %v3948 = vshll.u32 %v3490, 16
        %v3950 = vrot.slane %v3948, 5
        %v3951 = vsel %vm324, %v3946, %v3950
        %v3952 = vshrl.u32 %v3490, 16
        %v3954 = vrot.slane %v3952, 4
        %v3955 = vor.u32 %v3954, %v3950
        %v3956 = vrot.slane %v3955, 4
        %v3958 = vshll.u32 %v3491, 16
        %v3960 = vrot.slane %v3958, 5
        %v3961 = vsel %vm324, %v3956, %v3960
        %v3962 = vshrl.u32 %v3491, 16
        %v3964 = vrot.slane %v3962, 4
        %v3965 = vor.u32 %v3964, %v3960
        %v3966 = vrot.slane %v3965, 4
        %v3968 = vshll.u32 %v3492, 16
        %v3970 = vrot.slane %v3968, 5
        %v3971 = vsel %vm324, %v3966, %v3970
        %v3972 = vshrl.u32 %v3492, 16
        %v3974 = vrot.slane %v3972, 4
        %v3975 = vor.u32 %v3974, %v3970
        %v3976 = vrot.slane %v3975, 4
        %v3978 = vshll.u32 %v3493, 16
        %v3980 = vrot.slane %v3978, 5
        %v3981 = vsel %vm324, %v3976, %v3980
        %v3982 = vshrl.u32 %v3493, 16
        %v3984 = vrot.slane %v3982, 4
        %v3985 = vor.u32 %v3984, %v3980
        %v3986 = vrot.slane %v3985, 4
        %v3988 = vshll.u32 %v3494, 16
        %v3990 = vrot.slane %v3988, 5
        %v3991 = vsel %vm324, %v3986, %v3990
        %v3992 = vshrl.u32 %v3494, 16
        %v3994 = vrot.slane %v3992, 4
        %v3995 = vor.u32 %v3994, %v3990
        %v3996 = vrot.slane %v3995, 4
        %v3998 = vshll.u32 %v3495, 16
        %v4000 = vrot.slane %v3998, 5
        %v4001 = vsel %vm324, %v3996, %v4000
        %v4002 = vshrl.u32 %v3495, 16
        %v4004 = vrot.slane %v4002, 4
        %v4005 = vor.u32 %v4004, %v4000
        %v4006 = vrot.slane %v4005, 4
        %v4008 = vshll.u32 %v3496, 16
        %v4010 = vrot.slane %v4008, 5
        %v4011 = vsel %vm324, %v4006, %v4010
        %v4012 = vshrl.u32 %v3496, 16
        %v4014 = vrot.slane %v4012, 4
        %v4015 = vor.u32 %v4014, %v4010
        %v4016 = vrot.slane %v4015, 4
        %v4018 = vshll.u32 %v3497, 16
        %v4020 = vrot.slane %v4018, 5
        %v4021 = vsel %vm324, %v4016, %v4020
        %v4022 = vshrl.u32 %v3497, 16
        %v4024 = vrot.slane %v4022, 4
        %v4025 = vor.u32 %v4024, %v4020
        %v4026 = vrot.slane %v4025, 4
        %v4028 = vshll.u32 %v3498, 16
        %v4030 = vrot.slane %v4028, 5
        %v4031 = vsel %vm324, %v4026, %v4030
        %v4032 = vshrl.u32 %v3498, 16
        %v4034 = vrot.slane %v4032, 4
        %v4035 = vor.u32 %v4034, %v4030
        %v4036 = vrot.slane %v4035, 4
        %v4038 = vshll.u32 %v3499, 16
        %v4040 = vrot.slane %v4038, 5
        %v4041 = vsel %vm324, %v4036, %v4040
        %v4042 = vshrl.u32 %v3499, 16
        %v4044 = vrot.slane %v4042, 4
        %v4045 = vor.u32 %v4044, %v4040
        %v4046 = vrot.slane %v4045, 4
        %v4048 = vshll.u32 %v3500, 16
        %v4050 = vrot.slane %v4048, 5
        %v4051 = vsel %vm324, %v4046, %v4050
        %v4052 = vshrl.u32 %v3500, 16
        %v4054 = vrot.slane %v4052, 4
        %v4055 = vor.u32 %v4054, %v4050
        %v4056 = vrot.slane %v4055, 4
        %v4058 = vshll.u32 %v3501, 16
        %v4060 = vrot.slane %v4058, 5
        %v4061 = vsel %vm324, %v4056, %v4060
        %v4062 = vshrl.u32 %v3501, 16
        %v4064 = vrot.slane %v4062, 4
        %v4065 = vor.u32 %v4064, %v4060
        %v4066 = vrot.slane %v4065, 4
        %v4068 = vshll.u32 %v3502, 16
        %v4070 = vrot.slane %v4068, 5
        %v4071 = vsel %vm324, %v4066, %v4070
        %v4072 = vshrl.u32 %v3502, 16
        %v4074 = vrot.slane %v4072, 4
        %v4075 = vor.u32 %v4074, %v4070
        %v4076 = vrot.slane %v4075, 4
        %v4078 = vshll.u32 %v3503, 16
        %v4080 = vrot.slane %v4078, 5
        %v4081 = vsel %vm324, %v4076, %v4080
        %v4082 = vshrl.u32 %v3503, 16
        %v4084 = vrot.slane %v4082, 4
        %v4085 = vor.u32 %v4084, %v4080
        %v4086 = vrot.slane %v4085, 4
        %v4088 = vshll.u32 %v3504, 16
        %v4090 = vrot.slane %v4088, 5
        %v4091 = vsel %vm324, %v4086, %v4090
        %v4092 = vshrl.u32 %v3504, 16
        %v4094 = vrot.slane %v4092, 4
        %v4095 = vor.u32 %v4094, %v4090
        %v4096 = vrot.slane %v4095, 4
        %v4098 = vshll.u32 %v3505, 16
        %v4100 = vrot.slane %v4098, 5
        %v4101 = vsel %vm324, %v4096, %v4100
        %v4102 = vshrl.u32 %v3505, 16
        %v4104 = vrot.slane %v4102, 4
        %v4105 = vor.u32 %v4104, %v4100
        %v4106 = vrot.slane %v4105, 4
        %v4108 = vshll.u32 %v3506, 16
        %v4110 = vrot.slane %v4108, 5
        %v4111 = vsel %vm324, %v4106, %v4110
        %v4112 = vshrl.u32 %v3506, 16
        %v4114 = vrot.slane %v4112, 4
        %v4115 = vor.u32 %v4114, %v4110
        %v4116 = vrot.slane %v4115, 4
        %v4118 = vshll.u32 %v3507, 16
        %v4120 = vrot.slane %v4118, 5
        %v4121 = vsel %vm324, %v4116, %v4120
        %v4122 = vshrl.u32 %v3507, 16
        %v4124 = vrot.slane %v4122, 4
        %v4125 = vor.u32 %v4124, %v4120
        %v4126 = vrot.slane %v4125, 4
        %v4128 = vshll.u32 %v3508, 16
        %v4130 = vrot.slane %v4128, 5
        %v4131 = vsel %vm324, %v4126, %v4130
        %v4132 = vshrl.u32 %v3508, 16
        %v4134 = vrot.slane %v4132, 4
        %v4135 = vor.u32 %v4134, %v4130
        %v4136 = vrot.slane %v4135, 4
        %v4138 = vshll.u32 %v3509, 16
        %v4140 = vrot.slane %v4138, 5
        %v4141 = vsel %vm324, %v4136, %v4140
        %v4142 = vshrl.u32 %v3509, 16
        %v4144 = vrot.slane %v4142, 4
        %v4145 = vor.u32 %v4144, %v4140
        %v4146 = vrot.slane %v4145, 4
        %v4148 = vshll.u32 %v3510, 16
        %v4150 = vrot.slane %v4148, 5
        %v4151 = vsel %vm324, %v4146, %v4150
        %v4152 = vshrl.u32 %v3510, 16
        %v4154 = vrot.slane %v4152, 4
        %v4155 = vor.u32 %v4154, %v4150
        %v4156 = vrot.slane %v4155, 4
        %v4158 = vshll.u32 %v3511, 16
        %v4160 = vrot.slane %v4158, 5
        %v4161 = vsel %vm324, %v4156, %v4160
        %v4162 = vshrl.u32 %v3511, 16
        %v4164 = vrot.slane %v4162, 4
        %v4165 = vor.u32 %v4164, %v4160
        %v4166 = vrot.slane %v4165, 4
        %v4168 = vshll.u32 %v3512, 16
        %v4170 = vrot.slane %v4168, 5
        %v4171 = vsel %vm324, %v4166, %v4170
        %v4172 = vshrl.u32 %v3512, 16
        %v4174 = vrot.slane %v4172, 4
        %v4175 = vor.u32 %v4174, %v4170
        %v4176 = vrot.slane %v4175, 4
        %v4178 = vshll.u32 %v3513, 16
        %v4180 = vrot.slane %v4178, 5
        %v4181 = vsel %vm324, %v4176, %v4180
        %v4182 = vshrl.u32 %v3513, 16
        %v4184 = vrot.slane %v4182, 4
        %v4185 = vor.u32 %v4184, %v4180
        %v4186 = vrot.slane %v4185, 4
        %v4188 = vshll.u32 %v3514, 16
        %v4190 = vrot.slane %v4188, 5
        %v4191 = vsel %vm324, %v4186, %v4190
        %v4192 = vshrl.u32 %v3514, 16
        %v4194 = vrot.slane %v4192, 4
        %v4195 = vor.u32 %v4194, %v4190
        %v4196 = vrot.slane %v4195, 4
        %v4198 = vshll.u32 %v3515, 16
        %v4200 = vrot.slane %v4198, 5
        %v4201 = vsel %vm324, %v4196, %v4200
        %v4202 = vshrl.u32 %v3515, 16
        %v4204 = vrot.slane %v4202, 4
        %v4205 = vor.u32 %v4204, %v4200
        %v4206 = vrot.slane %v4205, 4
        %v4208 = vshll.u32 %v3516, 16
        %v4210 = vrot.slane %v4208, 5
        %v4211 = vsel %vm324, %v4206, %v4210
        %v4212 = vshrl.u32 %v3516, 16
        %v4214 = vrot.slane %v4212, 4
        %v4215 = vor.u32 %v4214, %v4210
        %v4216 = vrot.slane %v4215, 4
        %v4218 = vshll.u32 %v3517, 16
        %v4220 = vrot.slane %v4218, 5
        %v4221 = vsel %vm324, %v4216, %v4220
        %v4222 = vshrl.u32 %v3517, 16
        %v4224 = vrot.slane %v4222, 4
        %v4225 = vor.u32 %v4224, %v4220
        %v4226 = vrot.slane %v4225, 4
        %v4228 = vshll.u32 %v3518, 16
        %v4230 = vrot.slane %v4228, 5
        %v4231 = vsel %vm324, %v4226, %v4230
        %v4232 = vshrl.u32 %v3518, 16
        %v4234 = vrot.slane %v4232, 4
        %v4235 = vor.u32 %v4234, %v4230
        %v4236 = vrot.slane %v4235, 4
        %v4238 = vshll.u32 %v3519, 16
        %v4240 = vrot.slane %v4238, 5
        %v4241 = vsel %vm324, %v4236, %v4240
        %v4242 = vshrl.u32 %v3519, 16
        %v4244 = vrot.slane %v4242, 4
        %v4245 = vor.u32 %v4244, %v4240
        %v4246 = vrot.slane %v4245, 4
        %v4248 = vshll.u32 %v3520, 16
        %v4250 = vrot.slane %v4248, 5
        %v4251 = vsel %vm324, %v4246, %v4250
        %v4252 = vshrl.u32 %v3520, 16
        %v4254 = vrot.slane %v4252, 4
        %v4255 = vor.u32 %v4254, %v4250
        %v4256 = vrot.slane %v4255, 4
        %v4258 = vshll.u32 %v3521, 16
        %v4260 = vrot.slane %v4258, 5
        %v4261 = vsel %vm324, %v4256, %v4260
        %v4262 = vshrl.u32 %v3521, 16
        %v4264 = vrot.slane %v4262, 4
        %v4265 = vor.u32 %v4264, %v4260
        %v4266 = vrot.slane %v4265, 4
        %v4268 = vshll.u32 %v3522, 16
        %v4270 = vrot.slane %v4268, 5
        %v4271 = vsel %vm324, %v4266, %v4270
        %v4272 = vshrl.u32 %v3522, 16
        %v4274 = vrot.slane %v4272, 4
        %v4275 = vor.u32 %v4274, %v4270
        %v4276 = vrot.slane %v4275, 4
        %v4278 = vshll.u32 %v3523, 16
        %v4280 = vrot.slane %v4278, 5
        %v4281 = vsel %vm324, %v4276, %v4280
        %v4282 = vshrl.u32 %v3523, 16
        %v4284 = vrot.slane %v4282, 4
        %v4285 = vor.u32 %v4284, %v4280
        %v4286 = vrot.slane %v4285, 4
        %v4288 = vshll.u32 %v3524, 16
        %v4290 = vrot.slane %v4288, 5
        %v4291 = vsel %vm324, %v4286, %v4290
        %v4292 = vshrl.u32 %v3524, 16
        %v4294 = vrot.slane %v4292, 4
        %v4295 = vor.u32 %v4294, %v4290
        %v4296 = vrot.slane %v4295, 4
        %v4298 = vshll.u32 %v3525, 16
        %v4300 = vrot.slane %v4298, 5
        %v4301 = vsel %vm324, %v4296, %v4300
        %v4302 = vshrl.u32 %v3525, 16
        %v4304 = vrot.slane %v4302, 4
        %v4305 = vor.u32 %v4304, %v4300
        %v4306 = vrot.slane %v4305, 4
        %v4308 = vshll.u32 %v3526, 16
        %v4310 = vrot.slane %v4308, 5
        %v4311 = vsel %vm324, %v4306, %v4310
        %v4312 = vshrl.u32 %v3526, 16
        %v4314 = vrot.slane %v4312, 4
        %v4315 = vor.u32 %v4314, %v4310
        %v4316 = vrot.slane %v4315, 4
        %v4318 = vshll.u32 %v3527, 16
        %v4320 = vrot.slane %v4318, 5
        %v4321 = vsel %vm324, %v4316, %v4320
        %v4322 = vshrl.u32 %v3527, 16
        %v4324 = vrot.slane %v4322, 4
        %v4325 = vor.u32 %v4324, %v4320
        %v4326 = vrot.slane %v4325, 4
        %v4328 = vshll.u32 %v3528, 16
        %v4330 = vrot.slane %v4328, 5
        %v4331 = vsel %vm324, %v4326, %v4330
        %v4332 = vshrl.u32 %v3528, 16
        %v4334 = vrot.slane %v4332, 4
        %v4335 = vor.u32 %v4334, %v4330
        %v4336 = vrot.slane %v4335, 4
        %v4338 = vshll.u32 %v3529, 16
        %v4340 = vrot.slane %v4338, 5
        %v4341 = vsel %vm324, %v4336, %v4340
        %v4342 = vshrl.u32 %v3529, 16
        %v4344 = vrot.slane %v4342, 4
        %v4345 = vor.u32 %v4344, %v4340
        %v4346 = vrot.slane %v4345, 4
        %v4348 = vshll.u32 %v3530, 16
        %v4350 = vrot.slane %v4348, 5
        %v4351 = vsel %vm324, %v4346, %v4350
        %v4352 = vshrl.u32 %v3530, 16
        %v4354 = vrot.slane %v4352, 4
        %v4355 = vor.u32 %v4354, %v4350
        %v4356 = vrot.slane %v4355, 4
        %v4358 = vshll.u32 %v3531, 16
        %v4360 = vrot.slane %v4358, 5
        %v4361 = vsel %vm324, %v4356, %v4360
        %v4362 = vshrl.u32 %v3531, 16
        %v4364 = vrot.slane %v4362, 4
        %v4365 = vor.u32 %v4364, %v4360
        %v4366 = vrot.slane %v4365, 4
        %v4368 = vshll.u32 %v3532, 16
        %v4370 = vrot.slane %v4368, 5
        %v4371 = vsel %vm324, %v4366, %v4370
        %v4372 = vshrl.u32 %v3532, 16
        %v4374 = vrot.slane %v4372, 4
        %v4375 = vor.u32 %v4374, %v4370
        %v4376 = vrot.slane %v4375, 4
        %v4378 = vshll.u32 %v3533, 16
        %v4380 = vrot.slane %v4378, 5
        %v4381 = vsel %vm324, %v4376, %v4380
        %v4382 = vshrl.u32 %v3533, 16
        %v4384 = vrot.slane %v4382, 4
        %v4385 = vor.u32 %v4384, %v4380
        %v4386 = vrot.slane %v4385, 4
        %v4388 = vshll.u32 %v3534, 16
        %v4390 = vrot.slane %v4388, 5
        %v4391 = vsel %vm324, %v4386, %v4390
        %v4392 = vshrl.u32 %v3534, 16
        %v4394 = vrot.slane %v4392, 4
        %v4395 = vor.u32 %v4394, %v4390
        %v4396 = vrot.slane %v4395, 4
        %v4398 = vshll.u32 %v3535, 16
        %v4400 = vrot.slane %v4398, 5
        %v4401 = vsel %vm324, %v4396, %v4400
        %v4402 = vshrl.u32 %v3535, 16
        %v4404 = vrot.slane %v4402, 4
        %v4405 = vor.u32 %v4404, %v4400
        %v4406 = vrot.slane %v4405, 4
        %v4408 = vshll.u32 %v3536, 16
        %v4410 = vrot.slane %v4408, 5
        %v4411 = vsel %vm324, %v4406, %v4410
        %v4412 = vshrl.u32 %v3536, 16
        %v4414 = vrot.slane %v4412, 4
        %v4415 = vor.u32 %v4414, %v4410
        %v4416 = vrot.slane %v4415, 4
        %v4418 = vshll.u32 %v3537, 16
        %v4420 = vrot.slane %v4418, 5
        %v4421 = vsel %vm324, %v4416, %v4420
        %v4422 = vshrl.u32 %v3537, 16
        %v4424 = vrot.slane %v4422, 4
        %v4425 = vor.u32 %v4424, %v4420
        %v4426 = vrot.slane %v4425, 4
        %v4428 = vshll.u32 %v3538, 16
        %v4430 = vrot.slane %v4428, 5
        %v4431 = vsel %vm324, %v4426, %v4430
        %v4432 = vshrl.u32 %v3538, 16
        %v4434 = vrot.slane %v4432, 4
        %v4435 = vor.u32 %v4434, %v4430
        %v4436 = vrot.slane %v4435, 4
        %v4438 = vshll.u32 %v3539, 16
        %v4440 = vrot.slane %v4438, 5
        %v4441 = vsel %vm324, %v4436, %v4440
        %v4442 = vshrl.u32 %v3539, 16
        %v4444 = vrot.slane %v4442, 4
        %v4445 = vor.u32 %v4444, %v4440
        %v4446 = vrot.slane %v4445, 4
        %v4448 = vshll.u32 %v3540, 16
        %v4450 = vrot.slane %v4448, 5
        %v4451 = vsel %vm324, %v4446, %v4450
        %v4452 = vshrl.u32 %v3540, 16
        %v4454 = vrot.slane %v4452, 4
        %v4455 = vor.u32 %v4454, %v4450
        %v4456 = vrot.slane %v4455, 4
        %v4458 = vshll.u32 %v3541, 16
        %v4460 = vrot.slane %v4458, 5
        %v4461 = vsel %vm324, %v4456, %v4460
        %v4462 = vshrl.u32 %v3541, 16
        %v4464 = vrot.slane %v4462, 4
        %v4465 = vor.u32 %v4464, %v4460
        %v4466 = vrot.slane %v4465, 4
        %v4468 = vshll.u32 %v3542, 16
        %v4470 = vrot.slane %v4468, 5
        %v4471 = vsel %vm324, %v4466, %v4470
        %v4472 = vshrl.u32 %v3542, 16
        %v4474 = vrot.slane %v4472, 4
        %v4475 = vor.u32 %v4474, %v4470
        %v4476 = vrot.slane %v4475, 4
        %v4478 = vshll.u32 %v3543, 16
        %v4480 = vrot.slane %v4478, 5
        %v4481 = vsel %vm324, %v4476, %v4480
        %v4482 = vshrl.u32 %v3543, 16
        %v4484 = vrot.slane %v4482, 4
        %v4485 = vor.u32 %v4484, %v4480
        %v4486 = vrot.slane %v4485, 4
        %v4488 = vshll.u32 %v3544, 16
        %v4490 = vrot.slane %v4488, 5
        %v4491 = vsel %vm324, %v4486, %v4490
        %v4492 = vshrl.u32 %v3544, 16
        %v4494 = vrot.slane %v4492, 4
        %v4495 = vor.u32 %v4494, %v4490
        %v4496 = vrot.slane %v4495, 4
        %v4498 = vshll.u32 %v3545, 16
        %v4500 = vrot.slane %v4498, 5
        %v4501 = vsel %vm324, %v4496, %v4500
        %v4502 = vshrl.u32 %v3545, 16
        %v4504 = vrot.slane %v4502, 4
        %v4505 = vor.u32 %v4504, %v4500
        %v4506 = vrot.slane %v4505, 4
        %v4508 = vshll.u32 %v3546, 16
        %v4510 = vrot.slane %v4508, 5
        %v4511 = vsel %vm324, %v4506, %v4510
        %4512 = vrot.lane.b32.xlu0 %v3881, 56
        %v4513 = vpop.permute.xlu0 %4512
        %4514 = vrot.lane.b32.xlu0 %v3891, 56
        %v4515 = vpop.permute.xlu0 %4514
        %4516 = vrot.lane.b32.xlu0 %v3901, 56
        %v4517 = vpop.permute.xlu0 %4516
        %4518 = vrot.lane.b32.xlu0 %v3911, 56
        %v4519 = vpop.permute.xlu0 %4518
        %4520 = vrot.lane.b32.xlu0 %v3921, 56
        %v4521 = vpop.permute.xlu0 %4520
        %4522 = vrot.lane.b32.xlu0 %v3931, 56
        %v4523 = vpop.permute.xlu0 %4522
        %4524 = vrot.lane.b32.xlu0 %v3941, 56
        %v4525 = vpop.permute.xlu0 %4524
        %4526 = vrot.lane.b32.xlu0 %v3951, 56
        %v4527 = vpop.permute.xlu0 %4526
        %4528 = vrot.lane.b32.xlu0 %v3961, 56
        %v4529 = vpop.permute.xlu0 %4528
        %4530 = vrot.lane.b32.xlu0 %v3971, 56
        %v4531 = vpop.permute.xlu0 %4530
        %4532 = vrot.lane.b32.xlu0 %v3981, 56
        %v4533 = vpop.permute.xlu0 %4532
        %4534 = vrot.lane.b32.xlu0 %v3991, 56
        %v4535 = vpop.permute.xlu0 %4534
        %4536 = vrot.lane.b32.xlu0 %v4001, 56
        %v4537 = vpop.permute.xlu0 %4536
        %4538 = vrot.lane.b32.xlu0 %v4011, 56
        %v4539 = vpop.permute.xlu0 %4538
        %4540 = vrot.lane.b32.xlu0 %v4021, 56
        %v4541 = vpop.permute.xlu0 %4540
        %4542 = vrot.lane.b32.xlu0 %v4031, 56
        %v4543 = vpop.permute.xlu0 %4542
        %4544 = vrot.lane.b32.xlu0 %v4041, 56
        %v4545 = vpop.permute.xlu0 %4544
        %4546 = vrot.lane.b32.xlu0 %v4051, 56
        %v4547 = vpop.permute.xlu0 %4546
        %4548 = vrot.lane.b32.xlu0 %v4061, 56
        %v4549 = vpop.permute.xlu0 %4548
        %4550 = vrot.lane.b32.xlu0 %v4071, 56
        %v4551 = vpop.permute.xlu0 %4550
        %4552 = vrot.lane.b32.xlu0 %v4081, 56
        %v4553 = vpop.permute.xlu0 %4552
        %4554 = vrot.lane.b32.xlu0 %v4091, 56
        %v4555 = vpop.permute.xlu0 %4554
        %4556 = vrot.lane.b32.xlu0 %v4101, 56
        %v4557 = vpop.permute.xlu0 %4556
        %4558 = vrot.lane.b32.xlu0 %v4111, 56
        %v4559 = vpop.permute.xlu0 %4558
        %4560 = vrot.lane.b32.xlu0 %v4121, 56
        %v4561 = vpop.permute.xlu0 %4560
        %4562 = vrot.lane.b32.xlu0 %v4131, 56
        %v4563 = vpop.permute.xlu0 %4562
        %4564 = vrot.lane.b32.xlu0 %v4141, 56
        %v4565 = vpop.permute.xlu0 %4564
        %4566 = vrot.lane.b32.xlu0 %v4151, 56
        %v4567 = vpop.permute.xlu0 %4566
        %4568 = vrot.lane.b32.xlu0 %v4161, 56
        %v4569 = vpop.permute.xlu0 %4568
        %4570 = vrot.lane.b32.xlu0 %v4171, 56
        %v4571 = vpop.permute.xlu0 %4570
        %4572 = vrot.lane.b32.xlu0 %v4181, 56
        %v4573 = vpop.permute.xlu0 %4572
        %4574 = vrot.lane.b32.xlu0 %v4191, 56
        %v4575 = vpop.permute.xlu0 %4574
        %4576 = vrot.lane.b32.xlu0 %v4201, 56
        %v4577 = vpop.permute.xlu0 %4576
        %4578 = vrot.lane.b32.xlu0 %v4211, 56
        %v4579 = vpop.permute.xlu0 %4578
        %4580 = vrot.lane.b32.xlu0 %v4221, 56
        %v4581 = vpop.permute.xlu0 %4580
        %4582 = vrot.lane.b32.xlu0 %v4231, 56
        %v4583 = vpop.permute.xlu0 %4582
        %4584 = vrot.lane.b32.xlu0 %v4241, 56
        %v4585 = vpop.permute.xlu0 %4584
        %4586 = vrot.lane.b32.xlu0 %v4251, 56
        %v4587 = vpop.permute.xlu0 %4586
        %4588 = vrot.lane.b32.xlu0 %v4261, 56
        %v4589 = vpop.permute.xlu0 %4588
        %4590 = vrot.lane.b32.xlu0 %v4271, 56
        %v4591 = vpop.permute.xlu0 %4590
        %4592 = vrot.lane.b32.xlu0 %v4281, 56
        %v4593 = vpop.permute.xlu0 %4592
        %4594 = vrot.lane.b32.xlu0 %v4291, 56
        %v4595 = vpop.permute.xlu0 %4594
        %4596 = vrot.lane.b32.xlu0 %v4301, 56
        %v4597 = vpop.permute.xlu0 %4596
        %4598 = vrot.lane.b32.xlu0 %v4311, 56
        %v4599 = vpop.permute.xlu0 %4598
        %4600 = vrot.lane.b32.xlu0 %v4321, 56
        %v4601 = vpop.permute.xlu0 %4600
        %4602 = vrot.lane.b32.xlu0 %v4331, 56
        %v4603 = vpop.permute.xlu0 %4602
        %4604 = vrot.lane.b32.xlu0 %v4341, 56
        %v4605 = vpop.permute.xlu0 %4604
        %4606 = vrot.lane.b32.xlu0 %v4351, 56
        %v4607 = vpop.permute.xlu0 %4606
        %4608 = vrot.lane.b32.xlu0 %v4361, 56
        %v4609 = vpop.permute.xlu0 %4608
        %4610 = vrot.lane.b32.xlu0 %v4371, 56
        %v4611 = vpop.permute.xlu0 %4610
        %4612 = vrot.lane.b32.xlu0 %v4381, 56
        %v4613 = vpop.permute.xlu0 %4612
        %4614 = vrot.lane.b32.xlu0 %v4391, 56
        %v4615 = vpop.permute.xlu0 %4614
        %4616 = vrot.lane.b32.xlu0 %v4401, 56
        %v4617 = vpop.permute.xlu0 %4616
        %4618 = vrot.lane.b32.xlu0 %v4411, 56
        %v4619 = vpop.permute.xlu0 %4618
        %4620 = vrot.lane.b32.xlu0 %v4421, 56
        %v4621 = vpop.permute.xlu0 %4620
        %4622 = vrot.lane.b32.xlu0 %v4431, 56
        %v4623 = vpop.permute.xlu0 %4622
        %4624 = vrot.lane.b32.xlu0 %v4441, 56
        %v4625 = vpop.permute.xlu0 %4624
        %4626 = vrot.lane.b32.xlu0 %v4451, 56
        %v4627 = vpop.permute.xlu0 %4626
        %4628 = vrot.lane.b32.xlu0 %v4461, 56
        %v4629 = vpop.permute.xlu0 %4628
        %4630 = vrot.lane.b32.xlu0 %v4471, 56
        %v4631 = vpop.permute.xlu0 %4630
        %4632 = vrot.lane.b32.xlu0 %v4481, 56
        %v4633 = vpop.permute.xlu0 %4632
        %4634 = vrot.lane.b32.xlu0 %v4491, 56
        %v4635 = vpop.permute.xlu0 %4634
        %4636 = vrot.lane.b32.xlu0 %v4501, 56
        %v4637 = vpop.permute.xlu0 %4636
        %4638 = vrot.lane.b32.xlu0 %v4511, 56
        %v4639 = vpop.permute.xlu0 %4638
        %vm4704 = vcmask 519616
        %4705 = vst.msk [vmem:[#allocation2] sm:$0xf] %vm4704, %v4513
        %4706 = vst.msk [vmem:[#allocation2 + $0x4] sm:$0xf] %vm4704, %v4515
        %4707 = vst.msk [vmem:[#allocation2 + $0x8] sm:$0xf] %vm4704, %v4517
        %4708 = vst.msk [vmem:[#allocation2 + $0xc] sm:$0xf] %vm4704, %v4519
        %4709 = vst.msk [vmem:[#allocation2 + $0x10] sm:$0xf] %vm4704, %v4521
        %4710 = vst.msk [vmem:[#allocation2 + $0x14] sm:$0xf] %vm4704, %v4523
        %4711 = vst.msk [vmem:[#allocation2 + $0x18] sm:$0xf] %vm4704, %v4525
        %4712 = vst.msk [vmem:[#allocation2 + $0x1c] sm:$0xf] %vm4704, %v4527
        %4713 = vst.msk [vmem:[#allocation2 + $0x20] sm:$0xf] %vm4704, %v4529
        %4714 = vst.msk [vmem:[#allocation2 + $0x24] sm:$0xf] %vm4704, %v4531
        %4715 = vst.msk [vmem:[#allocation2 + $0x28] sm:$0xf] %vm4704, %v4533
        %4716 = vst.msk [vmem:[#allocation2 + $0x2c] sm:$0xf] %vm4704, %v4535
        %4717 = vst.msk [vmem:[#allocation2 + $0x30] sm:$0xf] %vm4704, %v4537
        %4718 = vst.msk [vmem:[#allocation2 + $0x34] sm:$0xf] %vm4704, %v4539
        %4719 = vst.msk [vmem:[#allocation2 + $0x38] sm:$0xf] %vm4704, %v4541
        %4720 = vst.msk [vmem:[#allocation2 + $0x3c] sm:$0xf] %vm4704, %v4543
        %4721 = vst.msk [vmem:[#allocation2 + $0x40] sm:$0xf] %vm4704, %v4545
        %4722 = vst.msk [vmem:[#allocation2 + $0x44] sm:$0xf] %vm4704, %v4547
        %4723 = vst.msk [vmem:[#allocation2 + $0x48] sm:$0xf] %vm4704, %v4549
        %4724 = vst.msk [vmem:[#allocation2 + $0x4c] sm:$0xf] %vm4704, %v4551
        %4725 = vst.msk [vmem:[#allocation2 + $0x50] sm:$0xf] %vm4704, %v4553
        %4726 = vst.msk [vmem:[#allocation2 + $0x54] sm:$0xf] %vm4704, %v4555
        %4727 = vst.msk [vmem:[#allocation2 + $0x58] sm:$0xf] %vm4704, %v4557
        %4728 = vst.msk [vmem:[#allocation2 + $0x5c] sm:$0xf] %vm4704, %v4559
        %4729 = vst.msk [vmem:[#allocation2 + $0x60] sm:$0xf] %vm4704, %v4561
        %4730 = vst.msk [vmem:[#allocation2 + $0x64] sm:$0xf] %vm4704, %v4563
        %4731 = vst.msk [vmem:[#allocation2 + $0x68] sm:$0xf] %vm4704, %v4565
        %4732 = vst.msk [vmem:[#allocation2 + $0x6c] sm:$0xf] %vm4704, %v4567
        %4733 = vst.msk [vmem:[#allocation2 + $0x70] sm:$0xf] %vm4704, %v4569
        %4734 = vst.msk [vmem:[#allocation2 + $0x74] sm:$0xf] %vm4704, %v4571
        %4735 = vst.msk [vmem:[#allocation2 + $0x78] sm:$0xf] %vm4704, %v4573
        %4736 = vst.msk [vmem:[#allocation2 + $0x7c] sm:$0xf] %vm4704, %v4575
        %4737 = vst.msk [vmem:[#allocation2 + $0x80] sm:$0xf] %vm4704, %v4577
        %4738 = vst.msk [vmem:[#allocation2 + $0x84] sm:$0xf] %vm4704, %v4579
        %4739 = vst.msk [vmem:[#allocation2 + $0x88] sm:$0xf] %vm4704, %v4581
        %4740 = vst.msk [vmem:[#allocation2 + $0x8c] sm:$0xf] %vm4704, %v4583
        %4741 = vst.msk [vmem:[#allocation2 + $0x90] sm:$0xf] %vm4704, %v4585
        %4742 = vst.msk [vmem:[#allocation2 + $0x94] sm:$0xf] %vm4704, %v4587
        %4743 = vst.msk [vmem:[#allocation2 + $0x98] sm:$0xf] %vm4704, %v4589
        %4744 = vst.msk [vmem:[#allocation2 + $0x9c] sm:$0xf] %vm4704, %v4591
        %4745 = vst.msk [vmem:[#allocation2 + $0xa0] sm:$0xf] %vm4704, %v4593
        %4746 = vst.msk [vmem:[#allocation2 + $0xa4] sm:$0xf] %vm4704, %v4595
        %4747 = vst.msk [vmem:[#allocation2 + $0xa8] sm:$0xf] %vm4704, %v4597
        %4748 = vst.msk [vmem:[#allocation2 + $0xac] sm:$0xf] %vm4704, %v4599
        %4749 = vst.msk [vmem:[#allocation2 + $0xb0] sm:$0xf] %vm4704, %v4601
        %4750 = vst.msk [vmem:[#allocation2 + $0xb4] sm:$0xf] %vm4704, %v4603
        %4751 = vst.msk [vmem:[#allocation2 + $0xb8] sm:$0xf] %vm4704, %v4605
        %4752 = vst.msk [vmem:[#allocation2 + $0xbc] sm:$0xf] %vm4704, %v4607
        %4753 = vst.msk [vmem:[#allocation2 + $0xc0] sm:$0xf] %vm4704, %v4609
        %4754 = vst.msk [vmem:[#allocation2 + $0xc4] sm:$0xf] %vm4704, %v4611
        %4755 = vst.msk [vmem:[#allocation2 + $0xc8] sm:$0xf] %vm4704, %v4613
        %4756 = vst.msk [vmem:[#allocation2 + $0xcc] sm:$0xf] %vm4704, %v4615
        %4757 = vst.msk [vmem:[#allocation2 + $0xd0] sm:$0xf] %vm4704, %v4617
        %4758 = vst.msk [vmem:[#allocation2 + $0xd4] sm:$0xf] %vm4704, %v4619
        %4759 = vst.msk [vmem:[#allocation2 + $0xd8] sm:$0xf] %vm4704, %v4621
        %4760 = vst.msk [vmem:[#allocation2 + $0xdc] sm:$0xf] %vm4704, %v4623
        %4761 = vst.msk [vmem:[#allocation2 + $0xe0] sm:$0xf] %vm4704, %v4625
        %4762 = vst.msk [vmem:[#allocation2 + $0xe4] sm:$0xf] %vm4704, %v4627
        %4763 = vst.msk [vmem:[#allocation2 + $0xe8] sm:$0xf] %vm4704, %v4629
        %4764 = vst.msk [vmem:[#allocation2 + $0xec] sm:$0xf] %vm4704, %v4631
        %4765 = vst.msk [vmem:[#allocation2 + $0xf0] sm:$0xf] %vm4704, %v4633
        %4766 = vst.msk [vmem:[#allocation2 + $0xf4] sm:$0xf] %vm4704, %v4635
        %4767 = vst.msk [vmem:[#allocation2 + $0xf8] sm:$0xf] %vm4704, %v4637
        %4768 = vst.msk [vmem:[#allocation2 + $0xfc] sm:$0xf] %vm4704, %v4639
        %v4770 = vrot.slane %v3482, 5
        %v4771 = vrot.slane %v4770, 4
        %v4772 = vrot.slane %v3483, 5
        %v4773 = vsel %vm1293, %v4771, %v4772
        %v4774 = vrot.slane %v4772, 4
        %v4775 = vrot.slane %v3484, 5
        %v4776 = vsel %vm1293, %v4774, %v4775
        %v4777 = vrot.slane %v4775, 4
        %v4778 = vrot.slane %v3485, 5
        %v4779 = vsel %vm1293, %v4777, %v4778
        %v4780 = vrot.slane %v4778, 4
        %v4781 = vrot.slane %v3486, 5
        %v4782 = vsel %vm1293, %v4780, %v4781
        %v4783 = vrot.slane %v4781, 4
        %v4784 = vrot.slane %v3487, 5
        %v4785 = vsel %vm1293, %v4783, %v4784
        %v4786 = vrot.slane %v4784, 4
        %v4787 = vrot.slane %v3488, 5
        %v4788 = vsel %vm1293, %v4786, %v4787
        %v4789 = vrot.slane %v4787, 4
        %v4790 = vrot.slane %v3489, 5
        %v4791 = vsel %vm1293, %v4789, %v4790
        %v4792 = vrot.slane %v4790, 4
        %v4793 = vrot.slane %v3490, 5
        %v4794 = vsel %vm1293, %v4792, %v4793
        %v4795 = vrot.slane %v4793, 4
        %v4796 = vrot.slane %v3491, 5
        %v4797 = vsel %vm1293, %v4795, %v4796
        %v4798 = vrot.slane %v4796, 4
        %v4799 = vrot.slane %v3492, 5
        %v4800 = vsel %vm1293, %v4798, %v4799
        %v4801 = vrot.slane %v4799, 4
        %v4802 = vrot.slane %v3493, 5
        %v4803 = vsel %vm1293, %v4801, %v4802
        %v4804 = vrot.slane %v4802, 4
        %v4805 = vrot.slane %v3494, 5
        %v4806 = vsel %vm1293, %v4804, %v4805
        %v4807 = vrot.slane %v4805, 4
        %v4808 = vrot.slane %v3495, 5
        %v4809 = vsel %vm1293, %v4807, %v4808
        %v4810 = vrot.slane %v4808, 4
        %v4811 = vrot.slane %v3496, 5
        %v4812 = vsel %vm1293, %v4810, %v4811
        %v4813 = vrot.slane %v4811, 4
        %v4814 = vrot.slane %v3497, 5
        %v4815 = vsel %vm1293, %v4813, %v4814
        %v4816 = vrot.slane %v4814, 4
        %v4817 = vrot.slane %v3498, 5
        %v4818 = vsel %vm1293, %v4816, %v4817
        %v4819 = vrot.slane %v4817, 4
        %v4820 = vrot.slane %v3499, 5
        %v4821 = vsel %vm1293, %v4819, %v4820
        %v4822 = vrot.slane %v4820, 4
        %v4823 = vrot.slane %v3500, 5
        %v4824 = vsel %vm1293, %v4822, %v4823
        %v4825 = vrot.slane %v4823, 4
        %v4826 = vrot.slane %v3501, 5
        %v4827 = vsel %vm1293, %v4825, %v4826
        %v4828 = vrot.slane %v4826, 4
        %v4829 = vrot.slane %v3502, 5
        %v4830 = vsel %vm1293, %v4828, %v4829
        %v4831 = vrot.slane %v4829, 4
        %v4832 = vrot.slane %v3503, 5
        %v4833 = vsel %vm1293, %v4831, %v4832
        %v4834 = vrot.slane %v4832, 4
        %v4835 = vrot.slane %v3504, 5
        %v4836 = vsel %vm1293, %v4834, %v4835
        %v4837 = vrot.slane %v4835, 4
        %v4838 = vrot.slane %v3505, 5
        %v4839 = vsel %vm1293, %v4837, %v4838
        %v4840 = vrot.slane %v4838, 4
        %v4841 = vrot.slane %v3506, 5
        %v4842 = vsel %vm1293, %v4840, %v4841
        %v4843 = vrot.slane %v4841, 4
        %v4844 = vrot.slane %v3507, 5
        %v4845 = vsel %vm1293, %v4843, %v4844
        %v4846 = vrot.slane %v4844, 4
        %v4847 = vrot.slane %v3508, 5
        %v4848 = vsel %vm1293, %v4846, %v4847
        %v4849 = vrot.slane %v4847, 4
        %v4850 = vrot.slane %v3509, 5
        %v4851 = vsel %vm1293, %v4849, %v4850
        %v4852 = vrot.slane %v4850, 4
        %v4853 = vrot.slane %v3510, 5
        %v4854 = vsel %vm1293, %v4852, %v4853
        %v4855 = vrot.slane %v4853, 4
        %v4856 = vrot.slane %v3511, 5
        %v4857 = vsel %vm1293, %v4855, %v4856
        %v4858 = vrot.slane %v4856, 4
        %v4859 = vrot.slane %v3512, 5
        %v4860 = vsel %vm1293, %v4858, %v4859
        %v4861 = vrot.slane %v4859, 4
        %v4862 = vrot.slane %v3513, 5
        %v4863 = vsel %vm1293, %v4861, %v4862
        %v4864 = vrot.slane %v4862, 4
        %v4865 = vrot.slane %v3514, 5
        %v4866 = vsel %vm1293, %v4864, %v4865
        %v4867 = vrot.slane %v4865, 4
        %v4868 = vrot.slane %v3515, 5
        %v4869 = vsel %vm1293, %v4867, %v4868
        %v4870 = vrot.slane %v4868, 4
        %v4871 = vrot.slane %v3516, 5
        %v4872 = vsel %vm1293, %v4870, %v4871
        %v4873 = vrot.slane %v4871, 4
        %v4874 = vrot.slane %v3517, 5
        %v4875 = vsel %vm1293, %v4873, %v4874
        %v4876 = vrot.slane %v4874, 4
        %v4877 = vrot.slane %v3518, 5
        %v4878 = vsel %vm1293, %v4876, %v4877
        %v4879 = vrot.slane %v4877, 4
        %v4880 = vrot.slane %v3519, 5
        %v4881 = vsel %vm1293, %v4879, %v4880
        %v4882 = vrot.slane %v4880, 4
        %v4883 = vrot.slane %v3520, 5
        %v4884 = vsel %vm1293, %v4882, %v4883
        %v4885 = vrot.slane %v4883, 4
        %v4886 = vrot.slane %v3521, 5
        %v4887 = vsel %vm1293, %v4885, %v4886
        %v4888 = vrot.slane %v4886, 4
        %v4889 = vrot.slane %v3522, 5
        %v4890 = vsel %vm1293, %v4888, %v4889
        %v4891 = vrot.slane %v4889, 4
        %v4892 = vrot.slane %v3523, 5
        %v4893 = vsel %vm1293, %v4891, %v4892
        %v4894 = vrot.slane %v4892, 4
        %v4895 = vrot.slane %v3524, 5
        %v4896 = vsel %vm1293, %v4894, %v4895
        %v4897 = vrot.slane %v4895, 4
        %v4898 = vrot.slane %v3525, 5
        %v4899 = vsel %vm1293, %v4897, %v4898
        %v4900 = vrot.slane %v4898, 4
        %v4901 = vrot.slane %v3526, 5
        %v4902 = vsel %vm1293, %v4900, %v4901
        %v4903 = vrot.slane %v4901, 4
        %v4904 = vrot.slane %v3527, 5
        %v4905 = vsel %vm1293, %v4903, %v4904
        %v4906 = vrot.slane %v4904, 4
        %v4907 = vrot.slane %v3528, 5
        %v4908 = vsel %vm1293, %v4906, %v4907
        %v4909 = vrot.slane %v4907, 4
        %v4910 = vrot.slane %v3529, 5
        %v4911 = vsel %vm1293, %v4909, %v4910
        %v4912 = vrot.slane %v4910, 4
        %v4913 = vrot.slane %v3530, 5
        %v4914 = vsel %vm1293, %v4912, %v4913
        %v4915 = vrot.slane %v4913, 4
        %v4916 = vrot.slane %v3531, 5
        %v4917 = vsel %vm1293, %v4915, %v4916
        %v4918 = vrot.slane %v4916, 4
        %v4919 = vrot.slane %v3532, 5
        %v4920 = vsel %vm1293, %v4918, %v4919
        %v4921 = vrot.slane %v4919, 4
        %v4922 = vrot.slane %v3533, 5
        %v4923 = vsel %vm1293, %v4921, %v4922
        %v4924 = vrot.slane %v4922, 4
        %v4925 = vrot.slane %v3534, 5
        %v4926 = vsel %vm1293, %v4924, %v4925
        %v4927 = vrot.slane %v4925, 4
        %v4928 = vrot.slane %v3535, 5
        %v4929 = vsel %vm1293, %v4927, %v4928
        %v4930 = vrot.slane %v4928, 4
        %v4931 = vrot.slane %v3536, 5
        %v4932 = vsel %vm1293, %v4930, %v4931
        %v4933 = vrot.slane %v4931, 4
        %v4934 = vrot.slane %v3537, 5
        %v4935 = vsel %vm1293, %v4933, %v4934
        %v4936 = vrot.slane %v4934, 4
        %v4937 = vrot.slane %v3538, 5
        %v4938 = vsel %vm1293, %v4936, %v4937
        %v4939 = vrot.slane %v4937, 4
        %v4940 = vrot.slane %v3539, 5
        %v4941 = vsel %vm1293, %v4939, %v4940
        %v4942 = vrot.slane %v4940, 4
        %v4943 = vrot.slane %v3540, 5
        %v4944 = vsel %vm1293, %v4942, %v4943
        %v4945 = vrot.slane %v4943, 4
        %v4946 = vrot.slane %v3541, 5
        %v4947 = vsel %vm1293, %v4945, %v4946
        %v4948 = vrot.slane %v4946, 4
        %v4949 = vrot.slane %v3542, 5
        %v4950 = vsel %vm1293, %v4948, %v4949
        %v4951 = vrot.slane %v4949, 4
        %v4952 = vrot.slane %v3543, 5
        %v4953 = vsel %vm1293, %v4951, %v4952
        %v4954 = vrot.slane %v4952, 4
        %v4955 = vrot.slane %v3544, 5
        %v4956 = vsel %vm1293, %v4954, %v4955
        %v4957 = vrot.slane %v4955, 4
        %v4958 = vrot.slane %v3545, 5
        %v4959 = vsel %vm1293, %v4957, %v4958
        %v4960 = vrot.slane %v4958, 4
        %v4961 = vrot.slane %v3546, 5
        %v4962 = vsel %vm1293, %v4960, %v4961
        %4963 = vrot.lane.b32.xlu0 %v4773, 64
        %v4964 = vpop.permute.xlu0 %4963
        %4965 = vrot.lane.b32.xlu0 %v4776, 64
        %v4966 = vpop.permute.xlu0 %4965
        %4967 = vrot.lane.b32.xlu0 %v4779, 64
        %v4968 = vpop.permute.xlu0 %4967
        %4969 = vrot.lane.b32.xlu0 %v4782, 64
        %v4970 = vpop.permute.xlu0 %4969
        %4971 = vrot.lane.b32.xlu0 %v4785, 64
        %v4972 = vpop.permute.xlu0 %4971
        %4973 = vrot.lane.b32.xlu0 %v4788, 64
        %v4974 = vpop.permute.xlu0 %4973
        %4975 = vrot.lane.b32.xlu0 %v4791, 64
        %v4976 = vpop.permute.xlu0 %4975
        %4977 = vrot.lane.b32.xlu0 %v4794, 64
        %v4978 = vpop.permute.xlu0 %4977
        %4979 = vrot.lane.b32.xlu0 %v4797, 64
        %v4980 = vpop.permute.xlu0 %4979
        %4981 = vrot.lane.b32.xlu0 %v4800, 64
        %v4982 = vpop.permute.xlu0 %4981
        %4983 = vrot.lane.b32.xlu0 %v4803, 64
        %v4984 = vpop.permute.xlu0 %4983
        %4985 = vrot.lane.b32.xlu0 %v4806, 64
        %v4986 = vpop.permute.xlu0 %4985
        %4987 = vrot.lane.b32.xlu0 %v4809, 64
        %v4988 = vpop.permute.xlu0 %4987
        %4989 = vrot.lane.b32.xlu0 %v4812, 64
        %v4990 = vpop.permute.xlu0 %4989
        %4991 = vrot.lane.b32.xlu0 %v4815, 64
        %v4992 = vpop.permute.xlu0 %4991
        %4993 = vrot.lane.b32.xlu0 %v4818, 64
        %v4994 = vpop.permute.xlu0 %4993
        %4995 = vrot.lane.b32.xlu0 %v4821, 64
        %v4996 = vpop.permute.xlu0 %4995
        %4997 = vrot.lane.b32.xlu0 %v4824, 64
        %v4998 = vpop.permute.xlu0 %4997
        %4999 = vrot.lane.b32.xlu0 %v4827, 64
        %v5000 = vpop.permute.xlu0 %4999
        %5001 = vrot.lane.b32.xlu0 %v4830, 64
        %v5002 = vpop.permute.xlu0 %5001
        %5003 = vrot.lane.b32.xlu0 %v4833, 64
        %v5004 = vpop.permute.xlu0 %5003
        %5005 = vrot.lane.b32.xlu0 %v4836, 64
        %v5006 = vpop.permute.xlu0 %5005
        %5007 = vrot.lane.b32.xlu0 %v4839, 64
        %v5008 = vpop.permute.xlu0 %5007
        %5009 = vrot.lane.b32.xlu0 %v4842, 64
        %v5010 = vpop.permute.xlu0 %5009
        %5011 = vrot.lane.b32.xlu0 %v4845, 64
        %v5012 = vpop.permute.xlu0 %5011
        %5013 = vrot.lane.b32.xlu0 %v4848, 64
        %v5014 = vpop.permute.xlu0 %5013
        %5015 = vrot.lane.b32.xlu0 %v4851, 64
        %v5016 = vpop.permute.xlu0 %5015
        %5017 = vrot.lane.b32.xlu0 %v4854, 64
        %v5018 = vpop.permute.xlu0 %5017
        %5019 = vrot.lane.b32.xlu0 %v4857, 64
        %v5020 = vpop.permute.xlu0 %5019
        %5021 = vrot.lane.b32.xlu0 %v4860, 64
        %v5022 = vpop.permute.xlu0 %5021
        %5023 = vrot.lane.b32.xlu0 %v4863, 64
        %v5024 = vpop.permute.xlu0 %5023
        %5025 = vrot.lane.b32.xlu0 %v4866, 64
        %v5026 = vpop.permute.xlu0 %5025
        %5027 = vrot.lane.b32.xlu0 %v4869, 64
        %v5028 = vpop.permute.xlu0 %5027
        %5029 = vrot.lane.b32.xlu0 %v4872, 64
        %v5030 = vpop.permute.xlu0 %5029
        %5031 = vrot.lane.b32.xlu0 %v4875, 64
        %v5032 = vpop.permute.xlu0 %5031
        %5033 = vrot.lane.b32.xlu0 %v4878, 64
        %v5034 = vpop.permute.xlu0 %5033
        %5035 = vrot.lane.b32.xlu0 %v4881, 64
        %v5036 = vpop.permute.xlu0 %5035
        %5037 = vrot.lane.b32.xlu0 %v4884, 64
        %v5038 = vpop.permute.xlu0 %5037
        %5039 = vrot.lane.b32.xlu0 %v4887, 64
        %v5040 = vpop.permute.xlu0 %5039
        %5041 = vrot.lane.b32.xlu0 %v4890, 64
        %v5042 = vpop.permute.xlu0 %5041
        %5043 = vrot.lane.b32.xlu0 %v4893, 64
        %v5044 = vpop.permute.xlu0 %5043
        %5045 = vrot.lane.b32.xlu0 %v4896, 64
        %v5046 = vpop.permute.xlu0 %5045
        %5047 = vrot.lane.b32.xlu0 %v4899, 64
        %v5048 = vpop.permute.xlu0 %5047
        %5049 = vrot.lane.b32.xlu0 %v4902, 64
        %v5050 = vpop.permute.xlu0 %5049
        %5051 = vrot.lane.b32.xlu0 %v4905, 64
        %v5052 = vpop.permute.xlu0 %5051
        %5053 = vrot.lane.b32.xlu0 %v4908, 64
        %v5054 = vpop.permute.xlu0 %5053
        %5055 = vrot.lane.b32.xlu0 %v4911, 64
        %v5056 = vpop.permute.xlu0 %5055
        %5057 = vrot.lane.b32.xlu0 %v4914, 64
        %v5058 = vpop.permute.xlu0 %5057
        %5059 = vrot.lane.b32.xlu0 %v4917, 64
        %v5060 = vpop.permute.xlu0 %5059
        %5061 = vrot.lane.b32.xlu0 %v4920, 64
        %v5062 = vpop.permute.xlu0 %5061
        %5063 = vrot.lane.b32.xlu0 %v4923, 64
        %v5064 = vpop.permute.xlu0 %5063
        %5065 = vrot.lane.b32.xlu0 %v4926, 64
        %v5066 = vpop.permute.xlu0 %5065
        %5067 = vrot.lane.b32.xlu0 %v4929, 64
        %v5068 = vpop.permute.xlu0 %5067
        %5069 = vrot.lane.b32.xlu0 %v4932, 64
        %v5070 = vpop.permute.xlu0 %5069
        %5071 = vrot.lane.b32.xlu0 %v4935, 64
        %v5072 = vpop.permute.xlu0 %5071
        %5073 = vrot.lane.b32.xlu0 %v4938, 64
        %v5074 = vpop.permute.xlu0 %5073
        %5075 = vrot.lane.b32.xlu0 %v4941, 64
        %v5076 = vpop.permute.xlu0 %5075
        %5077 = vrot.lane.b32.xlu0 %v4944, 64
        %v5078 = vpop.permute.xlu0 %5077
        %5079 = vrot.lane.b32.xlu0 %v4947, 64
        %v5080 = vpop.permute.xlu0 %5079
        %5081 = vrot.lane.b32.xlu0 %v4950, 64
        %v5082 = vpop.permute.xlu0 %5081
        %5083 = vrot.lane.b32.xlu0 %v4953, 64
        %v5084 = vpop.permute.xlu0 %5083
        %5085 = vrot.lane.b32.xlu0 %v4956, 64
        %v5086 = vpop.permute.xlu0 %5085
        %5087 = vrot.lane.b32.xlu0 %v4959, 64
        %v5088 = vpop.permute.xlu0 %5087
        %5089 = vrot.lane.b32.xlu0 %v4962, 64
        %v5090 = vpop.permute.xlu0 %5089
        %vm5155 = vcmask 585216
        %5156 = vst.msk [vmem:[#allocation2] sm:$0xf] %vm5155, %v4964
        %5157 = vst.msk [vmem:[#allocation2 + $0x4] sm:$0xf] %vm5155, %v4966
        %5158 = vst.msk [vmem:[#allocation2 + $0x8] sm:$0xf] %vm5155, %v4968
        %5159 = vst.msk [vmem:[#allocation2 + $0xc] sm:$0xf] %vm5155, %v4970
        %5160 = vst.msk [vmem:[#allocation2 + $0x10] sm:$0xf] %vm5155, %v4972
        %5161 = vst.msk [vmem:[#allocation2 + $0x14] sm:$0xf] %vm5155, %v4974
        %5162 = vst.msk [vmem:[#allocation2 + $0x18] sm:$0xf] %vm5155, %v4976
        %5163 = vst.msk [vmem:[#allocation2 + $0x1c] sm:$0xf] %vm5155, %v4978
        %5164 = vst.msk [vmem:[#allocation2 + $0x20] sm:$0xf] %vm5155, %v4980
        %5165 = vst.msk [vmem:[#allocation2 + $0x24] sm:$0xf] %vm5155, %v4982
        %5166 = vst.msk [vmem:[#allocation2 + $0x28] sm:$0xf] %vm5155, %v4984
        %5167 = vst.msk [vmem:[#allocation2 + $0x2c] sm:$0xf] %vm5155, %v4986
        %5168 = vst.msk [vmem:[#allocation2 + $0x30] sm:$0xf] %vm5155, %v4988
        %5169 = vst.msk [vmem:[#allocation2 + $0x34] sm:$0xf] %vm5155, %v4990
        %5170 = vst.msk [vmem:[#allocation2 + $0x38] sm:$0xf] %vm5155, %v4992
        %5171 = vst.msk [vmem:[#allocation2 + $0x3c] sm:$0xf] %vm5155, %v4994
        %5172 = vst.msk [vmem:[#allocation2 + $0x40] sm:$0xf] %vm5155, %v4996
        %5173 = vst.msk [vmem:[#allocation2 + $0x44] sm:$0xf] %vm5155, %v4998
        %5174 = vst.msk [vmem:[#allocation2 + $0x48] sm:$0xf] %vm5155, %v5000
        %5175 = vst.msk [vmem:[#allocation2 + $0x4c] sm:$0xf] %vm5155, %v5002
        %5176 = vst.msk [vmem:[#allocation2 + $0x50] sm:$0xf] %vm5155, %v5004
        %5177 = vst.msk [vmem:[#allocation2 + $0x54] sm:$0xf] %vm5155, %v5006
        %5178 = vst.msk [vmem:[#allocation2 + $0x58] sm:$0xf] %vm5155, %v5008
        %5179 = vst.msk [vmem:[#allocation2 + $0x5c] sm:$0xf] %vm5155, %v5010
        %5180 = vst.msk [vmem:[#allocation2 + $0x60] sm:$0xf] %vm5155, %v5012
        %5181 = vst.msk [vmem:[#allocation2 + $0x64] sm:$0xf] %vm5155, %v5014
        %5182 = vst.msk [vmem:[#allocation2 + $0x68] sm:$0xf] %vm5155, %v5016
        %5183 = vst.msk [vmem:[#allocation2 + $0x6c] sm:$0xf] %vm5155, %v5018
        %5184 = vst.msk [vmem:[#allocation2 + $0x70] sm:$0xf] %vm5155, %v5020
        %5185 = vst.msk [vmem:[#allocation2 + $0x74] sm:$0xf] %vm5155, %v5022
        %5186 = vst.msk [vmem:[#allocation2 + $0x78] sm:$0xf] %vm5155, %v5024
        %5187 = vst.msk [vmem:[#allocation2 + $0x7c] sm:$0xf] %vm5155, %v5026
        %5188 = vst.msk [vmem:[#allocation2 + $0x80] sm:$0xf] %vm5155, %v5028
        %5189 = vst.msk [vmem:[#allocation2 + $0x84] sm:$0xf] %vm5155, %v5030
        %5190 = vst.msk [vmem:[#allocation2 + $0x88] sm:$0xf] %vm5155, %v5032
        %5191 = vst.msk [vmem:[#allocation2 + $0x8c] sm:$0xf] %vm5155, %v5034
        %5192 = vst.msk [vmem:[#allocation2 + $0x90] sm:$0xf] %vm5155, %v5036
        %5193 = vst.msk [vmem:[#allocation2 + $0x94] sm:$0xf] %vm5155, %v5038
        %5194 = vst.msk [vmem:[#allocation2 + $0x98] sm:$0xf] %vm5155, %v5040
        %5195 = vst.msk [vmem:[#allocation2 + $0x9c] sm:$0xf] %vm5155, %v5042
        %5196 = vst.msk [vmem:[#allocation2 + $0xa0] sm:$0xf] %vm5155, %v5044
        %5197 = vst.msk [vmem:[#allocation2 + $0xa4] sm:$0xf] %vm5155, %v5046
        %5198 = vst.msk [vmem:[#allocation2 + $0xa8] sm:$0xf] %vm5155, %v5048
        %5199 = vst.msk [vmem:[#allocation2 + $0xac] sm:$0xf] %vm5155, %v5050
        %5200 = vst.msk [vmem:[#allocation2 + $0xb0] sm:$0xf] %vm5155, %v5052
        %5201 = vst.msk [vmem:[#allocation2 + $0xb4] sm:$0xf] %vm5155, %v5054
        %5202 = vst.msk [vmem:[#allocation2 + $0xb8] sm:$0xf] %vm5155, %v5056
        %5203 = vst.msk [vmem:[#allocation2 + $0xbc] sm:$0xf] %vm5155, %v5058
        %5204 = vst.msk [vmem:[#allocation2 + $0xc0] sm:$0xf] %vm5155, %v5060
        %5205 = vst.msk [vmem:[#allocation2 + $0xc4] sm:$0xf] %vm5155, %v5062
        %5206 = vst.msk [vmem:[#allocation2 + $0xc8] sm:$0xf] %vm5155, %v5064
        %5207 = vst.msk [vmem:[#allocation2 + $0xcc] sm:$0xf] %vm5155, %v5066
        %5208 = vst.msk [vmem:[#allocation2 + $0xd0] sm:$0xf] %vm5155, %v5068
        %5209 = vst.msk [vmem:[#allocation2 + $0xd4] sm:$0xf] %vm5155, %v5070
        %5210 = vst.msk [vmem:[#allocation2 + $0xd8] sm:$0xf] %vm5155, %v5072
        %5211 = vst.msk [vmem:[#allocation2 + $0xdc] sm:$0xf] %vm5155, %v5074
        %5212 = vst.msk [vmem:[#allocation2 + $0xe0] sm:$0xf] %vm5155, %v5076
        %5213 = vst.msk [vmem:[#allocation2 + $0xe4] sm:$0xf] %vm5155, %v5078
        %5214 = vst.msk [vmem:[#allocation2 + $0xe8] sm:$0xf] %vm5155, %v5080
        %5215 = vst.msk [vmem:[#allocation2 + $0xec] sm:$0xf] %vm5155, %v5082
        %5216 = vst.msk [vmem:[#allocation2 + $0xf0] sm:$0xf] %vm5155, %v5084
        %5217 = vst.msk [vmem:[#allocation2 + $0xf4] sm:$0xf] %vm5155, %v5086
        %5218 = vst.msk [vmem:[#allocation2 + $0xf8] sm:$0xf] %vm5155, %v5088
        %5219 = vst.msk [vmem:[#allocation2 + $0xfc] sm:$0xf] %vm5155, %v5090
        %v5220 = vld [vmem:[#allocation2] sm:$0xf]
        %v5221 = vld [vmem:[#allocation2 + $0x4] sm:$0xf]
        %v5222 = vld [vmem:[#allocation2 + $0x8] sm:$0xf]
        %v5223 = vld [vmem:[#allocation2 + $0xc] sm:$0xf]
        %v5224 = vld [vmem:[#allocation2 + $0x10] sm:$0xf]
        %v5225 = vld [vmem:[#allocation2 + $0x14] sm:$0xf]
        %v5226 = vld [vmem:[#allocation2 + $0x18] sm:$0xf]
        %v5227 = vld [vmem:[#allocation2 + $0x1c] sm:$0xf]
        %v5228 = vld [vmem:[#allocation2 + $0x20] sm:$0xf]
        %v5229 = vld [vmem:[#allocation2 + $0x24] sm:$0xf]
        %v5230 = vld [vmem:[#allocation2 + $0x28] sm:$0xf]
        %v5231 = vld [vmem:[#allocation2 + $0x2c] sm:$0xf]
        %v5232 = vld [vmem:[#allocation2 + $0x30] sm:$0xf]
        %v5233 = vld [vmem:[#allocation2 + $0x34] sm:$0xf]
        %v5234 = vld [vmem:[#allocation2 + $0x38] sm:$0xf]
        %v5235 = vld [vmem:[#allocation2 + $0x3c] sm:$0xf]
        %v5236 = vld [vmem:[#allocation2 + $0x40] sm:$0xf]
        %v5237 = vld [vmem:[#allocation2 + $0x44] sm:$0xf]
        %v5238 = vld [vmem:[#allocation2 + $0x48] sm:$0xf]
        %v5239 = vld [vmem:[#allocation2 + $0x4c] sm:$0xf]
        %v5240 = vld [vmem:[#allocation2 + $0x50] sm:$0xf]
        %v5241 = vld [vmem:[#allocation2 + $0x54] sm:$0xf]
        %v5242 = vld [vmem:[#allocation2 + $0x58] sm:$0xf]
        %v5243 = vld [vmem:[#allocation2 + $0x5c] sm:$0xf]
        %v5244 = vld [vmem:[#allocation2 + $0x60] sm:$0xf]
        %v5245 = vld [vmem:[#allocation2 + $0x64] sm:$0xf]
        %v5246 = vld [vmem:[#allocation2 + $0x68] sm:$0xf]
        %v5247 = vld [vmem:[#allocation2 + $0x6c] sm:$0xf]
        %v5248 = vld [vmem:[#allocation2 + $0x70] sm:$0xf]
        %v5249 = vld [vmem:[#allocation2 + $0x74] sm:$0xf]
        %v5250 = vld [vmem:[#allocation2 + $0x78] sm:$0xf]
        %v5251 = vld [vmem:[#allocation2 + $0x7c] sm:$0xf]
        %v5252 = vld [vmem:[#allocation2 + $0x80] sm:$0xf]
        %v5253 = vld [vmem:[#allocation2 + $0x84] sm:$0xf]
        %v5254 = vld [vmem:[#allocation2 + $0x88] sm:$0xf]
        %v5255 = vld [vmem:[#allocation2 + $0x8c] sm:$0xf]
        %v5256 = vld [vmem:[#allocation2 + $0x90] sm:$0xf]
        %v5257 = vld [vmem:[#allocation2 + $0x94] sm:$0xf]
        %v5258 = vld [vmem:[#allocation2 + $0x98] sm:$0xf]
        %v5259 = vld [vmem:[#allocation2 + $0x9c] sm:$0xf]
        %v5260 = vld [vmem:[#allocation2 + $0xa0] sm:$0xf]
        %v5261 = vld [vmem:[#allocation2 + $0xa4] sm:$0xf]
        %v5262 = vld [vmem:[#allocation2 + $0xa8] sm:$0xf]
        %v5263 = vld [vmem:[#allocation2 + $0xac] sm:$0xf]
        %v5264 = vld [vmem:[#allocation2 + $0xb0] sm:$0xf]
        %v5265 = vld [vmem:[#allocation2 + $0xb4] sm:$0xf]
        %v5266 = vld [vmem:[#allocation2 + $0xb8] sm:$0xf]
        %v5267 = vld [vmem:[#allocation2 + $0xbc] sm:$0xf]
        %v5268 = vld [vmem:[#allocation2 + $0xc0] sm:$0xf]
        %v5269 = vld [vmem:[#allocation2 + $0xc4] sm:$0xf]
        %v5270 = vld [vmem:[#allocation2 + $0xc8] sm:$0xf]
        %v5271 = vld [vmem:[#allocation2 + $0xcc] sm:$0xf]
        %v5272 = vld [vmem:[#allocation2 + $0xd0] sm:$0xf]
        %v5273 = vld [vmem:[#allocation2 + $0xd4] sm:$0xf]
        %v5274 = vld [vmem:[#allocation2 + $0xd8] sm:$0xf]
        %v5275 = vld [vmem:[#allocation2 + $0xdc] sm:$0xf]
        %v5276 = vld [vmem:[#allocation2 + $0xe0] sm:$0xf]
        %v5277 = vld [vmem:[#allocation2 + $0xe4] sm:$0xf]
        %v5278 = vld [vmem:[#allocation2 + $0xe8] sm:$0xf]
        %v5279 = vld [vmem:[#allocation2 + $0xec] sm:$0xf]
        %v5280 = vld [vmem:[#allocation2 + $0xf0] sm:$0xf]
        %v5281 = vld [vmem:[#allocation2 + $0xf4] sm:$0xf]
        %v5282 = vld [vmem:[#allocation2 + $0xf8] sm:$0xf]
        %v5283 = vld [vmem:[#allocation2 + $0xfc] sm:$0xf]
        %v5284 = vld [vmem:[%s1] sm:$0xf]
        %v5285 = vld [vmem:[%s1 + $0x4] sm:$0xf]
        %v5286 = vld [vmem:[%s1 + $0x8] sm:$0xf]
        %v5287 = vld [vmem:[%s1 + $0xc] sm:$0xf]
        %v5288 = vld [vmem:[%s1 + $0x10] sm:$0xf]
        %v5289 = vld [vmem:[%s1 + $0x14] sm:$0xf]
        %v5290 = vld [vmem:[%s1 + $0x18] sm:$0xf]
        %v5291 = vld [vmem:[%s1 + $0x1c] sm:$0xf]
        %v5292 = vld [vmem:[%s1 + $0x20] sm:$0xf]
        %v5357 = vunpack.c.l.b16 %v5220
        %v5358 = vunpack.c.l.b16 %v5221
        %v5359 = vunpack.c.l.b16 %v5222
        %v5360 = vunpack.c.l.b16 %v5223
        %v5361 = vunpack.c.l.b16 %v5224
        %v5362 = vunpack.c.l.b16 %v5225
        %v5363 = vunpack.c.l.b16 %v5226
        %v5364 = vunpack.c.l.b16 %v5227
        %v5365 = vunpack.c.l.b16 %v5228
        %v5366 = vunpack.c.l.b16 %v5229
        %v5367 = vunpack.c.l.b16 %v5230
        %v5368 = vunpack.c.l.b16 %v5231
        %v5369 = vunpack.c.l.b16 %v5232
        %v5370 = vunpack.c.l.b16 %v5233
        %v5371 = vunpack.c.l.b16 %v5234
        %v5372 = vunpack.c.l.b16 %v5235
        %v5373 = vunpack.c.l.b16 %v5236
        %v5374 = vunpack.c.l.b16 %v5237
        %v5375 = vunpack.c.l.b16 %v5238
        %v5376 = vunpack.c.l.b16 %v5239
        %v5377 = vunpack.c.l.b16 %v5240
        %v5378 = vunpack.c.l.b16 %v5241
        %v5379 = vunpack.c.l.b16 %v5242
        %v5380 = vunpack.c.l.b16 %v5243
        %v5381 = vunpack.c.l.b16 %v5244
        %v5382 = vunpack.c.l.b16 %v5245
        %v5383 = vunpack.c.l.b16 %v5246
        %v5384 = vunpack.c.l.b16 %v5247
        %v5385 = vunpack.c.l.b16 %v5248
        %v5386 = vunpack.c.l.b16 %v5249
        %v5387 = vunpack.c.l.b16 %v5250
        %v5388 = vunpack.c.l.b16 %v5251
        %v5389 = vunpack.c.l.b16 %v5252
        %v5390 = vunpack.c.l.b16 %v5253
        %v5391 = vunpack.c.l.b16 %v5254
        %v5392 = vunpack.c.l.b16 %v5255
        %v5393 = vunpack.c.l.b16 %v5256
        %v5394 = vunpack.c.l.b16 %v5257
        %v5395 = vunpack.c.l.b16 %v5258
        %v5396 = vunpack.c.l.b16 %v5259
        %v5397 = vunpack.c.l.b16 %v5260
        %v5398 = vunpack.c.l.b16 %v5261
        %v5399 = vunpack.c.l.b16 %v5262
        %v5400 = vunpack.c.l.b16 %v5263
        %v5401 = vunpack.c.l.b16 %v5264
        %v5402 = vunpack.c.l.b16 %v5265
        %v5403 = vunpack.c.l.b16 %v5266
        %v5404 = vunpack.c.l.b16 %v5267
        %v5405 = vunpack.c.l.b16 %v5268
        %v5406 = vunpack.c.l.b16 %v5269
        %v5407 = vunpack.c.l.b16 %v5270
        %v5408 = vunpack.c.l.b16 %v5271
        %v5409 = vunpack.c.l.b16 %v5272
        %v5410 = vunpack.c.l.b16 %v5273
        %v5411 = vunpack.c.l.b16 %v5274
        %v5412 = vunpack.c.l.b16 %v5275
        %v5413 = vunpack.c.l.b16 %v5276
        %v5414 = vunpack.c.l.b16 %v5277
        %v5415 = vunpack.c.l.b16 %v5278
        %v5416 = vunpack.c.l.b16 %v5279
        %v5417 = vunpack.c.l.b16 %v5280
        %v5418 = vunpack.c.l.b16 %v5281
        %v5419 = vunpack.c.l.b16 %v5282
        %v5420 = vunpack.c.l.b16 %v5283
        %v5421 = vpack.c.b16 %v5358, %v5357
        %v5422 = vpack.c.b16 %v5360, %v5359
        %v5423 = vpack.c.b16 %v5362, %v5361
        %v5424 = vpack.c.b16 %v5364, %v5363
        %v5425 = vpack.c.b16 %v5366, %v5365
        %v5426 = vpack.c.b16 %v5368, %v5367
        %v5427 = vpack.c.b16 %v5370, %v5369
        %v5428 = vpack.c.b16 %v5372, %v5371
        %v5429 = vpack.c.b16 %v5374, %v5373
        %v5430 = vpack.c.b16 %v5376, %v5375
        %v5431 = vpack.c.b16 %v5378, %v5377
        %v5432 = vpack.c.b16 %v5380, %v5379
        %v5433 = vpack.c.b16 %v5382, %v5381
        %v5434 = vpack.c.b16 %v5384, %v5383
        %v5435 = vpack.c.b16 %v5386, %v5385
        %v5436 = vpack.c.b16 %v5388, %v5387
        %v5437 = vpack.c.b16 %v5390, %v5389
        %v5438 = vpack.c.b16 %v5392, %v5391
        %v5439 = vpack.c.b16 %v5394, %v5393
        %v5440 = vpack.c.b16 %v5396, %v5395
        %v5441 = vpack.c.b16 %v5398, %v5397
        %v5442 = vpack.c.b16 %v5400, %v5399
        %v5443 = vpack.c.b16 %v5402, %v5401
        %v5444 = vpack.c.b16 %v5404, %v5403
        %v5445 = vpack.c.b16 %v5406, %v5405
        %v5446 = vpack.c.b16 %v5408, %v5407
        %v5447 = vpack.c.b16 %v5410, %v5409
        %v5448 = vpack.c.b16 %v5412, %v5411
        %v5449 = vpack.c.b16 %v5414, %v5413
        %v5450 = vpack.c.b16 %v5416, %v5415
        %v5451 = vpack.c.b16 %v5418, %v5417
        %v5452 = vpack.c.b16 %v5420, %v5419
        %v5462 = vunpack.c.l.b16 %v5284
        %v5463 = vunpack.c.l.b16 %v5285
        %v5464 = vunpack.c.l.b16 %v5286
        %v5465 = vunpack.c.l.b16 %v5287
        %v5466 = vunpack.c.l.b16 %v5288
        %v5467 = vunpack.c.l.b16 %v5289
        %v5468 = vunpack.c.l.b16 %v5290
        %v5469 = vunpack.c.l.b16 %v5291
        %v5470 = vunpack.c.l.b16 %v5292
        %v5471 = vpack.c.b16 %v5463, %v5462
        %v5472 = vpack.c.b16 %v5465, %v5464
        %v5473 = vpack.c.b16 %v5467, %v5466
        %v5474 = vpack.c.b16 %v5469, %v5468
        %v5475 = vpack.c.b16 %v5470, %v5470
        %vm5480 = vcmask 588800
        %v5482 = vsel %vm5480, %v5421, 0
        %v5485 = vsel %vm5480, %v5422, 0
        %v5488 = vsel %vm5480, %v5423, 0
        %v5491 = vsel %vm5480, %v5424, 0
        %v5494 = vsel %vm5480, %v5425, 0
        %v5497 = vsel %vm5480, %v5426, 0
        %v5500 = vsel %vm5480, %v5427, 0
        %v5503 = vsel %vm5480, %v5428, 0
        %v5506 = vsel %vm5480, %v5429, 0
        %v5509 = vsel %vm5480, %v5430, 0
        %v5512 = vsel %vm5480, %v5431, 0
        %v5515 = vsel %vm5480, %v5432, 0
        %v5518 = vsel %vm5480, %v5433, 0
        %v5521 = vsel %vm5480, %v5434, 0
        %v5524 = vsel %vm5480, %v5435, 0
        %v5527 = vsel %vm5480, %v5436, 0
        %v5530 = vsel %vm5480, %v5437, 0
        %v5533 = vsel %vm5480, %v5438, 0
        %v5536 = vsel %vm5480, %v5439, 0
        %v5539 = vsel %vm5480, %v5440, 0
        %v5542 = vsel %vm5480, %v5441, 0
        %v5545 = vsel %vm5480, %v5442, 0
        %v5548 = vsel %vm5480, %v5443, 0
        %v5551 = vsel %vm5480, %v5444, 0
        %v5554 = vsel %vm5480, %v5445, 0
        %v5557 = vsel %vm5480, %v5446, 0
        %v5560 = vsel %vm5480, %v5447, 0
        %v5563 = vsel %vm5480, %v5448, 0
        %v5566 = vsel %vm5480, %v5449, 0
        %v5569 = vsel %vm5480, %v5450, 0
        %v5572 = vsel %vm5480, %v5451, 0
        %v5575 = vsel %vm5480, %v5452, 0
        %vm5577 = vcmask 1043456
        %v5579 = vsel %vm5577, %v5475, 0
        %5581 = vmatpush.bf16.msra.mxu0 0
        %5582 = vmatpush.bf16.msra.mxu0 0
        %5583 = vmatpush.bf16.msra.mxu0 0
        %5584 = vmatpush.bf16.msra.mxu0 %v5579
        %5585 = vmatpush.bf16.msra.mxu0 %v5474
        %5586 = vmatpush.bf16.msra.mxu0 %v5473
        %5587 = vmatpush.bf16.msra.mxu0 %v5472
        %5588 = vmatpush.bf16.msra.mxu0 %v5471
        %5589 = vmatmul.bf16.gmra.mxu0 %v5482
        %v5590 = vpop.f32.mrf.mxu0
        %v5591 = vadd.f32 0.0, %v5590
        %v5592 = vpop.f32.mrf.mxu0
        %v5593 = vadd.f32 0.0, %v5592
        %5594 = vmatmul.bf16.gmra.mxu0 %v5485
        %v5595 = vpop.f32.mrf.mxu0
        %v5596 = vpop.f32.mrf.mxu0
        %5597 = vmatmul.bf16.gmra.mxu0 %v5488
        %v5598 = vpop.f32.mrf.mxu0
        %v5599 = vadd.f32 0.0, %v5598
        %v5600 = vpop.f32.mrf.mxu0
        %v5601 = vadd.f32 0.0, %v5600
        %5602 = vmatmul.bf16.gmra.mxu0 %v5491
        %v5603 = vpop.f32.mrf.mxu0
        %v5604 = vpop.f32.mrf.mxu0
        %5605 = vmatmul.bf16.gmra.mxu0 %v5494
        %v5606 = vpop.f32.mrf.mxu0
        %v5607 = vadd.f32 0.0, %v5606
        %v5608 = vpop.f32.mrf.mxu0
        %v5609 = vadd.f32 0.0, %v5608
        %5610 = vmatmul.bf16.gmra.mxu0 %v5497
        %v5611 = vpop.f32.mrf.mxu0
        %v5612 = vpop.f32.mrf.mxu0
        %5613 = vmatmul.bf16.gmra.mxu0 %v5500
        %v5614 = vpop.f32.mrf.mxu0
        %v5615 = vadd.f32 0.0, %v5614
        %v5616 = vpop.f32.mrf.mxu0
        %v5617 = vadd.f32 0.0, %v5616
        %5618 = vmatmul.bf16.gmra.mxu0 %v5503
        %v5619 = vpop.f32.mrf.mxu0
        %v5620 = vpop.f32.mrf.mxu0
        %5621 = vmatmul.bf16.gmra.mxu0 %v5506
        %v5622 = vpop.f32.mrf.mxu0
        %v5623 = vadd.f32 0.0, %v5622
        %v5624 = vpop.f32.mrf.mxu0
        %v5625 = vadd.f32 0.0, %v5624
        %5626 = vmatmul.bf16.gmra.mxu0 %v5509
        %v5627 = vpop.f32.mrf.mxu0
        %v5628 = vpop.f32.mrf.mxu0
        %5629 = vmatmul.bf16.gmra.mxu0 %v5512
        %v5630 = vpop.f32.mrf.mxu0
        %v5631 = vadd.f32 0.0, %v5630
        %v5632 = vpop.f32.mrf.mxu0
        %v5633 = vadd.f32 0.0, %v5632
        %5634 = vmatmul.bf16.gmra.mxu0 %v5515
        %v5635 = vpop.f32.mrf.mxu0
        %v5636 = vpop.f32.mrf.mxu0
        %5637 = vmatmul.bf16.gmra.mxu0 %v5518
        %v5638 = vpop.f32.mrf.mxu0
        %v5639 = vadd.f32 0.0, %v5638
        %v5640 = vpop.f32.mrf.mxu0
        %v5641 = vadd.f32 0.0, %v5640
        %5642 = vmatmul.bf16.gmra.mxu0 %v5521
        %v5643 = vpop.f32.mrf.mxu0
        %v5644 = vpop.f32.mrf.mxu0
        %5645 = vmatmul.bf16.gmra.mxu0 %v5524
        %v5646 = vpop.f32.mrf.mxu0
        %v5647 = vadd.f32 0.0, %v5646
        %v5648 = vpop.f32.mrf.mxu0
        %v5649 = vadd.f32 0.0, %v5648
        %5650 = vmatmul.bf16.gmra.mxu0 %v5527
        %v5651 = vpop.f32.mrf.mxu0
        %v5652 = vpop.f32.mrf.mxu0
        %5653 = vmatmul.bf16.gmra.mxu0 %v5530
        %v5654 = vpop.f32.mrf.mxu0
        %v5655 = vadd.f32 0.0, %v5654
        %v5656 = vpop.f32.mrf.mxu0
        %v5657 = vadd.f32 0.0, %v5656
        %5658 = vmatmul.bf16.gmra.mxu0 %v5533
        %v5659 = vpop.f32.mrf.mxu0
        %v5660 = vpop.f32.mrf.mxu0
        %5661 = vmatmul.bf16.gmra.mxu0 %v5536
        %v5662 = vpop.f32.mrf.mxu0
        %v5663 = vadd.f32 0.0, %v5662
        %v5664 = vpop.f32.mrf.mxu0
        %v5665 = vadd.f32 0.0, %v5664
        %5666 = vmatmul.bf16.gmra.mxu0 %v5539
        %v5667 = vpop.f32.mrf.mxu0
        %v5668 = vpop.f32.mrf.mxu0
        %5669 = vmatmul.bf16.gmra.mxu0 %v5542
        %v5670 = vpop.f32.mrf.mxu0
        %v5671 = vadd.f32 0.0, %v5670
        %v5672 = vpop.f32.mrf.mxu0
        %v5673 = vadd.f32 0.0, %v5672
        %5674 = vmatmul.bf16.gmra.mxu0 %v5545
        %v5675 = vpop.f32.mrf.mxu0
        %v5676 = vpop.f32.mrf.mxu0
        %5677 = vmatmul.bf16.gmra.mxu0 %v5548
        %v5678 = vpop.f32.mrf.mxu0
        %v5679 = vadd.f32 0.0, %v5678
        %v5680 = vpop.f32.mrf.mxu0
        %v5681 = vadd.f32 0.0, %v5680
        %5682 = vmatmul.bf16.gmra.mxu0 %v5551
        %v5683 = vpop.f32.mrf.mxu0
        %v5684 = vpop.f32.mrf.mxu0
        %5685 = vmatmul.bf16.gmra.mxu0 %v5554
        %v5686 = vpop.f32.mrf.mxu0
        %v5687 = vadd.f32 0.0, %v5686
        %v5688 = vpop.f32.mrf.mxu0
        %v5689 = vadd.f32 0.0, %v5688
        %5690 = vmatmul.bf16.gmra.mxu0 %v5557
        %v5691 = vpop.f32.mrf.mxu0
        %v5692 = vpop.f32.mrf.mxu0
        %5693 = vmatmul.bf16.gmra.mxu0 %v5560
        %v5694 = vpop.f32.mrf.mxu0
        %v5695 = vadd.f32 0.0, %v5694
        %v5696 = vpop.f32.mrf.mxu0
        %v5697 = vadd.f32 0.0, %v5696
        %5698 = vmatmul.bf16.gmra.mxu0 %v5563
        %v5699 = vpop.f32.mrf.mxu0
        %v5700 = vpop.f32.mrf.mxu0
        %5701 = vmatmul.bf16.gmra.mxu0 %v5566
        %v5702 = vpop.f32.mrf.mxu0
        %v5703 = vadd.f32 0.0, %v5702
        %v5704 = vpop.f32.mrf.mxu0
        %v5705 = vadd.f32 0.0, %v5704
        %5706 = vmatmul.bf16.gmra.mxu0 %v5569
        %v5707 = vpop.f32.mrf.mxu0
        %v5708 = vpop.f32.mrf.mxu0
        %5709 = vmatmul.bf16.gmra.mxu0 %v5572
        %v5710 = vpop.f32.mrf.mxu0
        %v5711 = vadd.f32 0.0, %v5710
        %v5712 = vpop.f32.mrf.mxu0
        %v5713 = vadd.f32 0.0, %v5712
        %5714 = vmatmul.bf16.gmra.mxu0 %v5575
        %v5715 = vpop.f32.mrf.mxu0
        %v5716 = vpop.f32.mrf.mxu0
        %5717 = vdwg.mxu0
        %v5718 = vld [vmem:[%s2] sm:$0x1]
        %v5720 = vperm.slane %v5718, 0
        %v5722 = vadd.f32 %v5591, %v5720
        %v5723 = vadd.f32 %v5593, %v5720
        %v5724 = vadd.f32 %v5599, %v5720
        %v5725 = vadd.f32 %v5601, %v5720
        %v5726 = vadd.f32 %v5607, %v5720
        %v5727 = vadd.f32 %v5609, %v5720
        %v5728 = vadd.f32 %v5615, %v5720
        %v5729 = vadd.f32 %v5617, %v5720
        %v5730 = vadd.f32 %v5623, %v5720
        %v5731 = vadd.f32 %v5625, %v5720
        %v5732 = vadd.f32 %v5631, %v5720
        %v5733 = vadd.f32 %v5633, %v5720
        %v5734 = vadd.f32 %v5639, %v5720
        %v5735 = vadd.f32 %v5641, %v5720
        %v5736 = vadd.f32 %v5647, %v5720
        %v5737 = vadd.f32 %v5649, %v5720
        %v5738 = vadd.f32 %v5655, %v5720
        %v5739 = vadd.f32 %v5657, %v5720
        %v5740 = vadd.f32 %v5663, %v5720
        %v5741 = vadd.f32 %v5665, %v5720
        %v5742 = vadd.f32 %v5671, %v5720
        %v5743 = vadd.f32 %v5673, %v5720
        %v5744 = vadd.f32 %v5679, %v5720
        %v5745 = vadd.f32 %v5681, %v5720
        %v5746 = vadd.f32 %v5687, %v5720
        %v5747 = vadd.f32 %v5689, %v5720
        %v5748 = vadd.f32 %v5695, %v5720
        %v5749 = vadd.f32 %v5697, %v5720
        %v5750 = vadd.f32 %v5703, %v5720
        %v5751 = vadd.f32 %v5705, %v5720
        %v5752 = vadd.f32 %v5711, %v5720
        %v5753 = vadd.f32 %v5713, %v5720
        %v5754 = vpack.c.bf16 %v5722, %v5722
        %v5755 = vpack.c.bf16 %v5723, %v5723
        %v5756 = vpack.c.bf16 %v5724, %v5724
        %v5757 = vpack.c.bf16 %v5725, %v5725
        %v5758 = vpack.c.bf16 %v5726, %v5726
        %v5759 = vpack.c.bf16 %v5727, %v5727
        %v5760 = vpack.c.bf16 %v5728, %v5728
        %v5761 = vpack.c.bf16 %v5729, %v5729
        %v5762 = vpack.c.bf16 %v5730, %v5730
        %v5763 = vpack.c.bf16 %v5731, %v5731
        %v5764 = vpack.c.bf16 %v5732, %v5732
        %v5765 = vpack.c.bf16 %v5733, %v5733
        %v5766 = vpack.c.bf16 %v5734, %v5734
        %v5767 = vpack.c.bf16 %v5735, %v5735
        %v5768 = vpack.c.bf16 %v5736, %v5736
        %v5769 = vpack.c.bf16 %v5737, %v5737
        %v5770 = vpack.c.bf16 %v5738, %v5738
        %v5771 = vpack.c.bf16 %v5739, %v5739
        %v5772 = vpack.c.bf16 %v5740, %v5740
        %v5773 = vpack.c.bf16 %v5741, %v5741
        %v5774 = vpack.c.bf16 %v5742, %v5742
        %v5775 = vpack.c.bf16 %v5743, %v5743
        %v5776 = vpack.c.bf16 %v5744, %v5744
        %v5777 = vpack.c.bf16 %v5745, %v5745
        %v5778 = vpack.c.bf16 %v5746, %v5746
        %v5779 = vpack.c.bf16 %v5747, %v5747
        %v5780 = vpack.c.bf16 %v5748, %v5748
        %v5781 = vpack.c.bf16 %v5749, %v5749
        %v5782 = vpack.c.bf16 %v5750, %v5750
        %v5783 = vpack.c.bf16 %v5751, %v5751
        %v5784 = vpack.c.bf16 %v5752, %v5752
        %v5785 = vpack.c.bf16 %v5753, %v5753
        %vm5786 = vcmask 257024
        %5787 = vst.msk [vmem:[%s182] sm:$0xf] %vm5786, %v5754
        %5788 = vst.msk [vmem:[%s182 + $0x4] sm:$0xf] %vm5786, %v5755
        %5789 = vst.msk [vmem:[%s182 + $0x8] sm:$0xf] %vm5786, %v5756
        %5790 = vst.msk [vmem:[%s182 + $0xc] sm:$0xf] %vm5786, %v5757
        %5791 = vst.msk [vmem:[%s182 + $0x10] sm:$0xf] %vm5786, %v5758
        %5792 = vst.msk [vmem:[%s182 + $0x14] sm:$0xf] %vm5786, %v5759
        %5793 = vst.msk [vmem:[%s182 + $0x18] sm:$0xf] %vm5786, %v5760
        %5794 = vst.msk [vmem:[%s182 + $0x1c] sm:$0xf] %vm5786, %v5761
        %5795 = vst.msk [vmem:[%s182 + $0x20] sm:$0xf] %vm5786, %v5762
        %5796 = vst.msk [vmem:[%s182 + $0x24] sm:$0xf] %vm5786, %v5763
        %5797 = vst.msk [vmem:[%s182 + $0x28] sm:$0xf] %vm5786, %v5764
        %5798 = vst.msk [vmem:[%s182 + $0x2c] sm:$0xf] %vm5786, %v5765
        %5799 = vst.msk [vmem:[%s182 + $0x30] sm:$0xf] %vm5786, %v5766
        %5800 = vst.msk [vmem:[%s182 + $0x34] sm:$0xf] %vm5786, %v5767
        %5801 = vst.msk [vmem:[%s182 + $0x38] sm:$0xf] %vm5786, %v5768
        %5802 = vst.msk [vmem:[%s182 + $0x3c] sm:$0xf] %vm5786, %v5769
        %5803 = vst.msk [vmem:[%s182 + $0x40] sm:$0xf] %vm5786, %v5770
        %5804 = vst.msk [vmem:[%s182 + $0x44] sm:$0xf] %vm5786, %v5771
        %5805 = vst.msk [vmem:[%s182 + $0x48] sm:$0xf] %vm5786, %v5772
        %5806 = vst.msk [vmem:[%s182 + $0x4c] sm:$0xf] %vm5786, %v5773
        %5807 = vst.msk [vmem:[%s182 + $0x50] sm:$0xf] %vm5786, %v5774
        %5808 = vst.msk [vmem:[%s182 + $0x54] sm:$0xf] %vm5786, %v5775
        %5809 = vst.msk [vmem:[%s182 + $0x58] sm:$0xf] %vm5786, %v5776
        %5810 = vst.msk [vmem:[%s182 + $0x5c] sm:$0xf] %vm5786, %v5777
        %5811 = vst.msk [vmem:[%s182 + $0x60] sm:$0xf] %vm5786, %v5778
        %5812 = vst.msk [vmem:[%s182 + $0x64] sm:$0xf] %vm5786, %v5779
        %5813 = vst.msk [vmem:[%s182 + $0x68] sm:$0xf] %vm5786, %v5780
        %5814 = vst.msk [vmem:[%s182 + $0x6c] sm:$0xf] %vm5786, %v5781
        %5815 = vst.msk [vmem:[%s182 + $0x70] sm:$0xf] %vm5786, %v5782
        %5816 = vst.msk [vmem:[%s182 + $0x74] sm:$0xf] %vm5786, %v5783
        %5817 = vst.msk [vmem:[%s182 + $0x78] sm:$0xf] %vm5786, %v5784
        %5818 = vst.msk [vmem:[%s182 + $0x7c] sm:$0xf] %vm5786, %v5785
        %s5819 = sand.u32 %s109, 1
        %s5820 = scalar_lea.sflag [#allocation4], %s5819
        %s5821 = sand.u32 %s109, 1
        %s5822 = smul.addr %s5821, 128
        %s5823 = scalar_lea.vmem [#allocation3], %s5822
        // Predicated region
        $region33: #{_tap_conv.1} parent=31 // pred_check
          %p5824 = pneg %p119
        $region34: #{_tap_conv.1} parent=31 // pred_check_branch
          %5826 = sbr.rel (%p5824) target = $region36
        $region35: #{_tap_conv.1} parent=31 // pred_region
          %s5827 = smul.u32 16, %s22
          %5829 = vsyncadd %s5820, 0
          %s5830 = smul.addr %s5827, 2
          %s5831 = smul.addr %s21, 32
          %s5832 = sadd.s32 %s5830, %s5831
          %s5833 = smul.addr %s5832, 4
          %s5834 = scalar_lea.hbm %s3, %s5833
          %s5835 = sshll.u32 %s5823, 4
          %s5836 = int_to_ptr.vmem [resolvable:$true] %s5835
          %s5837 = sshll.u32 %s5834, 4
          %s5838 = int_to_ptr.hbm [resolvable:$true] %s5837
          %5843 = dma.vmem_to_hbm [thread:$0]  %s5836, 2048, %s5838, %s5820, 64, 64, 4
        $region36: #{_tap_conv.1} parent=31 // pred_fallthru
          _
      $region32: #{_tap_conv.1} parent=5 // pred_fallthru
        _
      %p5844 = scmp.le.s32.totalorder 2, %s12
      // Predicated region
      $region37: #{_tap_conv.1} parent=5 // pred_check
        %p5845 = pneg %p5844
      $region38: #{_tap_conv.1} parent=5 // pred_check_branch
        %5847 = sbr.rel (%p5845) target = $region40
      $region39: #{_tap_conv.1} parent=5 // pred_region
        %s5848 = ssub.s32 %s12, 2
        // Predicated region
        $region41: #{_tap_conv.1} parent=39 // pred_check
          %p5849 = pneg %p125
        $region42: #{_tap_conv.1} parent=39 // pred_check_branch
          %5851 = sbr.rel (%p5849) target = $region44
        $region43: #{_tap_conv.1} parent=39 // pred_region
          %s5852 = sand.u32 %s110, 1
          %s5853 = scalar_lea.sflag [#allocation4], %s5852
          %s5854 = sand.u32 %s110, 1
          %s5855 = smul.addr %s5854, 128
          %s5856 = scalar_lea.vmem [#allocation3], %s5855
          %5858 = dma.done %s5853, 2048
        $region44: #{_tap_conv.1} parent=39 // pred_fallthru
          _
      $region40: #{_tap_conv.1} parent=5 // pred_fallthru
        _
    $region6: #{_tap_conv.1} parent=1 // loop_footer
      %s16 = sadd.s32 1, %s12
    $region7: #{_tap_conv.1} parent=1 // loop_footer_branch
      %11 = sbr.rel target = $region3
    $region8: #{_tap_conv.1} parent=1 // loop_exit
      _
    %5859 = vsyncpa [#allocation4], 1
    %s5860 = scalar_lea.sflag [#allocation4], 1
    %5861 = vsyncpa %s5860, 1

</llo_original>
